<compile_context>
chip_gen: v6e
topology: v6e:2x2x1
jax: 0.10.0
libtpu: 0.0.40
codegen_flags: <defaults>
</compile_context>

<pallas_src>
import jax
import jax.numpy as jnp
import numpy as np
from jax.experimental import pallas as pl
from jax.experimental.pallas import tpu as pltpu

# ---- small, deterministic shapes consistent with the module ----------------
B = 2            # batch
BP = 8           # padded batch (sublane-dense compute batch inside the kernel)
T = 8            # sequence length
D_EMB = 32       # "embedding.config.hidden_size" (synthetic encoder width)
H = 128          # GRU hidden size (fixed by nn.GRU(hidden_size=128))
NUM_CLASSES = 4  # num_classes
OUT_LANES = 128  # lane-dense output width (sliced to NUM_CLASSES in wrapper)
VOCAB = 64
NUM_TYPES = 2


# ---------------------------------------------------------------------------
# Pallas kernel
#   inputs (all VMEM):
#     x     (T*BP, D)   bf16 time-major embedding slab, row t*BP+b = x[b, t]
#     wih   (D, 6H)     bf16 input weights, gate cols [r_f z_f n_f | r_r z_r n_r]
#     whh_f (H, 3H)     bf16 forward recurrent weights, cols [r z n]
#     whh_r (H, 3H)     bf16 reverse recurrent weights, cols [r z n]
#     bgi   (1, 6H)     f32 b_ih (+ b_hh folded for r/z gates), same col order
#     bhhn  (1, 2H)     f32 b_hh for the n gates [fwd | rev] (stays inside r*(...))
#     watt  (1, 2H)     f32 attention Linear(256,1) weight row [fwd | rev]
#     batt  (1, 1)      f32 attention bias
#     wfc_f (H, 128)    bf16 folded + lane-padded fc weight, forward half
#     wfc_r (H, 128)    bf16 folded + lane-padded fc weight, reverse half
#     bfc   (1, 128)    f32 lane-padded fc bias
#   output: (BP, 128) f32 lane-dense logits
#   scratch: gi_scr (T*BP, 6H) f32 gate pre-activations for all steps/dirs
# ---------------------------------------------------------------------------
def abcnn3_kernel(x_ref, wih_ref, whh_f_ref, whh_r_ref, bgi_ref, bhhn_ref,
                  watt_ref, batt_ref, wfc_f_ref, wfc_r_ref, bfc_ref,
                  out_ref, gi_scr):
    # Fused input projection for both directions and all time steps: one bf16
    # MXU matmul (K=32, no zero half), biases folded in once.
    gi_scr[...] = jnp.dot(x_ref[...], wih_ref[...],
                          preferred_element_type=jnp.float32) + bgi_ref[...]

    whh_f = whh_f_ref[...]                                   # (H, 3H) bf16
    whh_r = whh_r_ref[...]
    bhn_f = jnp.broadcast_to(bhhn_ref[:, :H], (BP, H))       # hoisted broadcasts
    bhn_r = jnp.broadcast_to(bhhn_ref[:, H:], (BP, H))

    h_f = jnp.zeros((BP, H), jnp.float32)
    h_r = jnp.zeros((BP, H), jnp.float32)

    def gru_step(gi, gh, h, bhn):
        # PyTorch GRU cell; all elementwise math in f32 (v5e VPU has no bf16).
        rz = jax.nn.sigmoid(gi[:, :2 * H] + gh[:, :2 * H])
        r, z = rz[:, :H], rz[:, H:]
        n = jnp.tanh(gi[:, 2 * H:] + r * (gh[:, 2 * H:] + bhn))
        return (1.0 - z) * n + z * h

    for t in range(T):                                       # static unroll, T small
        # forward gates at input time t, reverse gates at input time T-1-t;
        # row offsets stay 8-sublane aligned, lane slices at 128 boundaries.
        gi_f = gi_scr[pl.ds(t * BP, BP), 0:3 * H]
        gi_r = gi_scr[pl.ds((T - 1 - t) * BP, BP), 3 * H:6 * H]
        # two independent per-direction MXU matmuls (no zero halves), bf16 in.
        gh_f = jnp.dot(h_f.astype(jnp.bfloat16), whh_f,
                       preferred_element_type=jnp.float32)
        gh_r = jnp.dot(h_r.astype(jnp.bfloat16), whh_r,
                       preferred_element_type=jnp.float32)
        h_f = gru_step(gi_f, gh_f, h_f, bhn_f)
        h_r = gru_step(gi_r, gh_r, h_r, bhn_r)

    # [h_f | h_r] == torch.cat([h_n[0], h_n[1]], dim=1)
    # attention Linear(256, 1) as VPU multiply + lane reduction (off the MXU).
    att = (jnp.sum(h_f * watt_ref[:, :H], axis=-1, keepdims=True)
           + jnp.sum(h_r * watt_ref[:, H:], axis=-1, keepdims=True)
           + batt_ref[...])                                  # (BP, 1)
    w_f = (att * h_f).astype(jnp.bfloat16)                   # bmm(att^T, h) == scalar * h
    w_r = (att * h_r).astype(jnp.bfloat16)

    # x1 == x2 (identical inputs & weights in the module forward), so
    # cat([w, w]) @ Wfc == w @ (Wfc_top + Wfc_bot); folded per direction,
    # lane-dense (BP, 128) store.
    out_ref[...] = (jnp.dot(w_f, wfc_f_ref[...], preferred_element_type=jnp.float32)
                    + jnp.dot(w_r, wfc_r_ref[...], preferred_element_type=jnp.float32)
                    + bfc_ref[...])


@jax.jit
def abcnn3_forward(input_ids, token_type_ids, attention_mask, ep, kp):
    # TODO(synk): the pretrained AutoModel transformer encoder has no clean
    # in-script equivalent; replaced by a deterministic embedding lookup.
    # attention_mask is accepted but unused (matching the synthetic encoder).
    del attention_mask

    # Time-major embedding gather on the int32 index arrays (no transpose of the
    # float activations); pad batch to 8 sublanes, flatten, cast MXU operand to bf16.
    ids_t = input_ids.T                                        # (T, B)
    tt_t = token_type_ids.T
    x_tm = ep["word"][ids_t] + ep["type"][tt_t] + ep["pos"][:, None, :]   # (T, B, D) f32
    x_slab = jnp.pad(x_tm, ((0, 0), (0, BP - B), (0, 0)))      # (T, BP, D)
    x_slab = x_slab.reshape(T * BP, D_EMB).astype(jnp.bfloat16)

    args = (x_slab, kp["wih"], kp["whh_f"], kp["whh_r"], kp["b_gi"], kp["b_hh_n"],
            kp["watt"], kp["batt"], kp["wfc_f"], kp["wfc_r"], kp["bfc"])

    flops = (2 * (T * BP) * D_EMB * 6 * H          # input projection
             + T * 2 * 2 * BP * H * 3 * H          # recurrence (2 dirs)
             + 2 * 2 * BP * H * OUT_LANES)         # folded fc (2 dirs)
    transcendentals = T * 2 * BP * 3 * H
    bytes_accessed = (sum(int(np.prod(a.shape)) * a.dtype.itemsize for a in args)
                      + BP * OUT_LANES * 4)

    out = pl.pallas_call(
        abcnn3_kernel,
        out_shape=jax.ShapeDtypeStruct((BP, OUT_LANES), jnp.float32),
        in_specs=[pl.BlockSpec(memory_space=pltpu.MemorySpace.VMEM)] * len(args),
        out_specs=pl.BlockSpec(memory_space=pltpu.MemorySpace.VMEM),
        scratch_shapes=[pltpu.VMEM((T * BP, 6 * H), jnp.float32)],
        cost_estimate=pl.CostEstimate(flops=flops,
                                      transcendentals=transcendentals,
                                      bytes_accessed=bytes_accessed),
    )(*args)
    return out[:B, :NUM_CLASSES]


# ---------------------------------------------------------------------------
# Glue: synthetic encoder + deterministic parameter construction
# ---------------------------------------------------------------------------
def synthetic_embedding(input_ids, token_type_ids, attention_mask, ep):
    del attention_mask
    w = ep["word"][input_ids]                 # (B, T, D)
    ty = ep["type"][token_type_ids]           # (B, T, D)
    pos = ep["pos"][None, :T, :]              # (1, T, D)
    return (w + ty + pos).astype(jnp.float32)


def make_params(key):
    ks = jax.random.split(key, 11)
    s = 0.1
    # GRU weights, PyTorch layout: weight_ih (3H, D), weight_hh (3H, H), gates [r|z|n].
    wih = jax.random.normal(ks[0], (2, 3 * H, D_EMB), jnp.float32) * s
    whh = jax.random.normal(ks[1], (2, 3 * H, H), jnp.float32) * s
    bih = jax.random.normal(ks[2], (2, 3 * H), jnp.float32) * s
    bhh = jax.random.normal(ks[3], (2, 3 * H), jnp.float32) * s
    watt = jax.random.normal(ks[4], (1, 2 * H), jnp.float32) * s     # Linear(256, 1)
    batt = jax.random.normal(ks[5], (1,), jnp.float32) * s
    wfc = jax.random.normal(ks[6], (NUM_CLASSES, 4 * H), jnp.float32) * s   # Linear(512, C)
    bfc = jax.random.normal(ks[7], (NUM_CLASSES,), jnp.float32) * s

    raw = dict(wih=wih, whh=whh, bih=bih, bhh=bhh,
               watt=watt, batt=batt, wfc=wfc, bfc=bfc)

    # ---- kernel layout -------------------------------------------------------
    # input weights: (D, 6H), columns [r_f z_f n_f | r_r z_r n_r], bf16 (MXU operand)
    wih_all = jnp.concatenate([wih[0].T, wih[1].T], axis=1).astype(jnp.bfloat16)

    # recurrent weights: dense per-direction (H, 3H), cols [r z n], bf16
    whh_f = whh[0].T.astype(jnp.bfloat16)
    whh_r = whh[1].T.astype(jnp.bfloat16)

    # biases: b_hh for r/z gates folds into the precomputed gate input;
    # b_hh for the n gate must stay inside the r*(...) term.
    b_gi = jnp.concatenate([
        bih[0, 0:H] + bhh[0, 0:H],
        bih[0, H:2 * H] + bhh[0, H:2 * H],
        bih[0, 2 * H:3 * H],
        bih[1, 0:H] + bhh[1, 0:H],
        bih[1, H:2 * H] + bhh[1, H:2 * H],
        bih[1, 2 * H:3 * H]])[None, :]                                    # (1, 6H) f32
    b_hh_n = jnp.concatenate([bhh[0, 2 * H:], bhh[1, 2 * H:]])[None, :]   # (1, 2H) f32

    # fc: fold the duplicated 512-wide concat (x1 == x2), split per direction,
    # pad columns to a lane-dense 128, bf16 weights.
    wfc_t = wfc.T                                    # (4H, C)
    wfc_fold = wfc_t[:2 * H, :] + wfc_t[2 * H:, :]   # (2H, C)
    wfc_f = (jnp.zeros((H, OUT_LANES), jnp.float32)
             .at[:, :NUM_CLASSES].set(wfc_fold[:H])).astype(jnp.bfloat16)
    wfc_r = (jnp.zeros((H, OUT_LANES), jnp.float32)
             .at[:, :NUM_CLASSES].set(wfc_fold[H:])).astype(jnp.bfloat16)
    bfc_pad = jnp.zeros((1, OUT_LANES), jnp.float32).at[0, :NUM_CLASSES].set(bfc)

    kparams = dict(wih=wih_all, whh_f=whh_f, whh_r=whh_r, b_gi=b_gi, b_hh_n=b_hh_n,
                   watt=watt, batt=batt[None, :], wfc_f=wfc_f, wfc_r=wfc_r, bfc=bfc_pad)

    emb_params = dict(
        word=jax.random.normal(ks[8], (VOCAB, D_EMB), jnp.float32) * s,
        type=jax.random.normal(ks[9], (NUM_TYPES, D_EMB), jnp.float32) * s,
        pos=jax.random.normal(ks[10], (T, D_EMB), jnp.float32) * s,
    )
    return raw, kparams, emb_params


# Pure-JAX reference mirroring the PyTorch forward (original weight layout, f32).
def ref_forward(x, p):
    def gru_dir(d):
        h = jnp.zeros((B, H), jnp.float32)
        wih_t, whh_t = p["wih"][d].T, p["whh"][d].T
        bih, bhh = p["bih"][d], p["bhh"][d]
        for t in range(T):
            tt = t if d == 0 else (T - 1 - t)
            xt = x[:, tt, :]
            gi = xt @ wih_t + bih
            gh = h @ whh_t + bhh
            r = jax.nn.sigmoid(gi[:, :H] + gh[:, :H])
            z = jax.nn.sigmoid(gi[:, H:2 * H] + gh[:, H:2 * H])
            n = jnp.tanh(gi[:, 2 * H:] + r * gh[:, 2 * H:])
            h = (1.0 - z) * n + z * h
        return h

    h_cat = jnp.concatenate([gru_dir(0), gru_dir(1)], axis=1)   # (B, 256)
    att = h_cat @ p["watt"].T + p["batt"]                       # (B, 1)
    weighted = att * h_cat
    xcat = jnp.concatenate([weighted, weighted], axis=1)        # x1 == x2
    return xcat @ p["wfc"].T + p["bfc"]


if __name__ == "__main__":
    key = jax.random.PRNGKey(0)
    kp, kid, ktt = jax.random.split(key, 3)
    raw_params, kernel_params, emb_params = make_params(kp)

    input_ids = jax.random.randint(kid, (B, T), 0, VOCAB, dtype=jnp.int32)
    token_type_ids = jax.random.randint(ktt, (B, T), 0, NUM_TYPES, dtype=jnp.int32)
    attention_mask = jnp.ones((B, T), dtype=jnp.int32)

    logits = abcnn3_forward(input_ids, token_type_ids, attention_mask,
                            emb_params, kernel_params)
    logits = jax.block_until_ready(logits)

    x_emb = synthetic_embedding(input_ids, token_type_ids, attention_mask, emb_params)
    ref = jax.block_until_ready(ref_forward(x_emb, raw_params))
    np.testing.assert_allclose(np.asarray(logits), np.asarray(ref), rtol=2e-2, atol=2e-2)
    assert logits.shape == (B, NUM_CLASSES)

    print("KERNEL_OK")
</pallas_src>

<mosaic_0001>
module attributes {stable_mosaic.version = 11 : i64} {
  func.func @abcnn3_kernel(%arg0: memref<64x32xbf16, #tpu.memory_space<vmem>>, %arg1: memref<32x768xbf16, #tpu.memory_space<vmem>>, %arg2: memref<128x384xbf16, #tpu.memory_space<vmem>>, %arg3: memref<128x384xbf16, #tpu.memory_space<vmem>>, %arg4: memref<1x768xf32, #tpu.memory_space<vmem>>, %arg5: memref<1x256xf32, #tpu.memory_space<vmem>>, %arg6: memref<1x256xf32, #tpu.memory_space<vmem>>, %arg7: memref<1x1xf32, #tpu.memory_space<vmem>>, %arg8: memref<128x128xbf16, #tpu.memory_space<vmem>>, %arg9: memref<128x128xbf16, #tpu.memory_space<vmem>>, %arg10: memref<1x128xf32, #tpu.memory_space<vmem>>, %arg11: memref<8x128xf32, #tpu.memory_space<vmem>>, %arg12: memref<64x768xf32, #tpu.memory_space<vmem>>) attributes {dimension_semantics = [], scalar_prefetch = 0 : i64, scratch_operands = 1 : i64, tpu.core_type = #tpu.core_type<tc>} {
    %c0 = arith.constant 0 : index
    %c0_0 = arith.constant 0 : index
    %0 = vector.load %arg0[%c0, %c0_0] : memref<64x32xbf16, #tpu.memory_space<vmem>>, vector<64x32xbf16>
    %c0_1 = arith.constant 0 : index
    %c0_2 = arith.constant 0 : index
    %1 = vector.load %arg1[%c0_1, %c0_2] : memref<32x768xbf16, #tpu.memory_space<vmem>>, vector<32x768xbf16>
    %cst = arith.constant dense<0.000000e+00> : vector<64x768xf32>
    %2 = tpu.matmul %0, %1, %cst {dimension_numbers = #tpu.dot_dimension_numbers<[1], [0], [0], [1], [0, 0, 1, 1], [], []>} : vector<64x32xbf16>, vector<32x768xbf16>, vector<64x768xf32> -> vector<64x768xf32>
    %c0_3 = arith.constant 0 : index
    %c0_4 = arith.constant 0 : index
    %3 = vector.load %arg4[%c0_3, %c0_4] : memref<1x768xf32, #tpu.memory_space<vmem>>, vector<1x768xf32>
    %4 = vector.broadcast %3 : vector<1x768xf32> to vector<64x768xf32>
    %5 = arith.addf %2, %4 : vector<64x768xf32>
    %c0_5 = arith.constant 0 : index
    %c0_6 = arith.constant 0 : index
    %6 = vector.load %arg12[%c0_5, %c0_6] : memref<64x768xf32, #tpu.memory_space<vmem>>, vector<64x768xf32>
    tpu.vector_store %arg12[%c0_5, %c0_6], %5 {strides = array<i32>} : memref<64x768xf32, #tpu.memory_space<vmem>>, vector<64x768xf32>,
    %c0_7 = arith.constant 0 : index
    %c0_8 = arith.constant 0 : index
    %7 = vector.load %arg2[%c0_7, %c0_8] : memref<128x384xbf16, #tpu.memory_space<vmem>>, vector<128x384xbf16>
    %c0_9 = arith.constant 0 : index
    %c0_10 = arith.constant 0 : index
    %8 = vector.load %arg3[%c0_9, %c0_10] : memref<128x384xbf16, #tpu.memory_space<vmem>>, vector<128x384xbf16>
    %c0_11 = arith.constant 0 : index
    %c0_12 = arith.constant 0 : index
    %9 = vector.load %arg5[%c0_11, %c0_12] : memref<1x256xf32, #tpu.memory_space<vmem>>, vector<1x128xf32>
    %10 = vector.shape_cast %9 : vector<1x128xf32> to vector<1x128xf32>
    %11 = vector.broadcast %10 : vector<1x128xf32> to vector<8x128xf32>
    %c0_13 = arith.constant 0 : index
    %c128 = arith.constant 128 : index
    %12 = vector.load %arg5[%c0_13, %c128] : memref<1x256xf32, #tpu.memory_space<vmem>>, vector<1x128xf32>
    %13 = vector.shape_cast %12 : vector<1x128xf32> to vector<1x128xf32>
    %14 = vector.broadcast %13 : vector<1x128xf32> to vector<8x128xf32>
    %cst_14 = arith.constant 0.000000e+00 : f32
    %15 = vector.broadcast %cst_14 : f32 to vector<8x128xf32>
    %cst_15 = arith.constant 0.000000e+00 : f32
    %16 = vector.broadcast %cst_15 : f32 to vector<8x128xf32>
    %c0_16 = arith.constant 0 : index
    %c0_17 = arith.constant 0 : index
    %17 = vector.load %arg12[%c0_16, %c0_17] : memref<64x768xf32, #tpu.memory_space<vmem>>, vector<8x384xf32>
    %c56 = arith.constant 56 : index
    %c384 = arith.constant 384 : index
    %18 = vector.load %arg12[%c56, %c384] : memref<64x768xf32, #tpu.memory_space<vmem>>, vector<8x384xf32>
    %19 = arith.truncf %15 : vector<8x128xf32> to vector<8x128xbf16>
    %cst_18 = arith.constant dense<0.000000e+00> : vector<8x384xf32>
    %20 = tpu.matmul %19, %7, %cst_18 {dimension_numbers = #tpu.dot_dimension_numbers<[1], [0], [0], [1], [0, 0, 1, 1], [], []>} : vector<8x128xbf16>, vector<128x384xbf16>, vector<8x384xf32> -> vector<8x384xf32>
    %21 = arith.truncf %16 : vector<8x128xf32> to vector<8x128xbf16>
    %cst_19 = arith.constant dense<0.000000e+00> : vector<8x384xf32>
    %22 = tpu.matmul %21, %8, %cst_19 {dimension_numbers = #tpu.dot_dimension_numbers<[1], [0], [0], [1], [0, 0, 1, 1], [], []>} : vector<8x128xbf16>, vector<128x384xbf16>, vector<8x384xf32> -> vector<8x384xf32>
    %23 = vector.extract_strided_slice %17 {offsets = [0, 0], sizes = [8, 256], strides = [1, 1]} : vector<8x384xf32> to vector<8x256xf32>
    %24 = vector.extract_strided_slice %20 {offsets = [0, 0], sizes = [8, 256], strides = [1, 1]} : vector<8x384xf32> to vector<8x256xf32>
    %25 = arith.addf %23, %24 : vector<8x256xf32>
    %26 = arith.negf %25 : vector<8x256xf32>
    %27 = math.exp %26 : vector<8x256xf32>
    %cst_20 = arith.constant 1.000000e+00 : f32
    %28 = vector.broadcast %cst_20 : f32 to vector<8x256xf32>
    %29 = arith.addf %28, %27 : vector<8x256xf32>
    %30 = arith.divf %28, %29 : vector<8x256xf32>
    %31 = vector.extract_strided_slice %30 {offsets = [0, 0], sizes = [8, 128], strides = [1, 1]} : vector<8x256xf32> to vector<8x128xf32>
    %32 = vector.extract_strided_slice %30 {offsets = [0, 128], sizes = [8, 128], strides = [1, 1]} : vector<8x256xf32> to vector<8x128xf32>
    %33 = vector.extract_strided_slice %17 {offsets = [0, 256], sizes = [8, 128], strides = [1, 1]} : vector<8x384xf32> to vector<8x128xf32>
    %34 = vector.extract_strided_slice %20 {offsets = [0, 256], sizes = [8, 128], strides = [1, 1]} : vector<8x384xf32> to vector<8x128xf32>
    %35 = arith.addf %34, %11 : vector<8x128xf32>
    %36 = arith.mulf %31, %35 : vector<8x128xf32>
    %37 = arith.addf %33, %36 : vector<8x128xf32>
    %38 = math.tanh %37 : vector<8x128xf32>
    %cst_21 = arith.constant 1.000000e+00 : f32
    %39 = vector.broadcast %cst_21 : f32 to vector<8x128xf32>
    %40 = arith.subf %39, %32 : vector<8x128xf32>
    %41 = arith.mulf %40, %38 : vector<8x128xf32>
    %42 = arith.mulf %32, %15 : vector<8x128xf32>
    %43 = arith.addf %41, %42 : vector<8x128xf32>
    %44 = vector.extract_strided_slice %18 {offsets = [0, 0], sizes = [8, 256], strides = [1, 1]} : vector<8x384xf32> to vector<8x256xf32>
    %45 = vector.extract_strided_slice %22 {offsets = [0, 0], sizes = [8, 256], strides = [1, 1]} : vector<8x384xf32> to vector<8x256xf32>
    %46 = arith.addf %44, %45 : vector<8x256xf32>
    %47 = arith.negf %46 : vector<8x256xf32>
    %48 = math.exp %47 : vector<8x256xf32>
    %cst_22 = arith.constant 1.000000e+00 : f32
    %49 = vector.broadcast %cst_22 : f32 to vector<8x256xf32>
    %50 = arith.addf %49, %48 : vector<8x256xf32>
    %51 = arith.divf %49, %50 : vector<8x256xf32>
    %52 = vector.extract_strided_slice %51 {offsets = [0, 0], sizes = [8, 128], strides = [1, 1]} : vector<8x256xf32> to vector<8x128xf32>
    %53 = vector.extract_strided_slice %51 {offsets = [0, 128], sizes = [8, 128], strides = [1, 1]} : vector<8x256xf32> to vector<8x128xf32>
    %54 = vector.extract_strided_slice %18 {offsets = [0, 256], sizes = [8, 128], strides = [1, 1]} : vector<8x384xf32> to vector<8x128xf32>
    %55 = vector.extract_strided_slice %22 {offsets = [0, 256], sizes = [8, 128], strides = [1, 1]} : vector<8x384xf32> to vector<8x128xf32>
    %56 = arith.addf %55, %14 : vector<8x128xf32>
    %57 = arith.mulf %52, %56 : vector<8x128xf32>
    %58 = arith.addf %54, %57 : vector<8x128xf32>
    %59 = math.tanh %58 : vector<8x128xf32>
    %cst_23 = arith.constant 1.000000e+00 : f32
    %60 = vector.broadcast %cst_23 : f32 to vector<8x128xf32>
    %61 = arith.subf %60, %53 : vector<8x128xf32>
    %62 = arith.mulf %61, %59 : vector<8x128xf32>
    %63 = arith.mulf %53, %16 : vector<8x128xf32>
    %64 = arith.addf %62, %63 : vector<8x128xf32>
    %c8 = arith.constant 8 : index
    %c0_24 = arith.constant 0 : index
    %65 = vector.load %arg12[%c8, %c0_24] : memref<64x768xf32, #tpu.memory_space<vmem>>, vector<8x384xf32>
    %c48 = arith.constant 48 : index
    %c384_25 = arith.constant 384 : index
    %66 = vector.load %arg12[%c48, %c384_25] : memref<64x768xf32, #tpu.memory_space<vmem>>, vector<8x384xf32>
    %67 = arith.truncf %43 : vector<8x128xf32> to vector<8x128xbf16>
    %cst_26 = arith.constant dense<0.000000e+00> : vector<8x384xf32>
    %68 = tpu.matmul %67, %7, %cst_26 {dimension_numbers = #tpu.dot_dimension_numbers<[1], [0], [0], [1], [0, 0, 1, 1], [], []>} : vector<8x128xbf16>, vector<128x384xbf16>, vector<8x384xf32> -> vector<8x384xf32>
    %69 = arith.truncf %64 : vector<8x128xf32> to vector<8x128xbf16>
    %cst_27 = arith.constant dense<0.000000e+00> : vector<8x384xf32>
    %70 = tpu.matmul %69, %8, %cst_27 {dimension_numbers = #tpu.dot_dimension_numbers<[1], [0], [0], [1], [0, 0, 1, 1], [], []>} : vector<8x128xbf16>, vector<128x384xbf16>, vector<8x384xf32> -> vector<8x384xf32>
    %71 = vector.extract_strided_slice %65 {offsets = [0, 0], sizes = [8, 256], strides = [1, 1]} : vector<8x384xf32> to vector<8x256xf32>
    %72 = vector.extract_strided_slice %68 {offsets = [0, 0], sizes = [8, 256], strides = [1, 1]} : vector<8x384xf32> to vector<8x256xf32>
    %73 = arith.addf %71, %72 : vector<8x256xf32>
    %74 = arith.negf %73 : vector<8x256xf32>
    %75 = math.exp %74 : vector<8x256xf32>
    %cst_28 = arith.constant 1.000000e+00 : f32
    %76 = vector.broadcast %cst_28 : f32 to vector<8x256xf32>
    %77 = arith.addf %76, %75 : vector<8x256xf32>
    %78 = arith.divf %76, %77 : vector<8x256xf32>
    %79 = vector.extract_strided_slice %78 {offsets = [0, 0], sizes = [8, 128], strides = [1, 1]} : vector<8x256xf32> to vector<8x128xf32>
    %80 = vector.extract_strided_slice %78 {offsets = [0, 128], sizes = [8, 128], strides = [1, 1]} : vector<8x256xf32> to vector<8x128xf32>
    %81 = vector.extract_strided_slice %65 {offsets = [0, 256], sizes = [8, 128], strides = [1, 1]} : vector<8x384xf32> to vector<8x128xf32>
    %82 = vector.extract_strided_slice %68 {offsets = [0, 256], sizes = [8, 128], strides = [1, 1]} : vector<8x384xf32> to vector<8x128xf32>
    %83 = arith.addf %82, %11 : vector<8x128xf32>
    %84 = arith.mulf %79, %83 : vector<8x128xf32>
    %85 = arith.addf %81, %84 : vector<8x128xf32>
    %86 = math.tanh %85 : vector<8x128xf32>
    %cst_29 = arith.constant 1.000000e+00 : f32
    %87 = vector.broadcast %cst_29 : f32 to vector<8x128xf32>
    %88 = arith.subf %87, %80 : vector<8x128xf32>
    %89 = arith.mulf %88, %86 : vector<8x128xf32>
    %90 = arith.mulf %80, %43 : vector<8x128xf32>
    %91 = arith.addf %89, %90 : vector<8x128xf32>
    %92 = vector.extract_strided_slice %66 {offsets = [0, 0], sizes = [8, 256], strides = [1, 1]} : vector<8x384xf32> to vector<8x256xf32>
    %93 = vector.extract_strided_slice %70 {offsets = [0, 0], sizes = [8, 256], strides = [1, 1]} : vector<8x384xf32> to vector<8x256xf32>
    %94 = arith.addf %92, %93 : vector<8x256xf32>
    %95 = arith.negf %94 : vector<8x256xf32>
    %96 = math.exp %95 : vector<8x256xf32>
    %cst_30 = arith.constant 1.000000e+00 : f32
    %97 = vector.broadcast %cst_30 : f32 to vector<8x256xf32>
    %98 = arith.addf %97, %96 : vector<8x256xf32>
    %99 = arith.divf %97, %98 : vector<8x256xf32>
    %100 = vector.extract_strided_slice %99 {offsets = [0, 0], sizes = [8, 128], strides = [1, 1]} : vector<8x256xf32> to vector<8x128xf32>
    %101 = vector.extract_strided_slice %99 {offsets = [0, 128], sizes = [8, 128], strides = [1, 1]} : vector<8x256xf32> to vector<8x128xf32>
    %102 = vector.extract_strided_slice %66 {offsets = [0, 256], sizes = [8, 128], strides = [1, 1]} : vector<8x384xf32> to vector<8x128xf32>
    %103 = vector.extract_strided_slice %70 {offsets = [0, 256], sizes = [8, 128], strides = [1, 1]} : vector<8x384xf32> to vector<8x128xf32>
    %104 = arith.addf %103, %14 : vector<8x128xf32>
    %105 = arith.mulf %100, %104 : vector<8x128xf32>
    %106 = arith.addf %102, %105 : vector<8x128xf32>
    %107 = math.tanh %106 : vector<8x128xf32>
    %cst_31 = arith.constant 1.000000e+00 : f32
    %108 = vector.broadcast %cst_31 : f32 to vector<8x128xf32>
    %109 = arith.subf %108, %101 : vector<8x128xf32>
    %110 = arith.mulf %109, %107 : vector<8x128xf32>
    %111 = arith.mulf %101, %64 : vector<8x128xf32>
    %112 = arith.addf %110, %111 : vector<8x128xf32>
    %c16 = arith.constant 16 : index
    %c0_32 = arith.constant 0 : index
    %113 = vector.load %arg12[%c16, %c0_32] : memref<64x768xf32, #tpu.memory_space<vmem>>, vector<8x384xf32>
    %c40 = arith.constant 40 : index
    %c384_33 = arith.constant 384 : index
    %114 = vector.load %arg12[%c40, %c384_33] : memref<64x768xf32, #tpu.memory_space<vmem>>, vector<8x384xf32>
    %115 = arith.truncf %91 : vector<8x128xf32> to vector<8x128xbf16>
    %cst_34 = arith.constant dense<0.000000e+00> : vector<8x384xf32>
    %116 = tpu.matmul %115, %7, %cst_34 {dimension_numbers = #tpu.dot_dimension_numbers<[1], [0], [0], [1], [0, 0, 1, 1], [], []>} : vector<8x128xbf16>, vector<128x384xbf16>, vector<8x384xf32> -> vector<8x384xf32>
    %117 = arith.truncf %112 : vector<8x128xf32> to vector<8x128xbf16>
    %cst_35 = arith.constant dense<0.000000e+00> : vector<8x384xf32>
    %118 = tpu.matmul %117, %8, %cst_35 {dimension_numbers = #tpu.dot_dimension_numbers<[1], [0], [0], [1], [0, 0, 1, 1], [], []>} : vector<8x128xbf16>, vector<128x384xbf16>, vector<8x384xf32> -> vector<8x384xf32>
    %119 = vector.extract_strided_slice %113 {offsets = [0, 0], sizes = [8, 256], strides = [1, 1]} : vector<8x384xf32> to vector<8x256xf32>
    %120 = vector.extract_strided_slice %116 {offsets = [0, 0], sizes = [8, 256], strides = [1, 1]} : vector<8x384xf32> to vector<8x256xf32>
    %121 = arith.addf %119, %120 : vector<8x256xf32>
    %122 = arith.negf %121 : vector<8x256xf32>
    %123 = math.exp %122 : vector<8x256xf32>
    %cst_36 = arith.constant 1.000000e+00 : f32
    %124 = vector.broadcast %cst_36 : f32 to vector<8x256xf32>
    %125 = arith.addf %124, %123 : vector<8x256xf32>
    %126 = arith.divf %124, %125 : vector<8x256xf32>
    %127 = vector.extract_strided_slice %126 {offsets = [0, 0], sizes = [8, 128], strides = [1, 1]} : vector<8x256xf32> to vector<8x128xf32>
    %128 = vector.extract_strided_slice %126 {offsets = [0, 128], sizes = [8, 128], strides = [1, 1]} : vector<8x256xf32> to vector<8x128xf32>
    %129 = vector.extract_strided_slice %113 {offsets = [0, 256], sizes = [8, 128], strides = [1, 1]} : vector<8x384xf32> to vector<8x128xf32>
    %130 = vector.extract_strided_slice %116 {offsets = [0, 256], sizes = [8, 128], strides = [1, 1]} : vector<8x384xf32> to vector<8x128xf32>
    %131 = arith.addf %130, %11 : vector<8x128xf32>
    %132 = arith.mulf %127, %131 : vector<8x128xf32>
    %133 = arith.addf %129, %132 : vector<8x128xf32>
    %134 = math.tanh %133 : vector<8x128xf32>
    %cst_37 = arith.constant 1.000000e+00 : f32
    %135 = vector.broadcast %cst_37 : f32 to vector<8x128xf32>
    %136 = arith.subf %135, %128 : vector<8x128xf32>
    %137 = arith.mulf %136, %134 : vector<8x128xf32>
    %138 = arith.mulf %128, %91 : vector<8x128xf32>
    %139 = arith.addf %137, %138 : vector<8x128xf32>
    %140 = vector.extract_strided_slice %114 {offsets = [0, 0], sizes = [8, 256], strides = [1, 1]} : vector<8x384xf32> to vector<8x256xf32>
    %141 = vector.extract_strided_slice %118 {offsets = [0, 0], sizes = [8, 256], strides = [1, 1]} : vector<8x384xf32> to vector<8x256xf32>
    %142 = arith.addf %140, %141 : vector<8x256xf32>
    %143 = arith.negf %142 : vector<8x256xf32>
    %144 = math.exp %143 : vector<8x256xf32>
    %cst_38 = arith.constant 1.000000e+00 : f32
    %145 = vector.broadcast %cst_38 : f32 to vector<8x256xf32>
    %146 = arith.addf %145, %144 : vector<8x256xf32>
    %147 = arith.divf %145, %146 : vector<8x256xf32>
    %148 = vector.extract_strided_slice %147 {offsets = [0, 0], sizes = [8, 128], strides = [1, 1]} : vector<8x256xf32> to vector<8x128xf32>
    %149 = vector.extract_strided_slice %147 {offsets = [0, 128], sizes = [8, 128], strides = [1, 1]} : vector<8x256xf32> to vector<8x128xf32>
    %150 = vector.extract_strided_slice %114 {offsets = [0, 256], sizes = [8, 128], strides = [1, 1]} : vector<8x384xf32> to vector<8x128xf32>
    %151 = vector.extract_strided_slice %118 {offsets = [0, 256], sizes = [8, 128], strides = [1, 1]} : vector<8x384xf32> to vector<8x128xf32>
    %152 = arith.addf %151, %14 : vector<8x128xf32>
    %153 = arith.mulf %148, %152 : vector<8x128xf32>
    %154 = arith.addf %150, %153 : vector<8x128xf32>
    %155 = math.tanh %154 : vector<8x128xf32>
    %cst_39 = arith.constant 1.000000e+00 : f32
    %156 = vector.broadcast %cst_39 : f32 to vector<8x128xf32>
    %157 = arith.subf %156, %149 : vector<8x128xf32>
    %158 = arith.mulf %157, %155 : vector<8x128xf32>
    %159 = arith.mulf %149, %112 : vector<8x128xf32>
    %160 = arith.addf %158, %159 : vector<8x128xf32>
    %c24 = arith.constant 24 : index
    %c0_40 = arith.constant 0 : index
    %161 = vector.load %arg12[%c24, %c0_40] : memref<64x768xf32, #tpu.memory_space<vmem>>, vector<8x384xf32>
    %c32 = arith.constant 32 : index
    %c384_41 = arith.constant 384 : index
    %162 = vector.load %arg12[%c32, %c384_41] : memref<64x768xf32, #tpu.memory_space<vmem>>, vector<8x384xf32>
    %163 = arith.truncf %139 : vector<8x128xf32> to vector<8x128xbf16>
    %cst_42 = arith.constant dense<0.000000e+00> : vector<8x384xf32>
    %164 = tpu.matmul %163, %7, %cst_42 {dimension_numbers = #tpu.dot_dimension_numbers<[1], [0], [0], [1], [0, 0, 1, 1], [], []>} : vector<8x128xbf16>, vector<128x384xbf16>, vector<8x384xf32> -> vector<8x384xf32>
    %165 = arith.truncf %160 : vector<8x128xf32> to vector<8x128xbf16>
    %cst_43 = arith.constant dense<0.000000e+00> : vector<8x384xf32>
    %166 = tpu.matmul %165, %8, %cst_43 {dimension_numbers = #tpu.dot_dimension_numbers<[1], [0], [0], [1], [0, 0, 1, 1], [], []>} : vector<8x128xbf16>, vector<128x384xbf16>, vector<8x384xf32> -> vector<8x384xf32>
    %167 = vector.extract_strided_slice %161 {offsets = [0, 0], sizes = [8, 256], strides = [1, 1]} : vector<8x384xf32> to vector<8x256xf32>
    %168 = vector.extract_strided_slice %164 {offsets = [0, 0], sizes = [8, 256], strides = [1, 1]} : vector<8x384xf32> to vector<8x256xf32>
    %169 = arith.addf %167, %168 : vector<8x256xf32>
    %170 = arith.negf %169 : vector<8x256xf32>
    %171 = math.exp %170 : vector<8x256xf32>
    %cst_44 = arith.constant 1.000000e+00 : f32
    %172 = vector.broadcast %cst_44 : f32 to vector<8x256xf32>
    %173 = arith.addf %172, %171 : vector<8x256xf32>
    %174 = arith.divf %172, %173 : vector<8x256xf32>
    %175 = vector.extract_strided_slice %174 {offsets = [0, 0], sizes = [8, 128], strides = [1, 1]} : vector<8x256xf32> to vector<8x128xf32>
    %176 = vector.extract_strided_slice %174 {offsets = [0, 128], sizes = [8, 128], strides = [1, 1]} : vector<8x256xf32> to vector<8x128xf32>
    %177 = vector.extract_strided_slice %161 {offsets = [0, 256], sizes = [8, 128], strides = [1, 1]} : vector<8x384xf32> to vector<8x128xf32>
    %178 = vector.extract_strided_slice %164 {offsets = [0, 256], sizes = [8, 128], strides = [1, 1]} : vector<8x384xf32> to vector<8x128xf32>
    %179 = arith.addf %178, %11 : vector<8x128xf32>
    %180 = arith.mulf %175, %179 : vector<8x128xf32>
    %181 = arith.addf %177, %180 : vector<8x128xf32>
    %182 = math.tanh %181 : vector<8x128xf32>
    %cst_45 = arith.constant 1.000000e+00 : f32
    %183 = vector.broadcast %cst_45 : f32 to vector<8x128xf32>
    %184 = arith.subf %183, %176 : vector<8x128xf32>
    %185 = arith.mulf %184, %182 : vector<8x128xf32>
    %186 = arith.mulf %176, %139 : vector<8x128xf32>
    %187 = arith.addf %185, %186 : vector<8x128xf32>
    %188 = vector.extract_strided_slice %162 {offsets = [0, 0], sizes = [8, 256], strides = [1, 1]} : vector<8x384xf32> to vector<8x256xf32>
    %189 = vector.extract_strided_slice %166 {offsets = [0, 0], sizes = [8, 256], strides = [1, 1]} : vector<8x384xf32> to vector<8x256xf32>
    %190 = arith.addf %188, %189 : vector<8x256xf32>
    %191 = arith.negf %190 : vector<8x256xf32>
    %192 = math.exp %191 : vector<8x256xf32>
    %cst_46 = arith.constant 1.000000e+00 : f32
    %193 = vector.broadcast %cst_46 : f32 to vector<8x256xf32>
    %194 = arith.addf %193, %192 : vector<8x256xf32>
    %195 = arith.divf %193, %194 : vector<8x256xf32>
    %196 = vector.extract_strided_slice %195 {offsets = [0, 0], sizes = [8, 128], strides = [1, 1]} : vector<8x256xf32> to vector<8x128xf32>
    %197 = vector.extract_strided_slice %195 {offsets = [0, 128], sizes = [8, 128], strides = [1, 1]} : vector<8x256xf32> to vector<8x128xf32>
    %198 = vector.extract_strided_slice %162 {offsets = [0, 256], sizes = [8, 128], strides = [1, 1]} : vector<8x384xf32> to vector<8x128xf32>
    %199 = vector.extract_strided_slice %166 {offsets = [0, 256], sizes = [8, 128], strides = [1, 1]} : vector<8x384xf32> to vector<8x128xf32>
    %200 = arith.addf %199, %14 : vector<8x128xf32>
    %201 = arith.mulf %196, %200 : vector<8x128xf32>
    %202 = arith.addf %198, %201 : vector<8x128xf32>
    %203 = math.tanh %202 : vector<8x128xf32>
    %cst_47 = arith.constant 1.000000e+00 : f32
    %204 = vector.broadcast %cst_47 : f32 to vector<8x128xf32>
    %205 = arith.subf %204, %197 : vector<8x128xf32>
    %206 = arith.mulf %205, %203 : vector<8x128xf32>
    %207 = arith.mulf %197, %160 : vector<8x128xf32>
    %208 = arith.addf %206, %207 : vector<8x128xf32>
    %c32_48 = arith.constant 32 : index
    %c0_49 = arith.constant 0 : index
    %209 = vector.load %arg12[%c32_48, %c0_49] : memref<64x768xf32, #tpu.memory_space<vmem>>, vector<8x384xf32>
    %c24_50 = arith.constant 24 : index
    %c384_51 = arith.constant 384 : index
    %210 = vector.load %arg12[%c24_50, %c384_51] : memref<64x768xf32, #tpu.memory_space<vmem>>, vector<8x384xf32>
    %211 = arith.truncf %187 : vector<8x128xf32> to vector<8x128xbf16>
    %cst_52 = arith.constant dense<0.000000e+00> : vector<8x384xf32>
    %212 = tpu.matmul %211, %7, %cst_52 {dimension_numbers = #tpu.dot_dimension_numbers<[1], [0], [0], [1], [0, 0, 1, 1], [], []>} : vector<8x128xbf16>, vector<128x384xbf16>, vector<8x384xf32> -> vector<8x384xf32>
    %213 = arith.truncf %208 : vector<8x128xf32> to vector<8x128xbf16>
    %cst_53 = arith.constant dense<0.000000e+00> : vector<8x384xf32>
    %214 = tpu.matmul %213, %8, %cst_53 {dimension_numbers = #tpu.dot_dimension_numbers<[1], [0], [0], [1], [0, 0, 1, 1], [], []>} : vector<8x128xbf16>, vector<128x384xbf16>, vector<8x384xf32> -> vector<8x384xf32>
    %215 = vector.extract_strided_slice %209 {offsets = [0, 0], sizes = [8, 256], strides = [1, 1]} : vector<8x384xf32> to vector<8x256xf32>
    %216 = vector.extract_strided_slice %212 {offsets = [0, 0], sizes = [8, 256], strides = [1, 1]} : vector<8x384xf32> to vector<8x256xf32>
    %217 = arith.addf %215, %216 : vector<8x256xf32>
    %218 = arith.negf %217 : vector<8x256xf32>
    %219 = math.exp %218 : vector<8x256xf32>
    %cst_54 = arith.constant 1.000000e+00 : f32
    %220 = vector.broadcast %cst_54 : f32 to vector<8x256xf32>
    %221 = arith.addf %220, %219 : vector<8x256xf32>
    %222 = arith.divf %220, %221 : vector<8x256xf32>
    %223 = vector.extract_strided_slice %222 {offsets = [0, 0], sizes = [8, 128], strides = [1, 1]} : vector<8x256xf32> to vector<8x128xf32>
    %224 = vector.extract_strided_slice %222 {offsets = [0, 128], sizes = [8, 128], strides = [1, 1]} : vector<8x256xf32> to vector<8x128xf32>
    %225 = vector.extract_strided_slice %209 {offsets = [0, 256], sizes = [8, 128], strides = [1, 1]} : vector<8x384xf32> to vector<8x128xf32>
    %226 = vector.extract_strided_slice %212 {offsets = [0, 256], sizes = [8, 128], strides = [1, 1]} : vector<8x384xf32> to vector<8x128xf32>
    %227 = arith.addf %226, %11 : vector<8x128xf32>
    %228 = arith.mulf %223, %227 : vector<8x128xf32>
    %229 = arith.addf %225, %228 : vector<8x128xf32>
    %230 = math.tanh %229 : vector<8x128xf32>
    %cst_55 = arith.constant 1.000000e+00 : f32
    %231 = vector.broadcast %cst_55 : f32 to vector<8x128xf32>
    %232 = arith.subf %231, %224 : vector<8x128xf32>
    %233 = arith.mulf %232, %230 : vector<8x128xf32>
    %234 = arith.mulf %224, %187 : vector<8x128xf32>
    %235 = arith.addf %233, %234 : vector<8x128xf32>
    %236 = vector.extract_strided_slice %210 {offsets = [0, 0], sizes = [8, 256], strides = [1, 1]} : vector<8x384xf32> to vector<8x256xf32>
    %237 = vector.extract_strided_slice %214 {offsets = [0, 0], sizes = [8, 256], strides = [1, 1]} : vector<8x384xf32> to vector<8x256xf32>
    %238 = arith.addf %236, %237 : vector<8x256xf32>
    %239 = arith.negf %238 : vector<8x256xf32>
    %240 = math.exp %239 : vector<8x256xf32>
    %cst_56 = arith.constant 1.000000e+00 : f32
    %241 = vector.broadcast %cst_56 : f32 to vector<8x256xf32>
    %242 = arith.addf %241, %240 : vector<8x256xf32>
    %243 = arith.divf %241, %242 : vector<8x256xf32>
    %244 = vector.extract_strided_slice %243 {offsets = [0, 0], sizes = [8, 128], strides = [1, 1]} : vector<8x256xf32> to vector<8x128xf32>
    %245 = vector.extract_strided_slice %243 {offsets = [0, 128], sizes = [8, 128], strides = [1, 1]} : vector<8x256xf32> to vector<8x128xf32>
    %246 = vector.extract_strided_slice %210 {offsets = [0, 256], sizes = [8, 128], strides = [1, 1]} : vector<8x384xf32> to vector<8x128xf32>
    %247 = vector.extract_strided_slice %214 {offsets = [0, 256], sizes = [8, 128], strides = [1, 1]} : vector<8x384xf32> to vector<8x128xf32>
    %248 = arith.addf %247, %14 : vector<8x128xf32>
    %249 = arith.mulf %244, %248 : vector<8x128xf32>
    %250 = arith.addf %246, %249 : vector<8x128xf32>
    %251 = math.tanh %250 : vector<8x128xf32>
    %cst_57 = arith.constant 1.000000e+00 : f32
    %252 = vector.broadcast %cst_57 : f32 to vector<8x128xf32>
    %253 = arith.subf %252, %245 : vector<8x128xf32>
    %254 = arith.mulf %253, %251 : vector<8x128xf32>
    %255 = arith.mulf %245, %208 : vector<8x128xf32>
    %256 = arith.addf %254, %255 : vector<8x128xf32>
    %c40_58 = arith.constant 40 : index
    %c0_59 = arith.constant 0 : index
    %257 = vector.load %arg12[%c40_58, %c0_59] : memref<64x768xf32, #tpu.memory_space<vmem>>, vector<8x384xf32>
    %c16_60 = arith.constant 16 : index
    %c384_61 = arith.constant 384 : index
    %258 = vector.load %arg12[%c16_60, %c384_61] : memref<64x768xf32, #tpu.memory_space<vmem>>, vector<8x384xf32>
    %259 = arith.truncf %235 : vector<8x128xf32> to vector<8x128xbf16>
    %cst_62 = arith.constant dense<0.000000e+00> : vector<8x384xf32>
    %260 = tpu.matmul %259, %7, %cst_62 {dimension_numbers = #tpu.dot_dimension_numbers<[1], [0], [0], [1], [0, 0, 1, 1], [], []>} : vector<8x128xbf16>, vector<128x384xbf16>, vector<8x384xf32> -> vector<8x384xf32>
    %261 = arith.truncf %256 : vector<8x128xf32> to vector<8x128xbf16>
    %cst_63 = arith.constant dense<0.000000e+00> : vector<8x384xf32>
    %262 = tpu.matmul %261, %8, %cst_63 {dimension_numbers = #tpu.dot_dimension_numbers<[1], [0], [0], [1], [0, 0, 1, 1], [], []>} : vector<8x128xbf16>, vector<128x384xbf16>, vector<8x384xf32> -> vector<8x384xf32>
    %263 = vector.extract_strided_slice %257 {offsets = [0, 0], sizes = [8, 256], strides = [1, 1]} : vector<8x384xf32> to vector<8x256xf32>
    %264 = vector.extract_strided_slice %260 {offsets = [0, 0], sizes = [8, 256], strides = [1, 1]} : vector<8x384xf32> to vector<8x256xf32>
    %265 = arith.addf %263, %264 : vector<8x256xf32>
    %266 = arith.negf %265 : vector<8x256xf32>
    %267 = math.exp %266 : vector<8x256xf32>
    %cst_64 = arith.constant 1.000000e+00 : f32
    %268 = vector.broadcast %cst_64 : f32 to vector<8x256xf32>
    %269 = arith.addf %268, %267 : vector<8x256xf32>
    %270 = arith.divf %268, %269 : vector<8x256xf32>
    %271 = vector.extract_strided_slice %270 {offsets = [0, 0], sizes = [8, 128], strides = [1, 1]} : vector<8x256xf32> to vector<8x128xf32>
    %272 = vector.extract_strided_slice %270 {offsets = [0, 128], sizes = [8, 128], strides = [1, 1]} : vector<8x256xf32> to vector<8x128xf32>
    %273 = vector.extract_strided_slice %257 {offsets = [0, 256], sizes = [8, 128], strides = [1, 1]} : vector<8x384xf32> to vector<8x128xf32>
    %274 = vector.extract_strided_slice %260 {offsets = [0, 256], sizes = [8, 128], strides = [1, 1]} : vector<8x384xf32> to vector<8x128xf32>
    %275 = arith.addf %274, %11 : vector<8x128xf32>
    %276 = arith.mulf %271, %275 : vector<8x128xf32>
    %277 = arith.addf %273, %276 : vector<8x128xf32>
    %278 = math.tanh %277 : vector<8x128xf32>
    %cst_65 = arith.constant 1.000000e+00 : f32
    %279 = vector.broadcast %cst_65 : f32 to vector<8x128xf32>
    %280 = arith.subf %279, %272 : vector<8x128xf32>
    %281 = arith.mulf %280, %278 : vector<8x128xf32>
    %282 = arith.mulf %272, %235 : vector<8x128xf32>
    %283 = arith.addf %281, %282 : vector<8x128xf32>
    %284 = vector.extract_strided_slice %258 {offsets = [0, 0], sizes = [8, 256], strides = [1, 1]} : vector<8x384xf32> to vector<8x256xf32>
    %285 = vector.extract_strided_slice %262 {offsets = [0, 0], sizes = [8, 256], strides = [1, 1]} : vector<8x384xf32> to vector<8x256xf32>
    %286 = arith.addf %284, %285 : vector<8x256xf32>
    %287 = arith.negf %286 : vector<8x256xf32>
    %288 = math.exp %287 : vector<8x256xf32>
    %cst_66 = arith.constant 1.000000e+00 : f32
    %289 = vector.broadcast %cst_66 : f32 to vector<8x256xf32>
    %290 = arith.addf %289, %288 : vector<8x256xf32>
    %291 = arith.divf %289, %290 : vector<8x256xf32>
    %292 = vector.extract_strided_slice %291 {offsets = [0, 0], sizes = [8, 128], strides = [1, 1]} : vector<8x256xf32> to vector<8x128xf32>
    %293 = vector.extract_strided_slice %291 {offsets = [0, 128], sizes = [8, 128], strides = [1, 1]} : vector<8x256xf32> to vector<8x128xf32>
    %294 = vector.extract_strided_slice %258 {offsets = [0, 256], sizes = [8, 128], strides = [1, 1]} : vector<8x384xf32> to vector<8x128xf32>
    %295 = vector.extract_strided_slice %262 {offsets = [0, 256], sizes = [8, 128], strides = [1, 1]} : vector<8x384xf32> to vector<8x128xf32>
    %296 = arith.addf %295, %14 : vector<8x128xf32>
    %297 = arith.mulf %292, %296 : vector<8x128xf32>
    %298 = arith.addf %294, %297 : vector<8x128xf32>
    %299 = math.tanh %298 : vector<8x128xf32>
    %cst_67 = arith.constant 1.000000e+00 : f32
    %300 = vector.broadcast %cst_67 : f32 to vector<8x128xf32>
    %301 = arith.subf %300, %293 : vector<8x128xf32>
    %302 = arith.mulf %301, %299 : vector<8x128xf32>
    %303 = arith.mulf %293, %256 : vector<8x128xf32>
    %304 = arith.addf %302, %303 : vector<8x128xf32>
    %c48_68 = arith.constant 48 : index
    %c0_69 = arith.constant 0 : index
    %305 = vector.load %arg12[%c48_68, %c0_69] : memref<64x768xf32, #tpu.memory_space<vmem>>, vector<8x384xf32>
    %c8_70 = arith.constant 8 : index
    %c384_71 = arith.constant 384 : index
    %306 = vector.load %arg12[%c8_70, %c384_71] : memref<64x768xf32, #tpu.memory_space<vmem>>, vector<8x384xf32>
    %307 = arith.truncf %283 : vector<8x128xf32> to vector<8x128xbf16>
    %cst_72 = arith.constant dense<0.000000e+00> : vector<8x384xf32>
    %308 = tpu.matmul %307, %7, %cst_72 {dimension_numbers = #tpu.dot_dimension_numbers<[1], [0], [0], [1], [0, 0, 1, 1], [], []>} : vector<8x128xbf16>, vector<128x384xbf16>, vector<8x384xf32> -> vector<8x384xf32>
    %309 = arith.truncf %304 : vector<8x128xf32> to vector<8x128xbf16>
    %cst_73 = arith.constant dense<0.000000e+00> : vector<8x384xf32>
    %310 = tpu.matmul %309, %8, %cst_73 {dimension_numbers = #tpu.dot_dimension_numbers<[1], [0], [0], [1], [0, 0, 1, 1], [], []>} : vector<8x128xbf16>, vector<128x384xbf16>, vector<8x384xf32> -> vector<8x384xf32>
    %311 = vector.extract_strided_slice %305 {offsets = [0, 0], sizes = [8, 256], strides = [1, 1]} : vector<8x384xf32> to vector<8x256xf32>
    %312 = vector.extract_strided_slice %308 {offsets = [0, 0], sizes = [8, 256], strides = [1, 1]} : vector<8x384xf32> to vector<8x256xf32>
    %313 = arith.addf %311, %312 : vector<8x256xf32>
    %314 = arith.negf %313 : vector<8x256xf32>
    %315 = math.exp %314 : vector<8x256xf32>
    %cst_74 = arith.constant 1.000000e+00 : f32
    %316 = vector.broadcast %cst_74 : f32 to vector<8x256xf32>
    %317 = arith.addf %316, %315 : vector<8x256xf32>
    %318 = arith.divf %316, %317 : vector<8x256xf32>
    %319 = vector.extract_strided_slice %318 {offsets = [0, 0], sizes = [8, 128], strides = [1, 1]} : vector<8x256xf32> to vector<8x128xf32>
    %320 = vector.extract_strided_slice %318 {offsets = [0, 128], sizes = [8, 128], strides = [1, 1]} : vector<8x256xf32> to vector<8x128xf32>
    %321 = vector.extract_strided_slice %305 {offsets = [0, 256], sizes = [8, 128], strides = [1, 1]} : vector<8x384xf32> to vector<8x128xf32>
    %322 = vector.extract_strided_slice %308 {offsets = [0, 256], sizes = [8, 128], strides = [1, 1]} : vector<8x384xf32> to vector<8x128xf32>
    %323 = arith.addf %322, %11 : vector<8x128xf32>
    %324 = arith.mulf %319, %323 : vector<8x128xf32>
    %325 = arith.addf %321, %324 : vector<8x128xf32>
    %326 = math.tanh %325 : vector<8x128xf32>
    %cst_75 = arith.constant 1.000000e+00 : f32
    %327 = vector.broadcast %cst_75 : f32 to vector<8x128xf32>
    %328 = arith.subf %327, %320 : vector<8x128xf32>
    %329 = arith.mulf %328, %326 : vector<8x128xf32>
    %330 = arith.mulf %320, %283 : vector<8x128xf32>
    %331 = arith.addf %329, %330 : vector<8x128xf32>
    %332 = vector.extract_strided_slice %306 {offsets = [0, 0], sizes = [8, 256], strides = [1, 1]} : vector<8x384xf32> to vector<8x256xf32>
    %333 = vector.extract_strided_slice %310 {offsets = [0, 0], sizes = [8, 256], strides = [1, 1]} : vector<8x384xf32> to vector<8x256xf32>
    %334 = arith.addf %332, %333 : vector<8x256xf32>
    %335 = arith.negf %334 : vector<8x256xf32>
    %336 = math.exp %335 : vector<8x256xf32>
    %cst_76 = arith.constant 1.000000e+00 : f32
    %337 = vector.broadcast %cst_76 : f32 to vector<8x256xf32>
    %338 = arith.addf %337, %336 : vector<8x256xf32>
    %339 = arith.divf %337, %338 : vector<8x256xf32>
    %340 = vector.extract_strided_slice %339 {offsets = [0, 0], sizes = [8, 128], strides = [1, 1]} : vector<8x256xf32> to vector<8x128xf32>
    %341 = vector.extract_strided_slice %339 {offsets = [0, 128], sizes = [8, 128], strides = [1, 1]} : vector<8x256xf32> to vector<8x128xf32>
    %342 = vector.extract_strided_slice %306 {offsets = [0, 256], sizes = [8, 128], strides = [1, 1]} : vector<8x384xf32> to vector<8x128xf32>
    %343 = vector.extract_strided_slice %310 {offsets = [0, 256], sizes = [8, 128], strides = [1, 1]} : vector<8x384xf32> to vector<8x128xf32>
    %344 = arith.addf %343, %14 : vector<8x128xf32>
    %345 = arith.mulf %340, %344 : vector<8x128xf32>
    %346 = arith.addf %342, %345 : vector<8x128xf32>
    %347 = math.tanh %346 : vector<8x128xf32>
    %cst_77 = arith.constant 1.000000e+00 : f32
    %348 = vector.broadcast %cst_77 : f32 to vector<8x128xf32>
    %349 = arith.subf %348, %341 : vector<8x128xf32>
    %350 = arith.mulf %349, %347 : vector<8x128xf32>
    %351 = arith.mulf %341, %304 : vector<8x128xf32>
    %352 = arith.addf %350, %351 : vector<8x128xf32>
    %c56_78 = arith.constant 56 : index
    %c0_79 = arith.constant 0 : index
    %353 = vector.load %arg12[%c56_78, %c0_79] : memref<64x768xf32, #tpu.memory_space<vmem>>, vector<8x384xf32>
    %c0_80 = arith.constant 0 : index
    %c384_81 = arith.constant 384 : index
    %354 = vector.load %arg12[%c0_80, %c384_81] : memref<64x768xf32, #tpu.memory_space<vmem>>, vector<8x384xf32>
    %355 = arith.truncf %331 : vector<8x128xf32> to vector<8x128xbf16>
    %cst_82 = arith.constant dense<0.000000e+00> : vector<8x384xf32>
    %356 = tpu.matmul %355, %7, %cst_82 {dimension_numbers = #tpu.dot_dimension_numbers<[1], [0], [0], [1], [0, 0, 1, 1], [], []>} : vector<8x128xbf16>, vector<128x384xbf16>, vector<8x384xf32> -> vector<8x384xf32>
    %357 = arith.truncf %352 : vector<8x128xf32> to vector<8x128xbf16>
    %cst_83 = arith.constant dense<0.000000e+00> : vector<8x384xf32>
    %358 = tpu.matmul %357, %8, %cst_83 {dimension_numbers = #tpu.dot_dimension_numbers<[1], [0], [0], [1], [0, 0, 1, 1], [], []>} : vector<8x128xbf16>, vector<128x384xbf16>, vector<8x384xf32> -> vector<8x384xf32>
    %359 = vector.extract_strided_slice %353 {offsets = [0, 0], sizes = [8, 256], strides = [1, 1]} : vector<8x384xf32> to vector<8x256xf32>
    %360 = vector.extract_strided_slice %356 {offsets = [0, 0], sizes = [8, 256], strides = [1, 1]} : vector<8x384xf32> to vector<8x256xf32>
    %361 = arith.addf %359, %360 : vector<8x256xf32>
    %362 = arith.negf %361 : vector<8x256xf32>
    %363 = math.exp %362 : vector<8x256xf32>
    %cst_84 = arith.constant 1.000000e+00 : f32
    %364 = vector.broadcast %cst_84 : f32 to vector<8x256xf32>
    %365 = arith.addf %364, %363 : vector<8x256xf32>
    %366 = arith.divf %364, %365 : vector<8x256xf32>
    %367 = vector.extract_strided_slice %366 {offsets = [0, 0], sizes = [8, 128], strides = [1, 1]} : vector<8x256xf32> to vector<8x128xf32>
    %368 = vector.extract_strided_slice %366 {offsets = [0, 128], sizes = [8, 128], strides = [1, 1]} : vector<8x256xf32> to vector<8x128xf32>
    %369 = vector.extract_strided_slice %353 {offsets = [0, 256], sizes = [8, 128], strides = [1, 1]} : vector<8x384xf32> to vector<8x128xf32>
    %370 = vector.extract_strided_slice %356 {offsets = [0, 256], sizes = [8, 128], strides = [1, 1]} : vector<8x384xf32> to vector<8x128xf32>
    %371 = arith.addf %370, %11 : vector<8x128xf32>
    %372 = arith.mulf %367, %371 : vector<8x128xf32>
    %373 = arith.addf %369, %372 : vector<8x128xf32>
    %374 = math.tanh %373 : vector<8x128xf32>
    %cst_85 = arith.constant 1.000000e+00 : f32
    %375 = vector.broadcast %cst_85 : f32 to vector<8x128xf32>
    %376 = arith.subf %375, %368 : vector<8x128xf32>
    %377 = arith.mulf %376, %374 : vector<8x128xf32>
    %378 = arith.mulf %368, %331 : vector<8x128xf32>
    %379 = arith.addf %377, %378 : vector<8x128xf32>
    %380 = vector.extract_strided_slice %354 {offsets = [0, 0], sizes = [8, 256], strides = [1, 1]} : vector<8x384xf32> to vector<8x256xf32>
    %381 = vector.extract_strided_slice %358 {offsets = [0, 0], sizes = [8, 256], strides = [1, 1]} : vector<8x384xf32> to vector<8x256xf32>
    %382 = arith.addf %380, %381 : vector<8x256xf32>
    %383 = arith.negf %382 : vector<8x256xf32>
    %384 = math.exp %383 : vector<8x256xf32>
    %cst_86 = arith.constant 1.000000e+00 : f32
    %385 = vector.broadcast %cst_86 : f32 to vector<8x256xf32>
    %386 = arith.addf %385, %384 : vector<8x256xf32>
    %387 = arith.divf %385, %386 : vector<8x256xf32>
    %388 = vector.extract_strided_slice %387 {offsets = [0, 0], sizes = [8, 128], strides = [1, 1]} : vector<8x256xf32> to vector<8x128xf32>
    %389 = vector.extract_strided_slice %387 {offsets = [0, 128], sizes = [8, 128], strides = [1, 1]} : vector<8x256xf32> to vector<8x128xf32>
    %390 = vector.extract_strided_slice %354 {offsets = [0, 256], sizes = [8, 128], strides = [1, 1]} : vector<8x384xf32> to vector<8x128xf32>
    %391 = vector.extract_strided_slice %358 {offsets = [0, 256], sizes = [8, 128], strides = [1, 1]} : vector<8x384xf32> to vector<8x128xf32>
    %392 = arith.addf %391, %14 : vector<8x128xf32>
    %393 = arith.mulf %388, %392 : vector<8x128xf32>
    %394 = arith.addf %390, %393 : vector<8x128xf32>
    %395 = math.tanh %394 : vector<8x128xf32>
    %cst_87 = arith.constant 1.000000e+00 : f32
    %396 = vector.broadcast %cst_87 : f32 to vector<8x128xf32>
    %397 = arith.subf %396, %389 : vector<8x128xf32>
    %398 = arith.mulf %397, %395 : vector<8x128xf32>
    %399 = arith.mulf %389, %352 : vector<8x128xf32>
    %400 = arith.addf %398, %399 : vector<8x128xf32>
    %c0_88 = arith.constant 0 : index
    %c0_89 = arith.constant 0 : index
    %401 = vector.load %arg6[%c0_88, %c0_89] : memref<1x256xf32, #tpu.memory_space<vmem>>, vector<1x128xf32>
    %402 = vector.broadcast %401 : vector<1x128xf32> to vector<8x128xf32>
    %403 = arith.mulf %379, %402 : vector<8x128xf32>
    %cst_90 = arith.constant dense<0.000000e+00> : vector<8xf32>
    %404 = vector.multi_reduction <add>, %403, %cst_90 [1] : vector<8x128xf32> to vector<8xf32>
    %405 = vector.shape_cast %404 : vector<8xf32> to vector<8x1xf32>
    %c0_91 = arith.constant 0 : index
    %c128_92 = arith.constant 128 : index
    %406 = vector.load %arg6[%c0_91, %c128_92] : memref<1x256xf32, #tpu.memory_space<vmem>>, vector<1x128xf32>
    %407 = vector.broadcast %406 : vector<1x128xf32> to vector<8x128xf32>
    %408 = arith.mulf %400, %407 : vector<8x128xf32>
    %cst_93 = arith.constant dense<0.000000e+00> : vector<8xf32>
    %409 = vector.multi_reduction <add>, %408, %cst_93 [1] : vector<8x128xf32> to vector<8xf32>
    %410 = vector.shape_cast %409 : vector<8xf32> to vector<8x1xf32>
    %411 = arith.addf %405, %410 : vector<8x1xf32>
    %c0_94 = arith.constant 0 : index
    %c0_95 = arith.constant 0 : index
    %412 = vector.load %arg7[%c0_94, %c0_95] : memref<1x1xf32, #tpu.memory_space<vmem>>, vector<1x1xf32>
    %413 = vector.broadcast %412 : vector<1x1xf32> to vector<8x1xf32>
    %414 = arith.addf %411, %413 : vector<8x1xf32>
    %415 = vector.broadcast %414 : vector<8x1xf32> to vector<8x128xf32>
    %416 = arith.mulf %415, %379 : vector<8x128xf32>
    %417 = arith.truncf %416 : vector<8x128xf32> to vector<8x128xbf16>
    %418 = vector.broadcast %414 : vector<8x1xf32> to vector<8x128xf32>
    %419 = arith.mulf %418, %400 : vector<8x128xf32>
    %420 = arith.truncf %419 : vector<8x128xf32> to vector<8x128xbf16>
    %c0_96 = arith.constant 0 : index
    %c0_97 = arith.constant 0 : index
    %421 = vector.load %arg8[%c0_96, %c0_97] : memref<128x128xbf16, #tpu.memory_space<vmem>>, vector<128x128xbf16>
    %cst_98 = arith.constant dense<0.000000e+00> : vector<8x128xf32>
    %422 = tpu.matmul %417, %421, %cst_98 {dimension_numbers = #tpu.dot_dimension_numbers<[1], [0], [0], [1], [0, 0, 1, 1], [], []>} : vector<8x128xbf16>, vector<128x128xbf16>, vector<8x128xf32> -> vector<8x128xf32>
    %c0_99 = arith.constant 0 : index
    %c0_100 = arith.constant 0 : index
    %423 = vector.load %arg9[%c0_99, %c0_100] : memref<128x128xbf16, #tpu.memory_space<vmem>>, vector<128x128xbf16>
    %cst_101 = arith.constant dense<0.000000e+00> : vector<8x128xf32>
    %424 = tpu.matmul %420, %423, %cst_101 {dimension_numbers = #tpu.dot_dimension_numbers<[1], [0], [0], [1], [0, 0, 1, 1], [], []>} : vector<8x128xbf16>, vector<128x128xbf16>, vector<8x128xf32> -> vector<8x128xf32>
    %425 = arith.addf %422, %424 : vector<8x128xf32>
    %c0_102 = arith.constant 0 : index
    %c0_103 = arith.constant 0 : index
    %426 = vector.load %arg10[%c0_102, %c0_103] : memref<1x128xf32, #tpu.memory_space<vmem>>, vector<1x128xf32>
    %427 = vector.broadcast %426 : vector<1x128xf32> to vector<8x128xf32>
    %428 = arith.addf %425, %427 : vector<8x128xf32>
    %c0_104 = arith.constant 0 : index
    %c0_105 = arith.constant 0 : index
    %429 = vector.load %arg11[%c0_104, %c0_105] : memref<8x128xf32, #tpu.memory_space<vmem>>, vector<8x128xf32>
    tpu.vector_store %arg11[%c0_104, %c0_105], %428 {strides = array<i32>} : memref<8x128xf32, #tpu.memory_space<vmem>>, vector<8x128xf32>,
    return
  }
}

</mosaic_0001>

<llo_original>
// kernel: abcnn3_forward.1
$region0: #{abcnn3_forward.1}
  #allocation0 [shape = 'u32[]', space=smem, size = 0x4, offset = 0x4, fixed_abs, tag = 'smem constant byte address 0x4 - core index']
  #allocation1 [shape = 'u32[144,128]{1,0:T(1,128)}', space=vmem, size = 0x12000, scoped, tag = 'internal scratch']
  #allocation2 [shape = 'f32[64,768]{1,0:T(8,128)}', space=vmem, size = 0x30000, scoped, tag = 'scratch operand']
  #allocation3 [shape = 'f32[1,1]{1,0:T(1,128)S(1)}', space=vmem, size = 0x200, scoped, tag = 'scoped memory for abcnn3_forward.1']
  %s0 = inlined_call_operand.vmem [shape: bf16[64,32], index: 0, kind: input, shape index: {}]
  %s1 = inlined_call_operand.vmem [shape: bf16[32,768], index: 1, kind: input, shape index: {}]
  %s2 = inlined_call_operand.vmem [shape: bf16[128,384], index: 2, kind: input, shape index: {}]
  %s3 = inlined_call_operand.vmem [shape: bf16[128,384], index: 3, kind: input, shape index: {}]
  %s4 = inlined_call_operand.vmem [shape: f32[1,768], index: 4, kind: input, shape index: {}]
  %s5 = inlined_call_operand.vmem [shape: f32[1,256], index: 5, kind: input, shape index: {}]
  %s6 = inlined_call_operand.vmem [shape: f32[1,256], index: 6, kind: input, shape index: {}]
  %s7 = inlined_call_operand.<no memory space> [shape: f32[1,1], index: 7, kind: input, shape index: {}]
  %s8 = inlined_call_operand.vmem [shape: bf16[128,128], index: 8, kind: input, shape index: {}]
  %s9 = inlined_call_operand.hbm [shape: bf16[128,128], index: 9, kind: input, shape index: {}]
  %s10 = inlined_call_operand.vmem [shape: f32[1,128], index: 10, kind: input, shape index: {}]
  %s11 = inlined_call_operand.vmem [shape: f32[8,128], index: 11, kind: output, shape index: {}]
  %s12 = sld [smem:[#allocation0]]
  $region58: #{abcnn3_forward.1} parent=0
    _
  %s14 = ssub.s32 1, %s12
  %s15 = scalar_select 0, %s14, %s12
  %v16 = vstv %s7
  %17 = vst [vmem:[#allocation3] sm:$0x1] %v16
  $region1: #{abcnn3_forward.1} parent=0
    #allocation4 [shape = 'u8[32768]{0}', space=vmem, size = 0x8000, scoped, tag = 'input window, operand 9, single buffered']
    #allocation5 [shape = 's32[1]{0}', space=sflag, size = 0x4, scoped, tag = 'scoped memory for abcnn3_forward.1']
    %18 = vsyncpa [#allocation5], 0
    // Predicated region
    $region2: #{abcnn3_forward.1} parent=1 // pred_check
      _
    $region3: #{abcnn3_forward.1} parent=1 // pred_check_branch
      %20 = sbr.rel (0) target = $region5
    $region4: #{abcnn3_forward.1} parent=1 // pred_region
      _
    $region5: #{abcnn3_forward.1} parent=1 // pred_fallthru
      _
    // Predicated region
    $region6: #{abcnn3_forward.1} parent=1 // pred_check
      _
    $region7: #{abcnn3_forward.1} parent=1 // pred_check_branch
      %22 = sbr.rel (0) target = $region9
    $region8: #{abcnn3_forward.1} parent=1 // pred_region
      _
    $region9: #{abcnn3_forward.1} parent=1 // pred_fallthru
      _
    // Predicated region
    $region10: #{abcnn3_forward.1} parent=1 // pred_check
      _
    $region11: #{abcnn3_forward.1} parent=1 // pred_check_branch
      %24 = sbr.rel (0) target = $region13
    $region12: #{abcnn3_forward.1} parent=1 // pred_region
      _
    $region13: #{abcnn3_forward.1} parent=1 // pred_fallthru
      _
    // Predicated region
    $region14: #{abcnn3_forward.1} parent=1 // pred_check
      _
    $region15: #{abcnn3_forward.1} parent=1 // pred_check_branch
      %26 = sbr.rel (0) target = $region17
    $region16: #{abcnn3_forward.1} parent=1 // pred_region
      _
    $region17: #{abcnn3_forward.1} parent=1 // pred_fallthru
      _
    // Predicated region
    $region18: #{abcnn3_forward.1} parent=1 // pred_check
      _
    $region19: #{abcnn3_forward.1} parent=1 // pred_check_branch
      %28 = sbr.rel (0) target = $region21
    $region20: #{abcnn3_forward.1} parent=1 // pred_region
      _
    $region21: #{abcnn3_forward.1} parent=1 // pred_fallthru
      _
    // Predicated region
    $region22: #{abcnn3_forward.1} parent=1 // pred_check
      _
    $region23: #{abcnn3_forward.1} parent=1 // pred_check_branch
      %30 = sbr.rel (0) target = $region25
    $region24: #{abcnn3_forward.1} parent=1 // pred_region
      _
    $region25: #{abcnn3_forward.1} parent=1 // pred_fallthru
      _
    // Predicated region
    $region26: #{abcnn3_forward.1} parent=1 // pred_check
      _
    $region27: #{abcnn3_forward.1} parent=1 // pred_check_branch
      %32 = sbr.rel (0) target = $region29
    $region28: #{abcnn3_forward.1} parent=1 // pred_region
      _
    $region29: #{abcnn3_forward.1} parent=1 // pred_fallthru
      _
    // Predicated region
    $region30: #{abcnn3_forward.1} parent=1 // pred_check
      _
    $region31: #{abcnn3_forward.1} parent=1 // pred_check_branch
      %34 = sbr.rel (0) target = $region33
    $region32: #{abcnn3_forward.1} parent=1 // pred_region
      _
    $region33: #{abcnn3_forward.1} parent=1 // pred_fallthru
      _
    // Predicated region
    $region34: #{abcnn3_forward.1} parent=1 // pred_check
      _
    $region35: #{abcnn3_forward.1} parent=1 // pred_check_branch
      %36 = sbr.rel (0) target = $region37
    $region36: #{abcnn3_forward.1} parent=1 // pred_region
      _
    $region37: #{abcnn3_forward.1} parent=1 // pred_fallthru
      _
    // Predicated region
    $region38: #{abcnn3_forward.1} parent=1 // pred_check
      _
    $region39: #{abcnn3_forward.1} parent=1 // pred_check_branch
      %38 = sbr.rel (0) target = $region41
    $region40: #{abcnn3_forward.1} parent=1 // pred_region
      %s40 = ssub.s32 1024, 1024
      %41 = vsyncadd [#allocation5], %s40
      %s42 = sshll.u32 [#allocation4], 4
      %s43 = int_to_ptr.vmem [resolvable:$true] %s42
      %48 = dma.hbm_to_vmem [thread:$0]  %s9, 1024, %s43, [#allocation5], 64, 64, 4
    $region41: #{abcnn3_forward.1} parent=1 // pred_fallthru
      _
    // Predicated region
    $region42: #{abcnn3_forward.1} parent=1 // pred_check
      _
    $region43: #{abcnn3_forward.1} parent=1 // pred_check_branch
      %50 = sbr.rel (0) target = $region45
    $region44: #{abcnn3_forward.1} parent=1 // pred_region
      _
    $region45: #{abcnn3_forward.1} parent=1 // pred_fallthru
      _
    // Predicated region
    $region46: #{abcnn3_forward.1} parent=1 // pred_check
      _
    $region47: #{abcnn3_forward.1} parent=1 // pred_check_branch
      %52 = sbr.rel (0) target = $region49
    $region48: #{abcnn3_forward.1} parent=1 // pred_region
      %53 = dma.done [#allocation5], 1024
    $region49: #{abcnn3_forward.1} parent=1 // pred_fallthru
      _
    %v55 = vld [vmem:[%s0] sm:$0xf]
    %v56 = vld [vmem:[%s0 + $0x4] sm:$0xf]
    %v57 = vld [vmem:[%s0 + $0x8] sm:$0xf]
    %v58 = vld [vmem:[%s0 + $0xc] sm:$0xf]
    %v59 = vld [vmem:[%s0 + $0x10] sm:$0xf]
    %v60 = vld [vmem:[%s0 + $0x14] sm:$0xf]
    %v61 = vld [vmem:[%s0 + $0x18] sm:$0xf]
    %v62 = vld [vmem:[%s0 + $0x1c] sm:$0xf]
    %v63 = vld [vmem:[%s1] sm:$0xff]
    %v64 = vld [vmem:[%s1 + $0x8] sm:$0xff]
    %v65 = vld [vmem:[%s1 + $0x10] sm:$0xff]
    %v66 = vld [vmem:[%s1 + $0x18] sm:$0xff]
    %v67 = vld [vmem:[%s1 + $0x20] sm:$0xff]
    %v68 = vld [vmem:[%s1 + $0x28] sm:$0xff]
    %v69 = vld [vmem:[%s1 + $0x30] sm:$0xff]
    %v70 = vld [vmem:[%s1 + $0x38] sm:$0xff]
    %v71 = vld [vmem:[%s1 + $0x40] sm:$0xff]
    %v72 = vld [vmem:[%s1 + $0x48] sm:$0xff]
    %v73 = vld [vmem:[%s1 + $0x50] sm:$0xff]
    %v74 = vld [vmem:[%s1 + $0x58] sm:$0xff]
    %v75 = vld [vmem:[%s4] sm:$0x3f]
    %v77 = vlaneseq
    %v78 = vshrl.u32 %v77, 7
    %v79 = vsub.s32 0, %v78
    %v80 = vrot.slane %v75, %v79
    %v81 = vlaneseq
    %v82 = vshrl.u32 %v81, 7
    %v83 = vsub.s32 1, %v82
    %v84 = vrot.slane %v75, %v83
    %v85 = vlaneseq
    %v86 = vshrl.u32 %v85, 7
    %v87 = vsub.s32 2, %v86
    %v88 = vrot.slane %v75, %v87
    %v89 = vlaneseq
    %v90 = vshrl.u32 %v89, 7
    %v91 = vsub.s32 3, %v90
    %v92 = vrot.slane %v75, %v91
    %v93 = vlaneseq
    %v94 = vshrl.u32 %v93, 7
    %v95 = vsub.s32 4, %v94
    %v96 = vrot.slane %v75, %v95
    %v97 = vlaneseq
    %v98 = vshrl.u32 %v97, 7
    %v99 = vsub.s32 5, %v98
    %v100 = vrot.slane %v75, %v99
    %v115 = vunpack.c.l.b16 %v55
    %v116 = vunpack.c.l.b16 %v56
    %v117 = vunpack.c.l.b16 %v57
    %v118 = vunpack.c.l.b16 %v58
    %v119 = vunpack.c.l.b16 %v59
    %v120 = vunpack.c.l.b16 %v60
    %v121 = vunpack.c.l.b16 %v61
    %v122 = vunpack.c.l.b16 %v62
    %v123 = vpack.c.b16 %v116, %v115
    %v124 = vpack.c.b16 %v118, %v117
    %v125 = vpack.c.b16 %v120, %v119
    %v126 = vpack.c.b16 %v122, %v121
    %v139 = vunpack.c.l.b16 %v63
    %v140 = vunpack.c.h.b16 %v63
    %v141 = vunpack.c.l.b16 %v64
    %v142 = vunpack.c.h.b16 %v64
    %v143 = vunpack.c.l.b16 %v65
    %v144 = vunpack.c.h.b16 %v65
    %v145 = vunpack.c.l.b16 %v66
    %v146 = vunpack.c.h.b16 %v66
    %v147 = vunpack.c.l.b16 %v67
    %v148 = vunpack.c.h.b16 %v67
    %v149 = vunpack.c.l.b16 %v68
    %v150 = vunpack.c.h.b16 %v68
    %v151 = vunpack.c.l.b16 %v69
    %v152 = vunpack.c.h.b16 %v69
    %v153 = vunpack.c.l.b16 %v70
    %v154 = vunpack.c.h.b16 %v70
    %v155 = vunpack.c.l.b16 %v71
    %v156 = vunpack.c.h.b16 %v71
    %v157 = vunpack.c.l.b16 %v72
    %v158 = vunpack.c.h.b16 %v72
    %v159 = vunpack.c.l.b16 %v73
    %v160 = vunpack.c.h.b16 %v73
    %v161 = vunpack.c.l.b16 %v74
    %v162 = vunpack.c.h.b16 %v74
    %v163 = vpack.c.b16 %v145, %v139
    %v164 = vpack.c.b16 %v146, %v140
    %v165 = vpack.c.b16 %v147, %v141
    %v166 = vpack.c.b16 %v148, %v142
    %v167 = vpack.c.b16 %v149, %v143
    %v168 = vpack.c.b16 %v150, %v144
    %v169 = vpack.c.b16 %v157, %v151
    %v170 = vpack.c.b16 %v158, %v152
    %v171 = vpack.c.b16 %v159, %v153
    %v172 = vpack.c.b16 %v160, %v154
    %v173 = vpack.c.b16 %v161, %v155
    %v174 = vpack.c.b16 %v162, %v156
    %vm187 = vcmask 261120
    %v189 = vsel %vm187, %v123, 0
    %v192 = vsel %vm187, %v124, 0
    %v195 = vsel %vm187, %v125, 0
    %v198 = vsel %vm187, %v126, 0
    %200 = vmatprep.subr.bf16.mxu0 0
    %201 = vmatpush1.bf16.msra.mxu0 0
    %202 = vmatprep.subr.bf16.mxu0 0
    %203 = vmatpush1.bf16.msra.mxu0 0
    %204 = vmatprep.subr.bf16.mxu0 0
    %205 = vmatpush1.bf16.msra.mxu0 0
    %206 = vmatprep.subr.bf16.mxu0 0
    %207 = vmatpush1.bf16.msra.mxu0 0
    %208 = vmatprep.subr.bf16.mxu0 0
    %209 = vmatpush1.bf16.msra.mxu0 0
    %210 = vmatprep.subr.bf16.mxu0 0
    %211 = vmatpush1.bf16.msra.mxu0 0
    %212 = vmatprep.subr.bf16.mxu0 %v170
    %213 = vmatpush1.bf16.msra.mxu0 %v169
    %214 = vmatprep.subr.bf16.mxu0 %v164
    %215 = vmatpush1.bf16.msra.mxu0 %v163
    %216 = vmatprep.subr.bf16.mxu0 0
    %217 = vmatpush2.bf16.msra.mxu0 0
    %218 = vmatprep.subr.bf16.mxu0 0
    %219 = vmatpush2.bf16.msra.mxu0 0
    %220 = vmatprep.subr.bf16.mxu0 0
    %221 = vmatpush2.bf16.msra.mxu0 0
    %222 = vmatprep.subr.bf16.mxu0 0
    %223 = vmatpush2.bf16.msra.mxu0 0
    %224 = vmatprep.subr.bf16.mxu0 0
    %225 = vmatpush2.bf16.msra.mxu0 0
    %226 = vmatprep.subr.bf16.mxu0 0
    %227 = vmatpush2.bf16.msra.mxu0 0
    %228 = vmatprep.subr.bf16.mxu0 0
    %229 = vmatpush2.bf16.msra.mxu0 0
    %230 = vmatprep.subr.bf16.mxu0 0
    %231 = vmatpush2.bf16.msra.mxu0 0
    %232 = vmatprep.mubr.bf16.mxu0 0
    %233 = vmatmul.mubr.bf16.gmra.mxu0 %v189
    %v234 = vpop.f32.mrf.mxu0
    %v235 = vadd.f32 %v80, %v234
    %v236 = vpop.f32.mrf.mxu0
    %v237 = vadd.f32 %v84, %v236
    %v238 = vpop.f32.mrf.mxu0
    %v239 = vadd.f32 %v80, %v238
    %v240 = vpop.f32.mrf.mxu0
    %v241 = vadd.f32 %v84, %v240
    %242 = vmatprep.mubr.bf16.mxu0 0
    %243 = vmatmul.mubr.bf16.gmra.mxu0 %v192
    %v244 = vpop.f32.mrf.mxu0
    %v245 = vadd.f32 %v80, %v244
    %v246 = vpop.f32.mrf.mxu0
    %v247 = vadd.f32 %v84, %v246
    %v248 = vpop.f32.mrf.mxu0
    %v249 = vadd.f32 %v80, %v248
    %v250 = vpop.f32.mrf.mxu0
    %v251 = vadd.f32 %v84, %v250
    %252 = vmatprep.mubr.bf16.mxu0 0
    %253 = vmatmul.mubr.bf16.gmra.mxu0 %v195
    %v254 = vpop.f32.mrf.mxu0
    %v255 = vadd.f32 %v80, %v254
    %v256 = vpop.f32.mrf.mxu0
    %v257 = vadd.f32 %v84, %v256
    %v258 = vpop.f32.mrf.mxu0
    %v259 = vadd.f32 %v80, %v258
    %v260 = vpop.f32.mrf.mxu0
    %v261 = vadd.f32 %v84, %v260
    %262 = vmatprep.mubr.bf16.mxu0 0
    %263 = vmatmul.mubr.bf16.gmra.mxu0 %v198
    %v264 = vpop.f32.mrf.mxu0
    %v265 = vadd.f32 %v80, %v264
    %v266 = vpop.f32.mrf.mxu0
    %v267 = vadd.f32 %v84, %v266
    %v268 = vpop.f32.mrf.mxu0
    %v269 = vadd.f32 %v80, %v268
    %v270 = vpop.f32.mrf.mxu0
    %v271 = vadd.f32 %v84, %v270
    %272 = vdwg.mxu0
    %273 = vmatprep.subr.bf16.mxu0 0
    %274 = vmatpush1.bf16.msra.mxu0 0
    %275 = vmatprep.subr.bf16.mxu0 0
    %276 = vmatpush1.bf16.msra.mxu0 0
    %277 = vmatprep.subr.bf16.mxu0 0
    %278 = vmatpush1.bf16.msra.mxu0 0
    %279 = vmatprep.subr.bf16.mxu0 0
    %280 = vmatpush1.bf16.msra.mxu0 0
    %281 = vmatprep.subr.bf16.mxu0 0
    %282 = vmatpush1.bf16.msra.mxu0 0
    %283 = vmatprep.subr.bf16.mxu0 0
    %284 = vmatpush1.bf16.msra.mxu0 0
    %285 = vmatprep.subr.bf16.mxu0 %v172
    %286 = vmatpush1.bf16.msra.mxu0 %v171
    %287 = vmatprep.subr.bf16.mxu0 %v166
    %288 = vmatpush1.bf16.msra.mxu0 %v165
    %289 = vmatprep.subr.bf16.mxu0 0
    %290 = vmatpush2.bf16.msra.mxu0 0
    %291 = vmatprep.subr.bf16.mxu0 0
    %292 = vmatpush2.bf16.msra.mxu0 0
    %293 = vmatprep.subr.bf16.mxu0 0
    %294 = vmatpush2.bf16.msra.mxu0 0
    %295 = vmatprep.subr.bf16.mxu0 0
    %296 = vmatpush2.bf16.msra.mxu0 0
    %297 = vmatprep.subr.bf16.mxu0 0
    %298 = vmatpush2.bf16.msra.mxu0 0
    %299 = vmatprep.subr.bf16.mxu0 0
    %300 = vmatpush2.bf16.msra.mxu0 0
    %301 = vmatprep.subr.bf16.mxu0 0
    %302 = vmatpush2.bf16.msra.mxu0 0
    %303 = vmatprep.subr.bf16.mxu0 0
    %304 = vmatpush2.bf16.msra.mxu0 0
    %305 = vmatprep.mubr.bf16.mxu0 0
    %306 = vmatmul.mubr.bf16.gmra.mxu0 %v189
    %v307 = vpop.f32.mrf.mxu0
    %v308 = vadd.f32 %v88, %v307
    %v309 = vpop.f32.mrf.mxu0
    %v310 = vadd.f32 %v92, %v309
    %v311 = vpop.f32.mrf.mxu0
    %v312 = vadd.f32 %v88, %v311
    %v313 = vpop.f32.mrf.mxu0
    %v314 = vadd.f32 %v92, %v313
    %315 = vmatprep.mubr.bf16.mxu0 0
    %316 = vmatmul.mubr.bf16.gmra.mxu0 %v192
    %v317 = vpop.f32.mrf.mxu0
    %v318 = vadd.f32 %v88, %v317
    %v319 = vpop.f32.mrf.mxu0
    %v320 = vadd.f32 %v92, %v319
    %v321 = vpop.f32.mrf.mxu0
    %v322 = vadd.f32 %v88, %v321
    %v323 = vpop.f32.mrf.mxu0
    %v324 = vadd.f32 %v92, %v323
    %325 = vmatprep.mubr.bf16.mxu0 0
    %326 = vmatmul.mubr.bf16.gmra.mxu0 %v195
    %v327 = vpop.f32.mrf.mxu0
    %v328 = vadd.f32 %v88, %v327
    %v329 = vpop.f32.mrf.mxu0
    %v330 = vadd.f32 %v92, %v329
    %v331 = vpop.f32.mrf.mxu0
    %v332 = vadd.f32 %v88, %v331
    %v333 = vpop.f32.mrf.mxu0
    %v334 = vadd.f32 %v92, %v333
    %335 = vmatprep.mubr.bf16.mxu0 0
    %336 = vmatmul.mubr.bf16.gmra.mxu0 %v198
    %v337 = vpop.f32.mrf.mxu0
    %v338 = vadd.f32 %v88, %v337
    %v339 = vpop.f32.mrf.mxu0
    %v340 = vadd.f32 %v92, %v339
    %v341 = vpop.f32.mrf.mxu0
    %v342 = vadd.f32 %v88, %v341
    %v343 = vpop.f32.mrf.mxu0
    %v344 = vadd.f32 %v92, %v343
    %345 = vdwg.mxu0
    %346 = vmatprep.subr.bf16.mxu0 0
    %347 = vmatpush1.bf16.msra.mxu0 0
    %348 = vmatprep.subr.bf16.mxu0 0
    %349 = vmatpush1.bf16.msra.mxu0 0
    %350 = vmatprep.subr.bf16.mxu0 0
    %351 = vmatpush1.bf16.msra.mxu0 0
    %352 = vmatprep.subr.bf16.mxu0 0
    %353 = vmatpush1.bf16.msra.mxu0 0
    %354 = vmatprep.subr.bf16.mxu0 0
    %355 = vmatpush1.bf16.msra.mxu0 0
    %356 = vmatprep.subr.bf16.mxu0 0
    %357 = vmatpush1.bf16.msra.mxu0 0
    %358 = vmatprep.subr.bf16.mxu0 %v174
    %359 = vmatpush1.bf16.msra.mxu0 %v173
    %360 = vmatprep.subr.bf16.mxu0 %v168
    %361 = vmatpush1.bf16.msra.mxu0 %v167
    %362 = vmatprep.subr.bf16.mxu0 0
    %363 = vmatpush2.bf16.msra.mxu0 0
    %364 = vmatprep.subr.bf16.mxu0 0
    %365 = vmatpush2.bf16.msra.mxu0 0
    %366 = vmatprep.subr.bf16.mxu0 0
    %367 = vmatpush2.bf16.msra.mxu0 0
    %368 = vmatprep.subr.bf16.mxu0 0
    %369 = vmatpush2.bf16.msra.mxu0 0
    %370 = vmatprep.subr.bf16.mxu0 0
    %371 = vmatpush2.bf16.msra.mxu0 0
    %372 = vmatprep.subr.bf16.mxu0 0
    %373 = vmatpush2.bf16.msra.mxu0 0
    %374 = vmatprep.subr.bf16.mxu0 0
    %375 = vmatpush2.bf16.msra.mxu0 0
    %376 = vmatprep.subr.bf16.mxu0 0
    %377 = vmatpush2.bf16.msra.mxu0 0
    %378 = vmatprep.mubr.bf16.mxu0 0
    %379 = vmatmul.mubr.bf16.gmra.mxu0 %v189
    %v380 = vpop.f32.mrf.mxu0
    %v381 = vadd.f32 %v96, %v380
    %v382 = vpop.f32.mrf.mxu0
    %v383 = vadd.f32 %v100, %v382
    %v384 = vpop.f32.mrf.mxu0
    %v385 = vadd.f32 %v96, %v384
    %v386 = vpop.f32.mrf.mxu0
    %v387 = vadd.f32 %v100, %v386
    %388 = vmatprep.mubr.bf16.mxu0 0
    %389 = vmatmul.mubr.bf16.gmra.mxu0 %v192
    %v390 = vpop.f32.mrf.mxu0
    %v391 = vadd.f32 %v96, %v390
    %v392 = vpop.f32.mrf.mxu0
    %v393 = vadd.f32 %v100, %v392
    %v394 = vpop.f32.mrf.mxu0
    %v395 = vadd.f32 %v96, %v394
    %v396 = vpop.f32.mrf.mxu0
    %v397 = vadd.f32 %v100, %v396
    %398 = vmatprep.mubr.bf16.mxu0 0
    %399 = vmatmul.mubr.bf16.gmra.mxu0 %v195
    %v400 = vpop.f32.mrf.mxu0
    %v401 = vadd.f32 %v96, %v400
    %v402 = vpop.f32.mrf.mxu0
    %v403 = vadd.f32 %v100, %v402
    %v404 = vpop.f32.mrf.mxu0
    %v405 = vadd.f32 %v96, %v404
    %v406 = vpop.f32.mrf.mxu0
    %v407 = vadd.f32 %v100, %v406
    %408 = vmatprep.mubr.bf16.mxu0 0
    %409 = vmatmul.mubr.bf16.gmra.mxu0 %v198
    %v410 = vpop.f32.mrf.mxu0
    %v411 = vadd.f32 %v96, %v410
    %v412 = vpop.f32.mrf.mxu0
    %v413 = vadd.f32 %v100, %v412
    %v414 = vpop.f32.mrf.mxu0
    %v415 = vadd.f32 %v96, %v414
    %v416 = vpop.f32.mrf.mxu0
    %v417 = vadd.f32 %v100, %v416
    %418 = vdwg.mxu0
    %419 = vst [vmem:[#allocation2] sm:$0xff] %v235
    %420 = vst [vmem:[#allocation2 + $0x8] sm:$0xff] %v237
    %421 = vst [vmem:[#allocation2 + $0x10] sm:$0xff] %v308
    %422 = vst [vmem:[#allocation2 + $0x18] sm:$0xff] %v310
    %423 = vst [vmem:[#allocation2 + $0x20] sm:$0xff] %v381
    %424 = vst [vmem:[#allocation2 + $0x28] sm:$0xff] %v383
    %425 = vst [vmem:[#allocation2 + $0x30] sm:$0xff] %v239
    %426 = vst [vmem:[#allocation2 + $0x38] sm:$0xff] %v241
    %427 = vst [vmem:[#allocation2 + $0x40] sm:$0xff] %v312
    %428 = vst [vmem:[#allocation2 + $0x48] sm:$0xff] %v314
    %429 = vst [vmem:[#allocation2 + $0x50] sm:$0xff] %v385
    %430 = vst [vmem:[#allocation2 + $0x58] sm:$0xff] %v387
    %431 = vst [vmem:[#allocation2 + $0x60] sm:$0xff] %v245
    %432 = vst [vmem:[#allocation2 + $0x68] sm:$0xff] %v247
    %433 = vst [vmem:[#allocation2 + $0x70] sm:$0xff] %v318
    %434 = vst [vmem:[#allocation2 + $0x78] sm:$0xff] %v320
    %435 = vst [vmem:[#allocation2 + $0x80] sm:$0xff] %v391
    %436 = vst [vmem:[#allocation2 + $0x88] sm:$0xff] %v393
    %437 = vst [vmem:[#allocation2 + $0x90] sm:$0xff] %v249
    %438 = vst [vmem:[#allocation2 + $0x98] sm:$0xff] %v251
    %439 = vst [vmem:[#allocation2 + $0xa0] sm:$0xff] %v322
    %440 = vst [vmem:[#allocation2 + $0xa8] sm:$0xff] %v324
    %441 = vst [vmem:[#allocation2 + $0xb0] sm:$0xff] %v395
    %442 = vst [vmem:[#allocation2 + $0xb8] sm:$0xff] %v397
    %443 = vst [vmem:[#allocation2 + $0xc0] sm:$0xff] %v255
    %444 = vst [vmem:[#allocation2 + $0xc8] sm:$0xff] %v257
    %445 = vst [vmem:[#allocation2 + $0xd0] sm:$0xff] %v328
    %446 = vst [vmem:[#allocation2 + $0xd8] sm:$0xff] %v330
    %447 = vst [vmem:[#allocation2 + $0xe0] sm:$0xff] %v401
    %448 = vst [vmem:[#allocation2 + $0xe8] sm:$0xff] %v403
    %449 = vst [vmem:[#allocation2 + $0xf0] sm:$0xff] %v259
    %450 = vst [vmem:[#allocation2 + $0xf8] sm:$0xff] %v261
    %451 = vst [vmem:[#allocation2 + $0x100] sm:$0xff] %v332
    %452 = vst [vmem:[#allocation2 + $0x108] sm:$0xff] %v334
    %453 = vst [vmem:[#allocation2 + $0x110] sm:$0xff] %v405
    %454 = vst [vmem:[#allocation2 + $0x118] sm:$0xff] %v407
    %455 = vst [vmem:[#allocation2 + $0x120] sm:$0xff] %v265
    %456 = vst [vmem:[#allocation2 + $0x128] sm:$0xff] %v267
    %457 = vst [vmem:[#allocation2 + $0x130] sm:$0xff] %v338
    %458 = vst [vmem:[#allocation2 + $0x138] sm:$0xff] %v340
    %459 = vst [vmem:[#allocation2 + $0x140] sm:$0xff] %v411
    %460 = vst [vmem:[#allocation2 + $0x148] sm:$0xff] %v413
    %461 = vst [vmem:[#allocation2 + $0x150] sm:$0xff] %v269
    %462 = vst [vmem:[#allocation2 + $0x158] sm:$0xff] %v271
    %463 = vst [vmem:[#allocation2 + $0x160] sm:$0xff] %v342
    %464 = vst [vmem:[#allocation2 + $0x168] sm:$0xff] %v344
    %465 = vst [vmem:[#allocation2 + $0x170] sm:$0xff] %v415
    %466 = vst [vmem:[#allocation2 + $0x178] sm:$0xff] %v417
    %v467 = vld [vmem:[%s2] sm:$0xff]
    %v468 = vld [vmem:[%s2 + $0x8] sm:$0xf]
    %v469 = vld [vmem:[%s2 + $0xc] sm:$0xff]
    %v470 = vld [vmem:[%s2 + $0x14] sm:$0xf]
    %v471 = vld [vmem:[%s2 + $0x18] sm:$0xff]
    %v472 = vld [vmem:[%s2 + $0x20] sm:$0xf]
    %v473 = vld [vmem:[%s2 + $0x24] sm:$0xff]
    %v474 = vld [vmem:[%s2 + $0x2c] sm:$0xf]
    %v475 = vld [vmem:[%s2 + $0x30] sm:$0xff]
    %v476 = vld [vmem:[%s2 + $0x38] sm:$0xf]
    %v477 = vld [vmem:[%s2 + $0x3c] sm:$0xff]
    %v478 = vld [vmem:[%s2 + $0x44] sm:$0xf]
    %v479 = vld [vmem:[%s2 + $0x48] sm:$0xff]
    %v480 = vld [vmem:[%s2 + $0x50] sm:$0xf]
    %v481 = vld [vmem:[%s2 + $0x54] sm:$0xff]
    %v482 = vld [vmem:[%s2 + $0x5c] sm:$0xf]
    %v483 = vld [vmem:[%s2 + $0x60] sm:$0xff]
    %v484 = vld [vmem:[%s2 + $0x68] sm:$0xf]
    %v485 = vld [vmem:[%s2 + $0x6c] sm:$0xff]
    %v486 = vld [vmem:[%s2 + $0x74] sm:$0xf]
    %v487 = vld [vmem:[%s2 + $0x78] sm:$0xff]
    %v488 = vld [vmem:[%s2 + $0x80] sm:$0xf]
    %v489 = vld [vmem:[%s2 + $0x84] sm:$0xff]
    %v490 = vld [vmem:[%s2 + $0x8c] sm:$0xf]
    %v491 = vld [vmem:[%s2 + $0x90] sm:$0xff]
    %v492 = vld [vmem:[%s2 + $0x98] sm:$0xf]
    %v493 = vld [vmem:[%s2 + $0x9c] sm:$0xff]
    %v494 = vld [vmem:[%s2 + $0xa4] sm:$0xf]
    %v495 = vld [vmem:[%s2 + $0xa8] sm:$0xff]
    %v496 = vld [vmem:[%s2 + $0xb0] sm:$0xf]
    %v497 = vld [vmem:[%s2 + $0xb4] sm:$0xff]
    %v498 = vld [vmem:[%s2 + $0xbc] sm:$0xf]
    %v499 = vld [vmem:[%s3] sm:$0xff]
    %v500 = vld [vmem:[%s3 + $0x8] sm:$0xf]
    %v501 = vld [vmem:[%s3 + $0xc] sm:$0xff]
    %v502 = vld [vmem:[%s3 + $0x14] sm:$0xf]
    %v503 = vld [vmem:[%s3 + $0x18] sm:$0xff]
    %v504 = vld [vmem:[%s3 + $0x20] sm:$0xf]
    %v505 = vld [vmem:[%s3 + $0x24] sm:$0xff]
    %v506 = vld [vmem:[%s3 + $0x2c] sm:$0xf]
    %v507 = vld [vmem:[%s3 + $0x30] sm:$0xff]
    %v508 = vld [vmem:[%s3 + $0x38] sm:$0xf]
    %v509 = vld [vmem:[%s3 + $0x3c] sm:$0xff]
    %v510 = vld [vmem:[%s3 + $0x44] sm:$0xf]
    %v511 = vld [vmem:[%s3 + $0x48] sm:$0xff]
    %v512 = vld [vmem:[%s3 + $0x50] sm:$0xf]
    %v513 = vld [vmem:[%s3 + $0x54] sm:$0xff]
    %v514 = vld [vmem:[%s3 + $0x5c] sm:$0xf]
    %v515 = vld [vmem:[%s3 + $0x60] sm:$0xff]
    %v516 = vld [vmem:[%s3 + $0x68] sm:$0xf]
    %v517 = vld [vmem:[%s3 + $0x6c] sm:$0xff]
    %v518 = vld [vmem:[%s3 + $0x74] sm:$0xf]
    %v519 = vld [vmem:[%s3 + $0x78] sm:$0xff]
    %v520 = vld [vmem:[%s3 + $0x80] sm:$0xf]
    %v521 = vld [vmem:[%s3 + $0x84] sm:$0xff]
    %v522 = vld [vmem:[%s3 + $0x8c] sm:$0xf]
    %v523 = vld [vmem:[%s3 + $0x90] sm:$0xff]
    %v524 = vld [vmem:[%s3 + $0x98] sm:$0xf]
    %v525 = vld [vmem:[%s3 + $0x9c] sm:$0xff]
    %v526 = vld [vmem:[%s3 + $0xa4] sm:$0xf]
    %v527 = vld [vmem:[%s3 + $0xa8] sm:$0xff]
    %v528 = vld [vmem:[%s3 + $0xb0] sm:$0xf]
    %v529 = vld [vmem:[%s3 + $0xb4] sm:$0xff]
    %v530 = vld [vmem:[%s3 + $0xbc] sm:$0xf]
    %v531 = vld [vmem:[%s5] sm:$0x1]
    %v533 = vlaneseq
    %v534 = vshrl.u32 %v533, 7
    %v535 = vsub.s32 0, %v534
    %v536 = vrot.slane %v531, %v535
    %v538 = vld [vmem:[%s5 + $0x1] sm:$0x1]
    %v540 = vlaneseq
    %v541 = vshrl.u32 %v540, 7
    %v542 = vsub.s32 0, %v541
    %v543 = vrot.slane %v538, %v542
    %v545 = vld [vmem:[#allocation2] sm:$0xff]
    %v546 = vld [vmem:[#allocation2 + $0x8] sm:$0xff]
    %v547 = vld [vmem:[#allocation2 + $0x10] sm:$0xff]
    %v548 = vld [vmem:[#allocation2 + $0x168] sm:$0xff]
    %v549 = vld [vmem:[#allocation2 + $0x170] sm:$0xff]
    %v550 = vld [vmem:[#allocation2 + $0x178] sm:$0xff]
    %v583 = vunpack.c.l.b16 %v467
    %v584 = vunpack.c.h.b16 %v467
    %v585 = vunpack.c.l.b16 %v468
    %v586 = vunpack.c.l.b16 %v469
    %v587 = vunpack.c.h.b16 %v469
    %v588 = vunpack.c.l.b16 %v470
    %v589 = vunpack.c.l.b16 %v471
    %v590 = vunpack.c.h.b16 %v471
    %v591 = vunpack.c.l.b16 %v472
    %v592 = vunpack.c.l.b16 %v473
    %v593 = vunpack.c.h.b16 %v473
    %v594 = vunpack.c.l.b16 %v474
    %v595 = vunpack.c.l.b16 %v475
    %v596 = vunpack.c.h.b16 %v475
    %v597 = vunpack.c.l.b16 %v476
    %v598 = vunpack.c.l.b16 %v477
    %v599 = vunpack.c.h.b16 %v477
    %v600 = vunpack.c.l.b16 %v478
    %v601 = vunpack.c.l.b16 %v479
    %v602 = vunpack.c.h.b16 %v479
    %v603 = vunpack.c.l.b16 %v480
    %v604 = vunpack.c.l.b16 %v481
    %v605 = vunpack.c.h.b16 %v481
    %v606 = vunpack.c.l.b16 %v482
    %v607 = vunpack.c.l.b16 %v483
    %v608 = vunpack.c.h.b16 %v483
    %v609 = vunpack.c.l.b16 %v484
    %v610 = vunpack.c.l.b16 %v485
    %v611 = vunpack.c.h.b16 %v485
    %v612 = vunpack.c.l.b16 %v486
    %v613 = vunpack.c.l.b16 %v487
    %v614 = vunpack.c.h.b16 %v487
    %v615 = vunpack.c.l.b16 %v488
    %v616 = vunpack.c.l.b16 %v489
    %v617 = vunpack.c.h.b16 %v489
    %v618 = vunpack.c.l.b16 %v490
    %v619 = vunpack.c.l.b16 %v491
    %v620 = vunpack.c.h.b16 %v491
    %v621 = vunpack.c.l.b16 %v492
    %v622 = vunpack.c.l.b16 %v493
    %v623 = vunpack.c.h.b16 %v493
    %v624 = vunpack.c.l.b16 %v494
    %v625 = vunpack.c.l.b16 %v495
    %v626 = vunpack.c.h.b16 %v495
    %v627 = vunpack.c.l.b16 %v496
    %v628 = vunpack.c.l.b16 %v497
    %v629 = vunpack.c.h.b16 %v497
    %v630 = vunpack.c.l.b16 %v498
    %v631 = vpack.c.b16 %v586, %v583
    %v632 = vpack.c.b16 %v587, %v584
    %v633 = vpack.c.b16 %v588, %v585
    %v634 = vpack.c.b16 %v592, %v589
    %v635 = vpack.c.b16 %v593, %v590
    %v636 = vpack.c.b16 %v594, %v591
    %v637 = vpack.c.b16 %v598, %v595
    %v638 = vpack.c.b16 %v599, %v596
    %v639 = vpack.c.b16 %v600, %v597
    %v640 = vpack.c.b16 %v604, %v601
    %v641 = vpack.c.b16 %v605, %v602
    %v642 = vpack.c.b16 %v606, %v603
    %v643 = vpack.c.b16 %v610, %v607
    %v644 = vpack.c.b16 %v611, %v608
    %v645 = vpack.c.b16 %v612, %v609
    %v646 = vpack.c.b16 %v616, %v613
    %v647 = vpack.c.b16 %v617, %v614
    %v648 = vpack.c.b16 %v618, %v615
    %v649 = vpack.c.b16 %v622, %v619
    %v650 = vpack.c.b16 %v623, %v620
    %v651 = vpack.c.b16 %v624, %v621
    %v652 = vpack.c.b16 %v628, %v625
    %v653 = vpack.c.b16 %v629, %v626
    %v654 = vpack.c.b16 %v630, %v627
    %679 = vmatprep.subr.bf16.mxu0 %v653
    %680 = vmatpush1.bf16.msra.mxu0 %v652
    %681 = vmatprep.subr.bf16.mxu0 %v650
    %682 = vmatpush1.bf16.msra.mxu0 %v649
    %683 = vmatprep.subr.bf16.mxu0 %v647
    %684 = vmatpush1.bf16.msra.mxu0 %v646
    %685 = vmatprep.subr.bf16.mxu0 %v644
    %686 = vmatpush1.bf16.msra.mxu0 %v643
    %687 = vmatprep.subr.bf16.mxu0 %v641
    %688 = vmatpush1.bf16.msra.mxu0 %v640
    %689 = vmatprep.subr.bf16.mxu0 %v638
    %690 = vmatpush1.bf16.msra.mxu0 %v637
    %691 = vmatprep.subr.bf16.mxu0 %v635
    %692 = vmatpush1.bf16.msra.mxu0 %v634
    %693 = vmatprep.subr.bf16.mxu0 %v632
    %694 = vmatpush1.bf16.msra.mxu0 %v631
    %695 = vmatprep.subr.bf16.mxu0 0
    %696 = vmatpush2.bf16.msra.mxu0 0
    %697 = vmatprep.subr.bf16.mxu0 0
    %698 = vmatpush2.bf16.msra.mxu0 0
    %699 = vmatprep.subr.bf16.mxu0 0
    %700 = vmatpush2.bf16.msra.mxu0 0
    %701 = vmatprep.subr.bf16.mxu0 0
    %702 = vmatpush2.bf16.msra.mxu0 0
    %703 = vmatprep.subr.bf16.mxu0 0
    %704 = vmatpush2.bf16.msra.mxu0 0
    %705 = vmatprep.subr.bf16.mxu0 0
    %706 = vmatpush2.bf16.msra.mxu0 0
    %707 = vmatprep.subr.bf16.mxu0 0
    %708 = vmatpush2.bf16.msra.mxu0 0
    %709 = vmatprep.subr.bf16.mxu0 0
    %710 = vmatpush2.bf16.msra.mxu0 0
    %711 = vmatprep.mubr.bf16.mxu0 0
    %712 = vmatmul.mubr.bf16.gmra.mxu0 0
    %v713 = vpop.f32.mrf.mxu0
    %v714 = vadd.f32 0.0, %v713
    %v715 = vpop.f32.mrf.mxu0
    %v716 = vadd.f32 0.0, %v715
    %v717 = vpop.f32.mrf.mxu0
    %v718 = vpop.f32.mrf.mxu0
    %719 = vdwg.mxu0
    %720 = vmatprep.subr.bf16.mxu0 0
    %721 = vmatpush1.bf16.msra.mxu0 %v654
    %722 = vmatprep.subr.bf16.mxu0 0
    %723 = vmatpush1.bf16.msra.mxu0 %v651
    %724 = vmatprep.subr.bf16.mxu0 0
    %725 = vmatpush1.bf16.msra.mxu0 %v648
    %726 = vmatprep.subr.bf16.mxu0 0
    %727 = vmatpush1.bf16.msra.mxu0 %v645
    %728 = vmatprep.subr.bf16.mxu0 0
    %729 = vmatpush1.bf16.msra.mxu0 %v642
    %730 = vmatprep.subr.bf16.mxu0 0
    %731 = vmatpush1.bf16.msra.mxu0 %v639
    %732 = vmatprep.subr.bf16.mxu0 0
    %733 = vmatpush1.bf16.msra.mxu0 %v636
    %734 = vmatprep.subr.bf16.mxu0 0
    %735 = vmatpush1.bf16.msra.mxu0 %v633
    %736 = vmatprep.subr.bf16.mxu0 0
    %737 = vmatpush2.bf16.msra.mxu0 0
    %738 = vmatprep.subr.bf16.mxu0 0
    %739 = vmatpush2.bf16.msra.mxu0 0
    %740 = vmatprep.subr.bf16.mxu0 0
    %741 = vmatpush2.bf16.msra.mxu0 0
    %742 = vmatprep.subr.bf16.mxu0 0
    %743 = vmatpush2.bf16.msra.mxu0 0
    %744 = vmatprep.subr.bf16.mxu0 0
    %745 = vmatpush2.bf16.msra.mxu0 0
    %746 = vmatprep.subr.bf16.mxu0 0
    %747 = vmatpush2.bf16.msra.mxu0 0
    %748 = vmatprep.subr.bf16.mxu0 0
    %749 = vmatpush2.bf16.msra.mxu0 0
    %750 = vmatprep.subr.bf16.mxu0 0
    %751 = vmatpush2.bf16.msra.mxu0 0
    %752 = vmatprep.mubr.bf16.mxu0 0
    %753 = vmatmul.mubr.bf16.gmra.mxu0 0
    %v754 = vpop.f32.mrf.mxu0
    %v755 = vadd.f32 0.0, %v754
    %v756 = vpop.f32.mrf.mxu0
    %v757 = vpop.f32.mrf.mxu0
    %v758 = vpop.f32.mrf.mxu0
    %759 = vdwg.mxu0
    %v792 = vunpack.c.l.b16 %v499
    %v793 = vunpack.c.h.b16 %v499
    %v794 = vunpack.c.l.b16 %v500
    %v795 = vunpack.c.l.b16 %v501
    %v796 = vunpack.c.h.b16 %v501
    %v797 = vunpack.c.l.b16 %v502
    %v798 = vunpack.c.l.b16 %v503
    %v799 = vunpack.c.h.b16 %v503
    %v800 = vunpack.c.l.b16 %v504
    %v801 = vunpack.c.l.b16 %v505
    %v802 = vunpack.c.h.b16 %v505
    %v803 = vunpack.c.l.b16 %v506
    %v804 = vunpack.c.l.b16 %v507
    %v805 = vunpack.c.h.b16 %v507
    %v806 = vunpack.c.l.b16 %v508
    %v807 = vunpack.c.l.b16 %v509
    %v808 = vunpack.c.h.b16 %v509
    %v809 = vunpack.c.l.b16 %v510
    %v810 = vunpack.c.l.b16 %v511
    %v811 = vunpack.c.h.b16 %v511
    %v812 = vunpack.c.l.b16 %v512
    %v813 = vunpack.c.l.b16 %v513
    %v814 = vunpack.c.h.b16 %v513
    %v815 = vunpack.c.l.b16 %v514
    %v816 = vunpack.c.l.b16 %v515
    %v817 = vunpack.c.h.b16 %v515
    %v818 = vunpack.c.l.b16 %v516
    %v819 = vunpack.c.l.b16 %v517
    %v820 = vunpack.c.h.b16 %v517
    %v821 = vunpack.c.l.b16 %v518
    %v822 = vunpack.c.l.b16 %v519
    %v823 = vunpack.c.h.b16 %v519
    %v824 = vunpack.c.l.b16 %v520
    %v825 = vunpack.c.l.b16 %v521
    %v826 = vunpack.c.h.b16 %v521
    %v827 = vunpack.c.l.b16 %v522
    %v828 = vunpack.c.l.b16 %v523
    %v829 = vunpack.c.h.b16 %v523
    %v830 = vunpack.c.l.b16 %v524
    %v831 = vunpack.c.l.b16 %v525
    %v832 = vunpack.c.h.b16 %v525
    %v833 = vunpack.c.l.b16 %v526
    %v834 = vunpack.c.l.b16 %v527
    %v835 = vunpack.c.h.b16 %v527
    %v836 = vunpack.c.l.b16 %v528
    %v837 = vunpack.c.l.b16 %v529
    %v838 = vunpack.c.h.b16 %v529
    %v839 = vunpack.c.l.b16 %v530
    %v840 = vpack.c.b16 %v795, %v792
    %v841 = vpack.c.b16 %v796, %v793
    %v842 = vpack.c.b16 %v797, %v794
    %v843 = vpack.c.b16 %v801, %v798
    %v844 = vpack.c.b16 %v802, %v799
    %v845 = vpack.c.b16 %v803, %v800
    %v846 = vpack.c.b16 %v807, %v804
    %v847 = vpack.c.b16 %v808, %v805
    %v848 = vpack.c.b16 %v809, %v806
    %v849 = vpack.c.b16 %v813, %v810
    %v850 = vpack.c.b16 %v814, %v811
    %v851 = vpack.c.b16 %v815, %v812
    %v852 = vpack.c.b16 %v819, %v816
    %v853 = vpack.c.b16 %v820, %v817
    %v854 = vpack.c.b16 %v821, %v818
    %v855 = vpack.c.b16 %v825, %v822
    %v856 = vpack.c.b16 %v826, %v823
    %v857 = vpack.c.b16 %v827, %v824
    %v858 = vpack.c.b16 %v831, %v828
    %v859 = vpack.c.b16 %v832, %v829
    %v860 = vpack.c.b16 %v833, %v830
    %v861 = vpack.c.b16 %v837, %v834
    %v862 = vpack.c.b16 %v838, %v835
    %v863 = vpack.c.b16 %v839, %v836
    %888 = vmatprep.subr.bf16.mxu0 %v862
    %889 = vmatpush1.bf16.msra.mxu0 %v861
    %890 = vmatprep.subr.bf16.mxu0 %v859
    %891 = vmatpush1.bf16.msra.mxu0 %v858
    %892 = vmatprep.subr.bf16.mxu0 %v856
    %893 = vmatpush1.bf16.msra.mxu0 %v855
    %894 = vmatprep.subr.bf16.mxu0 %v853
    %895 = vmatpush1.bf16.msra.mxu0 %v852
    %896 = vmatprep.subr.bf16.mxu0 %v850
    %897 = vmatpush1.bf16.msra.mxu0 %v849
    %898 = vmatprep.subr.bf16.mxu0 %v847
    %899 = vmatpush1.bf16.msra.mxu0 %v846
    %900 = vmatprep.subr.bf16.mxu0 %v844
    %901 = vmatpush1.bf16.msra.mxu0 %v843
    %902 = vmatprep.subr.bf16.mxu0 %v841
    %903 = vmatpush1.bf16.msra.mxu0 %v840
    %904 = vmatprep.subr.bf16.mxu0 0
    %905 = vmatpush2.bf16.msra.mxu0 0
    %906 = vmatprep.subr.bf16.mxu0 0
    %907 = vmatpush2.bf16.msra.mxu0 0
    %908 = vmatprep.subr.bf16.mxu0 0
    %909 = vmatpush2.bf16.msra.mxu0 0
    %910 = vmatprep.subr.bf16.mxu0 0
    %911 = vmatpush2.bf16.msra.mxu0 0
    %912 = vmatprep.subr.bf16.mxu0 0
    %913 = vmatpush2.bf16.msra.mxu0 0
    %914 = vmatprep.subr.bf16.mxu0 0
    %915 = vmatpush2.bf16.msra.mxu0 0
    %916 = vmatprep.subr.bf16.mxu0 0
    %917 = vmatpush2.bf16.msra.mxu0 0
    %918 = vmatprep.subr.bf16.mxu0 0
    %919 = vmatpush2.bf16.msra.mxu0 0
    %920 = vmatprep.mubr.bf16.mxu0 0
    %921 = vmatmul.mubr.bf16.gmra.mxu0 0
    %v922 = vpop.f32.mrf.mxu0
    %v923 = vadd.f32 0.0, %v922
    %v924 = vpop.f32.mrf.mxu0
    %v925 = vadd.f32 0.0, %v924
    %v926 = vpop.f32.mrf.mxu0
    %v927 = vpop.f32.mrf.mxu0
    %928 = vdwg.mxu0
    %929 = vmatprep.subr.bf16.mxu0 0
    %930 = vmatpush1.bf16.msra.mxu0 %v863
    %931 = vmatprep.subr.bf16.mxu0 0
    %932 = vmatpush1.bf16.msra.mxu0 %v860
    %933 = vmatprep.subr.bf16.mxu0 0
    %934 = vmatpush1.bf16.msra.mxu0 %v857
    %935 = vmatprep.subr.bf16.mxu0 0
    %936 = vmatpush1.bf16.msra.mxu0 %v854
    %937 = vmatprep.subr.bf16.mxu0 0
    %938 = vmatpush1.bf16.msra.mxu0 %v851
    %939 = vmatprep.subr.bf16.mxu0 0
    %940 = vmatpush1.bf16.msra.mxu0 %v848
    %941 = vmatprep.subr.bf16.mxu0 0
    %942 = vmatpush1.bf16.msra.mxu0 %v845
    %943 = vmatprep.subr.bf16.mxu0 0
    %944 = vmatpush1.bf16.msra.mxu0 %v842
    %945 = vmatprep.subr.bf16.mxu0 0
    %946 = vmatpush2.bf16.msra.mxu0 0
    %947 = vmatprep.subr.bf16.mxu0 0
    %948 = vmatpush2.bf16.msra.mxu0 0
    %949 = vmatprep.subr.bf16.mxu0 0
    %950 = vmatpush2.bf16.msra.mxu0 0
    %951 = vmatprep.subr.bf16.mxu0 0
    %952 = vmatpush2.bf16.msra.mxu0 0
    %953 = vmatprep.subr.bf16.mxu0 0
    %954 = vmatpush2.bf16.msra.mxu0 0
    %955 = vmatprep.subr.bf16.mxu0 0
    %956 = vmatpush2.bf16.msra.mxu0 0
    %957 = vmatprep.subr.bf16.mxu0 0
    %958 = vmatpush2.bf16.msra.mxu0 0
    %959 = vmatprep.subr.bf16.mxu0 0
    %960 = vmatpush2.bf16.msra.mxu0 0
    %961 = vmatprep.mubr.bf16.mxu0 0
    %962 = vmatmul.mubr.bf16.gmra.mxu0 0
    %v963 = vpop.f32.mrf.mxu0
    %v964 = vadd.f32 0.0, %v963
    %v965 = vpop.f32.mrf.mxu0
    %v966 = vpop.f32.mrf.mxu0
    %v967 = vpop.f32.mrf.mxu0
    %968 = vdwg.mxu0
    %v969 = vadd.f32 %v545, %v714
    %v970 = vadd.f32 %v546, %v716
    %v971 = vxor.u32 %v969, 2147483648
    %v972 = vxor.u32 %v970, 2147483648
    %v973 = vmul.f32 %v971, 1.442695
    %v974 = vpow.pop %v973
    %v975 = vmul.f32 %v972, 1.442695
    %v976 = vpow.pop %v975
    %v977 = vadd.f32 %v974, 1.0
    %v978 = vadd.f32 %v976, 1.0
    %v979 = vrcp.pop %v977
    %v980 = vmul.f32 1.0, %v979
    %v981 = vrcp.pop %v978
    %v982 = vmul.f32 1.0, %v981
    %v983 = vadd.f32 %v755, %v536
    %v984 = vmul.f32 %v980, %v983
    %v985 = vadd.f32 %v547, %v984
    %v986 = vtanh.pop %v985
    %v987 = vsub.f32 1.0, %v982
    %v988 = vmul.f32 %v987, %v986
    %v989 = vmul.f32 %v982, 0.0
    %v990 = vadd.f32 %v988, %v989
    %v991 = vadd.f32 %v548, %v923
    %v992 = vadd.f32 %v549, %v925
    %v993 = vxor.u32 %v991, 2147483648
    %v994 = vxor.u32 %v992, 2147483648
    %v995 = vmul.f32 %v993, 1.442695
    %v996 = vpow.pop %v995
    %v997 = vmul.f32 %v994, 1.442695
    %v998 = vpow.pop %v997
    %v999 = vadd.f32 %v996, 1.0
    %v1000 = vadd.f32 %v998, 1.0
    %v1001 = vrcp.pop %v999
    %v1002 = vmul.f32 1.0, %v1001
    %v1003 = vrcp.pop %v1000
    %v1004 = vmul.f32 1.0, %v1003
    %v1005 = vadd.f32 %v964, %v543
    %v1006 = vmul.f32 %v1002, %v1005
    %v1007 = vadd.f32 %v550, %v1006
    %v1008 = vtanh.pop %v1007
    %v1009 = vsub.f32 1.0, %v1004
    %v1010 = vmul.f32 %v1009, %v1008
    %v1011 = vmul.f32 %v1004, 0.0
    %v1012 = vadd.f32 %v1010, %v1011
    %v1013 = vld [vmem:[#allocation2 + $0x30] sm:$0xff]
    %v1014 = vld [vmem:[#allocation2 + $0x38] sm:$0xff]
    %v1015 = vld [vmem:[#allocation2 + $0x40] sm:$0xff]
    %v1016 = vld [vmem:[#allocation2 + $0x138] sm:$0xff]
    %v1017 = vld [vmem:[#allocation2 + $0x140] sm:$0xff]
    %v1018 = vld [vmem:[#allocation2 + $0x148] sm:$0xff]
    %v1019 = vpack.c.bf16 %v990, %v990
    %1020 = vmatprep.subr.bf16.mxu0 %v653
    %1021 = vmatpush1.bf16.msra.mxu0 %v652
    %1022 = vmatprep.subr.bf16.mxu0 %v650
    %1023 = vmatpush1.bf16.msra.mxu0 %v649
    %1024 = vmatprep.subr.bf16.mxu0 %v647
    %1025 = vmatpush1.bf16.msra.mxu0 %v646
    %1026 = vmatprep.subr.bf16.mxu0 %v644
    %1027 = vmatpush1.bf16.msra.mxu0 %v643
    %1028 = vmatprep.subr.bf16.mxu0 %v641
    %1029 = vmatpush1.bf16.msra.mxu0 %v640
    %1030 = vmatprep.subr.bf16.mxu0 %v638
    %1031 = vmatpush1.bf16.msra.mxu0 %v637
    %1032 = vmatprep.subr.bf16.mxu0 %v635
    %1033 = vmatpush1.bf16.msra.mxu0 %v634
    %1034 = vmatprep.subr.bf16.mxu0 %v632
    %1035 = vmatpush1.bf16.msra.mxu0 %v631
    %1036 = vmatprep.subr.bf16.mxu0 0
    %1037 = vmatpush2.bf16.msra.mxu0 0
    %1038 = vmatprep.subr.bf16.mxu0 0
    %1039 = vmatpush2.bf16.msra.mxu0 0
    %1040 = vmatprep.subr.bf16.mxu0 0
    %1041 = vmatpush2.bf16.msra.mxu0 0
    %1042 = vmatprep.subr.bf16.mxu0 0
    %1043 = vmatpush2.bf16.msra.mxu0 0
    %1044 = vmatprep.subr.bf16.mxu0 0
    %1045 = vmatpush2.bf16.msra.mxu0 0
    %1046 = vmatprep.subr.bf16.mxu0 0
    %1047 = vmatpush2.bf16.msra.mxu0 0
    %1048 = vmatprep.subr.bf16.mxu0 0
    %1049 = vmatpush2.bf16.msra.mxu0 0
    %1050 = vmatprep.subr.bf16.mxu0 0
    %1051 = vmatpush2.bf16.msra.mxu0 0
    %1052 = vmatprep.mubr.bf16.mxu0 0
    %1053 = vmatmul.mubr.bf16.gmra.mxu0 %v1019
    %v1054 = vpop.f32.mrf.mxu0
    %v1055 = vadd.f32 0.0, %v1054
    %v1056 = vpop.f32.mrf.mxu0
    %v1057 = vadd.f32 0.0, %v1056
    %v1058 = vpop.f32.mrf.mxu0
    %v1059 = vpop.f32.mrf.mxu0
    %1060 = vdwg.mxu0
    %1061 = vmatprep.subr.bf16.mxu0 0
    %1062 = vmatpush1.bf16.msra.mxu0 %v654
    %1063 = vmatprep.subr.bf16.mxu0 0
    %1064 = vmatpush1.bf16.msra.mxu0 %v651
    %1065 = vmatprep.subr.bf16.mxu0 0
    %1066 = vmatpush1.bf16.msra.mxu0 %v648
    %1067 = vmatprep.subr.bf16.mxu0 0
    %1068 = vmatpush1.bf16.msra.mxu0 %v645
    %1069 = vmatprep.subr.bf16.mxu0 0
    %1070 = vmatpush1.bf16.msra.mxu0 %v642
    %1071 = vmatprep.subr.bf16.mxu0 0
    %1072 = vmatpush1.bf16.msra.mxu0 %v639
    %1073 = vmatprep.subr.bf16.mxu0 0
    %1074 = vmatpush1.bf16.msra.mxu0 %v636
    %1075 = vmatprep.subr.bf16.mxu0 0
    %1076 = vmatpush1.bf16.msra.mxu0 %v633
    %1077 = vmatprep.subr.bf16.mxu0 0
    %1078 = vmatpush2.bf16.msra.mxu0 0
    %1079 = vmatprep.subr.bf16.mxu0 0
    %1080 = vmatpush2.bf16.msra.mxu0 0
    %1081 = vmatprep.subr.bf16.mxu0 0
    %1082 = vmatpush2.bf16.msra.mxu0 0
    %1083 = vmatprep.subr.bf16.mxu0 0
    %1084 = vmatpush2.bf16.msra.mxu0 0
    %1085 = vmatprep.subr.bf16.mxu0 0
    %1086 = vmatpush2.bf16.msra.mxu0 0
    %1087 = vmatprep.subr.bf16.mxu0 0
    %1088 = vmatpush2.bf16.msra.mxu0 0
    %1089 = vmatprep.subr.bf16.mxu0 0
    %1090 = vmatpush2.bf16.msra.mxu0 0
    %1091 = vmatprep.subr.bf16.mxu0 0
    %1092 = vmatpush2.bf16.msra.mxu0 0
    %1093 = vmatprep.mubr.bf16.mxu0 0
    %1094 = vmatmul.mubr.bf16.gmra.mxu0 %v1019
    %v1095 = vpop.f32.mrf.mxu0
    %v1096 = vadd.f32 0.0, %v1095
    %v1097 = vpop.f32.mrf.mxu0
    %v1098 = vpop.f32.mrf.mxu0
    %v1099 = vpop.f32.mrf.mxu0
    %1100 = vdwg.mxu0
    %v1101 = vpack.c.bf16 %v1012, %v1012
    %1102 = vmatprep.subr.bf16.mxu0 %v862
    %1103 = vmatpush1.bf16.msra.mxu0 %v861
    %1104 = vmatprep.subr.bf16.mxu0 %v859
    %1105 = vmatpush1.bf16.msra.mxu0 %v858
    %1106 = vmatprep.subr.bf16.mxu0 %v856
    %1107 = vmatpush1.bf16.msra.mxu0 %v855
    %1108 = vmatprep.subr.bf16.mxu0 %v853
    %1109 = vmatpush1.bf16.msra.mxu0 %v852
    %1110 = vmatprep.subr.bf16.mxu0 %v850
    %1111 = vmatpush1.bf16.msra.mxu0 %v849
    %1112 = vmatprep.subr.bf16.mxu0 %v847
    %1113 = vmatpush1.bf16.msra.mxu0 %v846
    %1114 = vmatprep.subr.bf16.mxu0 %v844
    %1115 = vmatpush1.bf16.msra.mxu0 %v843
    %1116 = vmatprep.subr.bf16.mxu0 %v841
    %1117 = vmatpush1.bf16.msra.mxu0 %v840
    %1118 = vmatprep.subr.bf16.mxu0 0
    %1119 = vmatpush2.bf16.msra.mxu0 0
    %1120 = vmatprep.subr.bf16.mxu0 0
    %1121 = vmatpush2.bf16.msra.mxu0 0
    %1122 = vmatprep.subr.bf16.mxu0 0
    %1123 = vmatpush2.bf16.msra.mxu0 0
    %1124 = vmatprep.subr.bf16.mxu0 0
    %1125 = vmatpush2.bf16.msra.mxu0 0
    %1126 = vmatprep.subr.bf16.mxu0 0
    %1127 = vmatpush2.bf16.msra.mxu0 0
    %1128 = vmatprep.subr.bf16.mxu0 0
    %1129 = vmatpush2.bf16.msra.mxu0 0
    %1130 = vmatprep.subr.bf16.mxu0 0
    %1131 = vmatpush2.bf16.msra.mxu0 0
    %1132 = vmatprep.subr.bf16.mxu0 0
    %1133 = vmatpush2.bf16.msra.mxu0 0
    %1134 = vmatprep.mubr.bf16.mxu0 0
    %1135 = vmatmul.mubr.bf16.gmra.mxu0 %v1101
    %v1136 = vpop.f32.mrf.mxu0
    %v1137 = vadd.f32 0.0, %v1136
    %v1138 = vpop.f32.mrf.mxu0
    %v1139 = vadd.f32 0.0, %v1138
    %v1140 = vpop.f32.mrf.mxu0
    %v1141 = vpop.f32.mrf.mxu0
    %1142 = vdwg.mxu0
    %1143 = vmatprep.subr.bf16.mxu0 0
    %1144 = vmatpush1.bf16.msra.mxu0 %v863
    %1145 = vmatprep.subr.bf16.mxu0 0
    %1146 = vmatpush1.bf16.msra.mxu0 %v860
    %1147 = vmatprep.subr.bf16.mxu0 0
    %1148 = vmatpush1.bf16.msra.mxu0 %v857
    %1149 = vmatprep.subr.bf16.mxu0 0
    %1150 = vmatpush1.bf16.msra.mxu0 %v854
    %1151 = vmatprep.subr.bf16.mxu0 0
    %1152 = vmatpush1.bf16.msra.mxu0 %v851
    %1153 = vmatprep.subr.bf16.mxu0 0
    %1154 = vmatpush1.bf16.msra.mxu0 %v848
    %1155 = vmatprep.subr.bf16.mxu0 0
    %1156 = vmatpush1.bf16.msra.mxu0 %v845
    %1157 = vmatprep.subr.bf16.mxu0 0
    %1158 = vmatpush1.bf16.msra.mxu0 %v842
    %1159 = vmatprep.subr.bf16.mxu0 0
    %1160 = vmatpush2.bf16.msra.mxu0 0
    %1161 = vmatprep.subr.bf16.mxu0 0
    %1162 = vmatpush2.bf16.msra.mxu0 0
    %1163 = vmatprep.subr.bf16.mxu0 0
    %1164 = vmatpush2.bf16.msra.mxu0 0
    %1165 = vmatprep.subr.bf16.mxu0 0
    %1166 = vmatpush2.bf16.msra.mxu0 0
    %1167 = vmatprep.subr.bf16.mxu0 0
    %1168 = vmatpush2.bf16.msra.mxu0 0
    %1169 = vmatprep.subr.bf16.mxu0 0
    %1170 = vmatpush2.bf16.msra.mxu0 0
    %1171 = vmatprep.subr.bf16.mxu0 0
    %1172 = vmatpush2.bf16.msra.mxu0 0
    %1173 = vmatprep.subr.bf16.mxu0 0
    %1174 = vmatpush2.bf16.msra.mxu0 0
    %1175 = vmatprep.mubr.bf16.mxu0 0
    %1176 = vmatmul.mubr.bf16.gmra.mxu0 %v1101
    %v1177 = vpop.f32.mrf.mxu0
    %v1178 = vadd.f32 0.0, %v1177
    %v1179 = vpop.f32.mrf.mxu0
    %v1180 = vpop.f32.mrf.mxu0
    %v1181 = vpop.f32.mrf.mxu0
    %1182 = vdwg.mxu0
    %v1183 = vadd.f32 %v1013, %v1055
    %v1184 = vadd.f32 %v1014, %v1057
    %v1185 = vxor.u32 %v1183, 2147483648
    %v1186 = vxor.u32 %v1184, 2147483648
    %v1187 = vmul.f32 %v1185, 1.442695
    %v1188 = vpow.pop %v1187
    %v1189 = vmul.f32 %v1186, 1.442695
    %v1190 = vpow.pop %v1189
    %v1191 = vadd.f32 %v1188, 1.0
    %v1192 = vadd.f32 %v1190, 1.0
    %v1193 = vrcp.pop %v1191
    %v1194 = vmul.f32 1.0, %v1193
    %v1195 = vrcp.pop %v1192
    %v1196 = vmul.f32 1.0, %v1195
    %v1197 = vadd.f32 %v1096, %v536
    %v1198 = vmul.f32 %v1194, %v1197
    %v1199 = vadd.f32 %v1015, %v1198
    %v1200 = vtanh.pop %v1199
    %v1201 = vsub.f32 1.0, %v1196
    %v1202 = vmul.f32 %v1201, %v1200
    %v1203 = vmul.f32 %v1196, %v990
    %v1204 = vadd.f32 %v1202, %v1203
    %v1205 = vadd.f32 %v1016, %v1137
    %v1206 = vadd.f32 %v1017, %v1139
    %v1207 = vxor.u32 %v1205, 2147483648
    %v1208 = vxor.u32 %v1206, 2147483648
    %v1209 = vmul.f32 %v1207, 1.442695
    %v1210 = vpow.pop %v1209
    %v1211 = vmul.f32 %v1208, 1.442695
    %v1212 = vpow.pop %v1211
    %v1213 = vadd.f32 %v1210, 1.0
    %v1214 = vadd.f32 %v1212, 1.0
    %v1215 = vrcp.pop %v1213
    %v1216 = vmul.f32 1.0, %v1215
    %v1217 = vrcp.pop %v1214
    %v1218 = vmul.f32 1.0, %v1217
    %v1219 = vadd.f32 %v1178, %v543
    %v1220 = vmul.f32 %v1216, %v1219
    %v1221 = vadd.f32 %v1018, %v1220
    %v1222 = vtanh.pop %v1221
    %v1223 = vsub.f32 1.0, %v1218
    %v1224 = vmul.f32 %v1223, %v1222
    %v1225 = vmul.f32 %v1218, %v1012
    %v1226 = vadd.f32 %v1224, %v1225
    %v1227 = vld [vmem:[#allocation2 + $0x60] sm:$0xff]
    %v1228 = vld [vmem:[#allocation2 + $0x68] sm:$0xff]
    %v1229 = vld [vmem:[#allocation2 + $0x70] sm:$0xff]
    %v1230 = vld [vmem:[#allocation2 + $0x108] sm:$0xff]
    %v1231 = vld [vmem:[#allocation2 + $0x110] sm:$0xff]
    %v1232 = vld [vmem:[#allocation2 + $0x118] sm:$0xff]
    %v1233 = vpack.c.bf16 %v1204, %v1204
    %1234 = vmatprep.subr.bf16.mxu0 %v653
    %1235 = vmatpush1.bf16.msra.mxu0 %v652
    %1236 = vmatprep.subr.bf16.mxu0 %v650
    %1237 = vmatpush1.bf16.msra.mxu0 %v649
    %1238 = vmatprep.subr.bf16.mxu0 %v647
    %1239 = vmatpush1.bf16.msra.mxu0 %v646
    %1240 = vmatprep.subr.bf16.mxu0 %v644
    %1241 = vmatpush1.bf16.msra.mxu0 %v643
    %1242 = vmatprep.subr.bf16.mxu0 %v641
    %1243 = vmatpush1.bf16.msra.mxu0 %v640
    %1244 = vmatprep.subr.bf16.mxu0 %v638
    %1245 = vmatpush1.bf16.msra.mxu0 %v637
    %1246 = vmatprep.subr.bf16.mxu0 %v635
    %1247 = vmatpush1.bf16.msra.mxu0 %v634
    %1248 = vmatprep.subr.bf16.mxu0 %v632
    %1249 = vmatpush1.bf16.msra.mxu0 %v631
    %1250 = vmatprep.subr.bf16.mxu0 0
    %1251 = vmatpush2.bf16.msra.mxu0 0
    %1252 = vmatprep.subr.bf16.mxu0 0
    %1253 = vmatpush2.bf16.msra.mxu0 0
    %1254 = vmatprep.subr.bf16.mxu0 0
    %1255 = vmatpush2.bf16.msra.mxu0 0
    %1256 = vmatprep.subr.bf16.mxu0 0
    %1257 = vmatpush2.bf16.msra.mxu0 0
    %1258 = vmatprep.subr.bf16.mxu0 0
    %1259 = vmatpush2.bf16.msra.mxu0 0
    %1260 = vmatprep.subr.bf16.mxu0 0
    %1261 = vmatpush2.bf16.msra.mxu0 0
    %1262 = vmatprep.subr.bf16.mxu0 0
    %1263 = vmatpush2.bf16.msra.mxu0 0
    %1264 = vmatprep.subr.bf16.mxu0 0
    %1265 = vmatpush2.bf16.msra.mxu0 0
    %1266 = vmatprep.mubr.bf16.mxu0 0
    %1267 = vmatmul.mubr.bf16.gmra.mxu0 %v1233
    %v1268 = vpop.f32.mrf.mxu0
    %v1269 = vadd.f32 0.0, %v1268
    %v1270 = vpop.f32.mrf.mxu0
    %v1271 = vadd.f32 0.0, %v1270
    %v1272 = vpop.f32.mrf.mxu0
    %v1273 = vpop.f32.mrf.mxu0
    %1274 = vdwg.mxu0
    %1275 = vmatprep.subr.bf16.mxu0 0
    %1276 = vmatpush1.bf16.msra.mxu0 %v654
    %1277 = vmatprep.subr.bf16.mxu0 0
    %1278 = vmatpush1.bf16.msra.mxu0 %v651
    %1279 = vmatprep.subr.bf16.mxu0 0
    %1280 = vmatpush1.bf16.msra.mxu0 %v648
    %1281 = vmatprep.subr.bf16.mxu0 0
    %1282 = vmatpush1.bf16.msra.mxu0 %v645
    %1283 = vmatprep.subr.bf16.mxu0 0
    %1284 = vmatpush1.bf16.msra.mxu0 %v642
    %1285 = vmatprep.subr.bf16.mxu0 0
    %1286 = vmatpush1.bf16.msra.mxu0 %v639
    %1287 = vmatprep.subr.bf16.mxu0 0
    %1288 = vmatpush1.bf16.msra.mxu0 %v636
    %1289 = vmatprep.subr.bf16.mxu0 0
    %1290 = vmatpush1.bf16.msra.mxu0 %v633
    %1291 = vmatprep.subr.bf16.mxu0 0
    %1292 = vmatpush2.bf16.msra.mxu0 0
    %1293 = vmatprep.subr.bf16.mxu0 0
    %1294 = vmatpush2.bf16.msra.mxu0 0
    %1295 = vmatprep.subr.bf16.mxu0 0
    %1296 = vmatpush2.bf16.msra.mxu0 0
    %1297 = vmatprep.subr.bf16.mxu0 0
    %1298 = vmatpush2.bf16.msra.mxu0 0
    %1299 = vmatprep.subr.bf16.mxu0 0
    %1300 = vmatpush2.bf16.msra.mxu0 0
    %1301 = vmatprep.subr.bf16.mxu0 0
    %1302 = vmatpush2.bf16.msra.mxu0 0
    %1303 = vmatprep.subr.bf16.mxu0 0
    %1304 = vmatpush2.bf16.msra.mxu0 0
    %1305 = vmatprep.subr.bf16.mxu0 0
    %1306 = vmatpush2.bf16.msra.mxu0 0
    %1307 = vmatprep.mubr.bf16.mxu0 0
    %1308 = vmatmul.mubr.bf16.gmra.mxu0 %v1233
    %v1309 = vpop.f32.mrf.mxu0
    %v1310 = vadd.f32 0.0, %v1309
    %v1311 = vpop.f32.mrf.mxu0
    %v1312 = vpop.f32.mrf.mxu0
    %v1313 = vpop.f32.mrf.mxu0
    %1314 = vdwg.mxu0
    %v1315 = vpack.c.bf16 %v1226, %v1226
    %1316 = vmatprep.subr.bf16.mxu0 %v862
    %1317 = vmatpush1.bf16.msra.mxu0 %v861
    %1318 = vmatprep.subr.bf16.mxu0 %v859
    %1319 = vmatpush1.bf16.msra.mxu0 %v858
    %1320 = vmatprep.subr.bf16.mxu0 %v856
    %1321 = vmatpush1.bf16.msra.mxu0 %v855
    %1322 = vmatprep.subr.bf16.mxu0 %v853
    %1323 = vmatpush1.bf16.msra.mxu0 %v852
    %1324 = vmatprep.subr.bf16.mxu0 %v850
    %1325 = vmatpush1.bf16.msra.mxu0 %v849
    %1326 = vmatprep.subr.bf16.mxu0 %v847
    %1327 = vmatpush1.bf16.msra.mxu0 %v846
    %1328 = vmatprep.subr.bf16.mxu0 %v844
    %1329 = vmatpush1.bf16.msra.mxu0 %v843
    %1330 = vmatprep.subr.bf16.mxu0 %v841
    %1331 = vmatpush1.bf16.msra.mxu0 %v840
    %1332 = vmatprep.subr.bf16.mxu0 0
    %1333 = vmatpush2.bf16.msra.mxu0 0
    %1334 = vmatprep.subr.bf16.mxu0 0
    %1335 = vmatpush2.bf16.msra.mxu0 0
    %1336 = vmatprep.subr.bf16.mxu0 0
    %1337 = vmatpush2.bf16.msra.mxu0 0
    %1338 = vmatprep.subr.bf16.mxu0 0
    %1339 = vmatpush2.bf16.msra.mxu0 0
    %1340 = vmatprep.subr.bf16.mxu0 0
    %1341 = vmatpush2.bf16.msra.mxu0 0
    %1342 = vmatprep.subr.bf16.mxu0 0
    %1343 = vmatpush2.bf16.msra.mxu0 0
    %1344 = vmatprep.subr.bf16.mxu0 0
    %1345 = vmatpush2.bf16.msra.mxu0 0
    %1346 = vmatprep.subr.bf16.mxu0 0
    %1347 = vmatpush2.bf16.msra.mxu0 0
    %1348 = vmatprep.mubr.bf16.mxu0 0
    %1349 = vmatmul.mubr.bf16.gmra.mxu0 %v1315
    %v1350 = vpop.f32.mrf.mxu0
    %v1351 = vadd.f32 0.0, %v1350
    %v1352 = vpop.f32.mrf.mxu0
    %v1353 = vadd.f32 0.0, %v1352
    %v1354 = vpop.f32.mrf.mxu0
    %v1355 = vpop.f32.mrf.mxu0
    %1356 = vdwg.mxu0
    %1357 = vmatprep.subr.bf16.mxu0 0
    %1358 = vmatpush1.bf16.msra.mxu0 %v863
    %1359 = vmatprep.subr.bf16.mxu0 0
    %1360 = vmatpush1.bf16.msra.mxu0 %v860
    %1361 = vmatprep.subr.bf16.mxu0 0
    %1362 = vmatpush1.bf16.msra.mxu0 %v857
    %1363 = vmatprep.subr.bf16.mxu0 0
    %1364 = vmatpush1.bf16.msra.mxu0 %v854
    %1365 = vmatprep.subr.bf16.mxu0 0
    %1366 = vmatpush1.bf16.msra.mxu0 %v851
    %1367 = vmatprep.subr.bf16.mxu0 0
    %1368 = vmatpush1.bf16.msra.mxu0 %v848
    %1369 = vmatprep.subr.bf16.mxu0 0
    %1370 = vmatpush1.bf16.msra.mxu0 %v845
    %1371 = vmatprep.subr.bf16.mxu0 0
    %1372 = vmatpush1.bf16.msra.mxu0 %v842
    %1373 = vmatprep.subr.bf16.mxu0 0
    %1374 = vmatpush2.bf16.msra.mxu0 0
    %1375 = vmatprep.subr.bf16.mxu0 0
    %1376 = vmatpush2.bf16.msra.mxu0 0
    %1377 = vmatprep.subr.bf16.mxu0 0
    %1378 = vmatpush2.bf16.msra.mxu0 0
    %1379 = vmatprep.subr.bf16.mxu0 0
    %1380 = vmatpush2.bf16.msra.mxu0 0
    %1381 = vmatprep.subr.bf16.mxu0 0
    %1382 = vmatpush2.bf16.msra.mxu0 0
    %1383 = vmatprep.subr.bf16.mxu0 0
    %1384 = vmatpush2.bf16.msra.mxu0 0
    %1385 = vmatprep.subr.bf16.mxu0 0
    %1386 = vmatpush2.bf16.msra.mxu0 0
    %1387 = vmatprep.subr.bf16.mxu0 0
    %1388 = vmatpush2.bf16.msra.mxu0 0
    %1389 = vmatprep.mubr.bf16.mxu0 0
    %1390 = vmatmul.mubr.bf16.gmra.mxu0 %v1315
    %v1391 = vpop.f32.mrf.mxu0
    %v1392 = vadd.f32 0.0, %v1391
    %v1393 = vpop.f32.mrf.mxu0
    %v1394 = vpop.f32.mrf.mxu0
    %v1395 = vpop.f32.mrf.mxu0
    %1396 = vdwg.mxu0
    %v1397 = vadd.f32 %v1227, %v1269
    %v1398 = vadd.f32 %v1228, %v1271
    %v1399 = vxor.u32 %v1397, 2147483648
    %v1400 = vxor.u32 %v1398, 2147483648
    %v1401 = vmul.f32 %v1399, 1.442695
    %v1402 = vpow.pop %v1401
    %v1403 = vmul.f32 %v1400, 1.442695
    %v1404 = vpow.pop %v1403
    %v1405 = vadd.f32 %v1402, 1.0
    %v1406 = vadd.f32 %v1404, 1.0
    %v1407 = vrcp.pop %v1405
    %v1408 = vmul.f32 1.0, %v1407
    %v1409 = vrcp.pop %v1406
    %v1410 = vmul.f32 1.0, %v1409
    %v1411 = vadd.f32 %v1310, %v536
    %v1412 = vmul.f32 %v1408, %v1411
    %v1413 = vadd.f32 %v1229, %v1412
    %v1414 = vtanh.pop %v1413
    %v1415 = vsub.f32 1.0, %v1410
    %v1416 = vmul.f32 %v1415, %v1414
    %v1417 = vmul.f32 %v1410, %v1204
    %v1418 = vadd.f32 %v1416, %v1417
    %v1419 = vadd.f32 %v1230, %v1351
    %v1420 = vadd.f32 %v1231, %v1353
    %v1421 = vxor.u32 %v1419, 2147483648
    %v1422 = vxor.u32 %v1420, 2147483648
    %v1423 = vmul.f32 %v1421, 1.442695
    %v1424 = vpow.pop %v1423
    %v1425 = vmul.f32 %v1422, 1.442695
    %v1426 = vpow.pop %v1425
    %v1427 = vadd.f32 %v1424, 1.0
    %v1428 = vadd.f32 %v1426, 1.0
    %v1429 = vrcp.pop %v1427
    %v1430 = vmul.f32 1.0, %v1429
    %v1431 = vrcp.pop %v1428
    %v1432 = vmul.f32 1.0, %v1431
    %v1433 = vadd.f32 %v1392, %v543
    %v1434 = vmul.f32 %v1430, %v1433
    %v1435 = vadd.f32 %v1232, %v1434
    %v1436 = vtanh.pop %v1435
    %v1437 = vsub.f32 1.0, %v1432
    %v1438 = vmul.f32 %v1437, %v1436
    %v1439 = vmul.f32 %v1432, %v1226
    %v1440 = vadd.f32 %v1438, %v1439
    %v1441 = vld [vmem:[#allocation2 + $0x90] sm:$0xff]
    %v1442 = vld [vmem:[#allocation2 + $0x98] sm:$0xff]
    %v1443 = vld [vmem:[#allocation2 + $0xa0] sm:$0xff]
    %v1444 = vld [vmem:[#allocation2 + $0xd8] sm:$0xff]
    %v1445 = vld [vmem:[#allocation2 + $0xe0] sm:$0xff]
    %v1446 = vld [vmem:[#allocation2 + $0xe8] sm:$0xff]
    %v1447 = vpack.c.bf16 %v1418, %v1418
    %1448 = vmatprep.subr.bf16.mxu0 %v653
    %1449 = vmatpush1.bf16.msra.mxu0 %v652
    %1450 = vmatprep.subr.bf16.mxu0 %v650
    %1451 = vmatpush1.bf16.msra.mxu0 %v649
    %1452 = vmatprep.subr.bf16.mxu0 %v647
    %1453 = vmatpush1.bf16.msra.mxu0 %v646
    %1454 = vmatprep.subr.bf16.mxu0 %v644
    %1455 = vmatpush1.bf16.msra.mxu0 %v643
    %1456 = vmatprep.subr.bf16.mxu0 %v641
    %1457 = vmatpush1.bf16.msra.mxu0 %v640
    %1458 = vmatprep.subr.bf16.mxu0 %v638
    %1459 = vmatpush1.bf16.msra.mxu0 %v637
    %1460 = vmatprep.subr.bf16.mxu0 %v635
    %1461 = vmatpush1.bf16.msra.mxu0 %v634
    %1462 = vmatprep.subr.bf16.mxu0 %v632
    %1463 = vmatpush1.bf16.msra.mxu0 %v631
    %1464 = vmatprep.subr.bf16.mxu0 0
    %1465 = vmatpush2.bf16.msra.mxu0 0
    %1466 = vmatprep.subr.bf16.mxu0 0
    %1467 = vmatpush2.bf16.msra.mxu0 0
    %1468 = vmatprep.subr.bf16.mxu0 0
    %1469 = vmatpush2.bf16.msra.mxu0 0
    %1470 = vmatprep.subr.bf16.mxu0 0
    %1471 = vmatpush2.bf16.msra.mxu0 0
    %1472 = vmatprep.subr.bf16.mxu0 0
    %1473 = vmatpush2.bf16.msra.mxu0 0
    %1474 = vmatprep.subr.bf16.mxu0 0
    %1475 = vmatpush2.bf16.msra.mxu0 0
    %1476 = vmatprep.subr.bf16.mxu0 0
    %1477 = vmatpush2.bf16.msra.mxu0 0
    %1478 = vmatprep.subr.bf16.mxu0 0
    %1479 = vmatpush2.bf16.msra.mxu0 0
    %1480 = vmatprep.mubr.bf16.mxu0 0
    %1481 = vmatmul.mubr.bf16.gmra.mxu0 %v1447
    %v1482 = vpop.f32.mrf.mxu0
    %v1483 = vadd.f32 0.0, %v1482
    %v1484 = vpop.f32.mrf.mxu0
    %v1485 = vadd.f32 0.0, %v1484
    %v1486 = vpop.f32.mrf.mxu0
    %v1487 = vpop.f32.mrf.mxu0
    %1488 = vdwg.mxu0
    %1489 = vmatprep.subr.bf16.mxu0 0
    %1490 = vmatpush1.bf16.msra.mxu0 %v654
    %1491 = vmatprep.subr.bf16.mxu0 0
    %1492 = vmatpush1.bf16.msra.mxu0 %v651
    %1493 = vmatprep.subr.bf16.mxu0 0
    %1494 = vmatpush1.bf16.msra.mxu0 %v648
    %1495 = vmatprep.subr.bf16.mxu0 0
    %1496 = vmatpush1.bf16.msra.mxu0 %v645
    %1497 = vmatprep.subr.bf16.mxu0 0
    %1498 = vmatpush1.bf16.msra.mxu0 %v642
    %1499 = vmatprep.subr.bf16.mxu0 0
    %1500 = vmatpush1.bf16.msra.mxu0 %v639
    %1501 = vmatprep.subr.bf16.mxu0 0
    %1502 = vmatpush1.bf16.msra.mxu0 %v636
    %1503 = vmatprep.subr.bf16.mxu0 0
    %1504 = vmatpush1.bf16.msra.mxu0 %v633
    %1505 = vmatprep.subr.bf16.mxu0 0
    %1506 = vmatpush2.bf16.msra.mxu0 0
    %1507 = vmatprep.subr.bf16.mxu0 0
    %1508 = vmatpush2.bf16.msra.mxu0 0
    %1509 = vmatprep.subr.bf16.mxu0 0
    %1510 = vmatpush2.bf16.msra.mxu0 0
    %1511 = vmatprep.subr.bf16.mxu0 0
    %1512 = vmatpush2.bf16.msra.mxu0 0
    %1513 = vmatprep.subr.bf16.mxu0 0
    %1514 = vmatpush2.bf16.msra.mxu0 0
    %1515 = vmatprep.subr.bf16.mxu0 0
    %1516 = vmatpush2.bf16.msra.mxu0 0
    %1517 = vmatprep.subr.bf16.mxu0 0
    %1518 = vmatpush2.bf16.msra.mxu0 0
    %1519 = vmatprep.subr.bf16.mxu0 0
    %1520 = vmatpush2.bf16.msra.mxu0 0
    %1521 = vmatprep.mubr.bf16.mxu0 0
    %1522 = vmatmul.mubr.bf16.gmra.mxu0 %v1447
    %v1523 = vpop.f32.mrf.mxu0
    %v1524 = vadd.f32 0.0, %v1523
    %v1525 = vpop.f32.mrf.mxu0
    %v1526 = vpop.f32.mrf.mxu0
    %v1527 = vpop.f32.mrf.mxu0
    %1528 = vdwg.mxu0
    %v1529 = vpack.c.bf16 %v1440, %v1440
    %1530 = vmatprep.subr.bf16.mxu0 %v862
    %1531 = vmatpush1.bf16.msra.mxu0 %v861
    %1532 = vmatprep.subr.bf16.mxu0 %v859
    %1533 = vmatpush1.bf16.msra.mxu0 %v858
    %1534 = vmatprep.subr.bf16.mxu0 %v856
    %1535 = vmatpush1.bf16.msra.mxu0 %v855
    %1536 = vmatprep.subr.bf16.mxu0 %v853
    %1537 = vmatpush1.bf16.msra.mxu0 %v852
    %1538 = vmatprep.subr.bf16.mxu0 %v850
    %1539 = vmatpush1.bf16.msra.mxu0 %v849
    %1540 = vmatprep.subr.bf16.mxu0 %v847
    %1541 = vmatpush1.bf16.msra.mxu0 %v846
    %1542 = vmatprep.subr.bf16.mxu0 %v844
    %1543 = vmatpush1.bf16.msra.mxu0 %v843
    %1544 = vmatprep.subr.bf16.mxu0 %v841
    %1545 = vmatpush1.bf16.msra.mxu0 %v840
    %1546 = vmatprep.subr.bf16.mxu0 0
    %1547 = vmatpush2.bf16.msra.mxu0 0
    %1548 = vmatprep.subr.bf16.mxu0 0
    %1549 = vmatpush2.bf16.msra.mxu0 0
    %1550 = vmatprep.subr.bf16.mxu0 0
    %1551 = vmatpush2.bf16.msra.mxu0 0
    %1552 = vmatprep.subr.bf16.mxu0 0
    %1553 = vmatpush2.bf16.msra.mxu0 0
    %1554 = vmatprep.subr.bf16.mxu0 0
    %1555 = vmatpush2.bf16.msra.mxu0 0
    %1556 = vmatprep.subr.bf16.mxu0 0
    %1557 = vmatpush2.bf16.msra.mxu0 0
    %1558 = vmatprep.subr.bf16.mxu0 0
    %1559 = vmatpush2.bf16.msra.mxu0 0
    %1560 = vmatprep.subr.bf16.mxu0 0
    %1561 = vmatpush2.bf16.msra.mxu0 0
    %1562 = vmatprep.mubr.bf16.mxu0 0
    %1563 = vmatmul.mubr.bf16.gmra.mxu0 %v1529
    %v1564 = vpop.f32.mrf.mxu0
    %v1565 = vadd.f32 0.0, %v1564
    %v1566 = vpop.f32.mrf.mxu0
    %v1567 = vadd.f32 0.0, %v1566
    %v1568 = vpop.f32.mrf.mxu0
    %v1569 = vpop.f32.mrf.mxu0
    %1570 = vdwg.mxu0
    %1571 = vmatprep.subr.bf16.mxu0 0
    %1572 = vmatpush1.bf16.msra.mxu0 %v863
    %1573 = vmatprep.subr.bf16.mxu0 0
    %1574 = vmatpush1.bf16.msra.mxu0 %v860
    %1575 = vmatprep.subr.bf16.mxu0 0
    %1576 = vmatpush1.bf16.msra.mxu0 %v857
    %1577 = vmatprep.subr.bf16.mxu0 0
    %1578 = vmatpush1.bf16.msra.mxu0 %v854
    %1579 = vmatprep.subr.bf16.mxu0 0
    %1580 = vmatpush1.bf16.msra.mxu0 %v851
    %1581 = vmatprep.subr.bf16.mxu0 0
    %1582 = vmatpush1.bf16.msra.mxu0 %v848
    %1583 = vmatprep.subr.bf16.mxu0 0
    %1584 = vmatpush1.bf16.msra.mxu0 %v845
    %1585 = vmatprep.subr.bf16.mxu0 0
    %1586 = vmatpush1.bf16.msra.mxu0 %v842
    %1587 = vmatprep.subr.bf16.mxu0 0
    %1588 = vmatpush2.bf16.msra.mxu0 0
    %1589 = vmatprep.subr.bf16.mxu0 0
    %1590 = vmatpush2.bf16.msra.mxu0 0
    %1591 = vmatprep.subr.bf16.mxu0 0
    %1592 = vmatpush2.bf16.msra.mxu0 0
    %1593 = vmatprep.subr.bf16.mxu0 0
    %1594 = vmatpush2.bf16.msra.mxu0 0
    %1595 = vmatprep.subr.bf16.mxu0 0
    %1596 = vmatpush2.bf16.msra.mxu0 0
    %1597 = vmatprep.subr.bf16.mxu0 0
    %1598 = vmatpush2.bf16.msra.mxu0 0
    %1599 = vmatprep.subr.bf16.mxu0 0
    %1600 = vmatpush2.bf16.msra.mxu0 0
    %1601 = vmatprep.subr.bf16.mxu0 0
    %1602 = vmatpush2.bf16.msra.mxu0 0
    %1603 = vmatprep.mubr.bf16.mxu0 0
    %1604 = vmatmul.mubr.bf16.gmra.mxu0 %v1529
    %v1605 = vpop.f32.mrf.mxu0
    %v1606 = vadd.f32 0.0, %v1605
    %v1607 = vpop.f32.mrf.mxu0
    %v1608 = vpop.f32.mrf.mxu0
    %v1609 = vpop.f32.mrf.mxu0
    %1610 = vdwg.mxu0
    %v1611 = vadd.f32 %v1441, %v1483
    %v1612 = vadd.f32 %v1442, %v1485
    %v1613 = vxor.u32 %v1611, 2147483648
    %v1614 = vxor.u32 %v1612, 2147483648
    %v1615 = vmul.f32 %v1613, 1.442695
    %v1616 = vpow.pop %v1615
    %v1617 = vmul.f32 %v1614, 1.442695
    %v1618 = vpow.pop %v1617
    %v1619 = vadd.f32 %v1616, 1.0
    %v1620 = vadd.f32 %v1618, 1.0
    %v1621 = vrcp.pop %v1619
    %v1622 = vmul.f32 1.0, %v1621
    %v1623 = vrcp.pop %v1620
    %v1624 = vmul.f32 1.0, %v1623
    %v1625 = vadd.f32 %v1524, %v536
    %v1626 = vmul.f32 %v1622, %v1625
    %v1627 = vadd.f32 %v1443, %v1626
    %v1628 = vtanh.pop %v1627
    %v1629 = vsub.f32 1.0, %v1624
    %v1630 = vmul.f32 %v1629, %v1628
    %v1631 = vmul.f32 %v1624, %v1418
    %v1632 = vadd.f32 %v1630, %v1631
    %v1633 = vadd.f32 %v1444, %v1565
    %v1634 = vadd.f32 %v1445, %v1567
    %v1635 = vxor.u32 %v1633, 2147483648
    %v1636 = vxor.u32 %v1634, 2147483648
    %v1637 = vmul.f32 %v1635, 1.442695
    %v1638 = vpow.pop %v1637
    %v1639 = vmul.f32 %v1636, 1.442695
    %v1640 = vpow.pop %v1639
    %v1641 = vadd.f32 %v1638, 1.0
    %v1642 = vadd.f32 %v1640, 1.0
    %v1643 = vrcp.pop %v1641
    %v1644 = vmul.f32 1.0, %v1643
    %v1645 = vrcp.pop %v1642
    %v1646 = vmul.f32 1.0, %v1645
    %v1647 = vadd.f32 %v1606, %v543
    %v1648 = vmul.f32 %v1644, %v1647
    %v1649 = vadd.f32 %v1446, %v1648
    %v1650 = vtanh.pop %v1649
    %v1651 = vsub.f32 1.0, %v1646
    %v1652 = vmul.f32 %v1651, %v1650
    %v1653 = vmul.f32 %v1646, %v1440
    %v1654 = vadd.f32 %v1652, %v1653
    %v1655 = vld [vmem:[#allocation2 + $0xc0] sm:$0xff]
    %v1656 = vld [vmem:[#allocation2 + $0xc8] sm:$0xff]
    %v1657 = vld [vmem:[#allocation2 + $0xd0] sm:$0xff]
    %v1658 = vld [vmem:[#allocation2 + $0xa8] sm:$0xff]
    %v1659 = vld [vmem:[#allocation2 + $0xb0] sm:$0xff]
    %v1660 = vld [vmem:[#allocation2 + $0xb8] sm:$0xff]
    %v1661 = vpack.c.bf16 %v1632, %v1632
    %1662 = vmatprep.subr.bf16.mxu0 %v653
    %1663 = vmatpush1.bf16.msra.mxu0 %v652
    %1664 = vmatprep.subr.bf16.mxu0 %v650
    %1665 = vmatpush1.bf16.msra.mxu0 %v649
    %1666 = vmatprep.subr.bf16.mxu0 %v647
    %1667 = vmatpush1.bf16.msra.mxu0 %v646
    %1668 = vmatprep.subr.bf16.mxu0 %v644
    %1669 = vmatpush1.bf16.msra.mxu0 %v643
    %1670 = vmatprep.subr.bf16.mxu0 %v641
    %1671 = vmatpush1.bf16.msra.mxu0 %v640
    %1672 = vmatprep.subr.bf16.mxu0 %v638
    %1673 = vmatpush1.bf16.msra.mxu0 %v637
    %1674 = vmatprep.subr.bf16.mxu0 %v635
    %1675 = vmatpush1.bf16.msra.mxu0 %v634
    %1676 = vmatprep.subr.bf16.mxu0 %v632
    %1677 = vmatpush1.bf16.msra.mxu0 %v631
    %1678 = vmatprep.subr.bf16.mxu0 0
    %1679 = vmatpush2.bf16.msra.mxu0 0
    %1680 = vmatprep.subr.bf16.mxu0 0
    %1681 = vmatpush2.bf16.msra.mxu0 0
    %1682 = vmatprep.subr.bf16.mxu0 0
    %1683 = vmatpush2.bf16.msra.mxu0 0
    %1684 = vmatprep.subr.bf16.mxu0 0
    %1685 = vmatpush2.bf16.msra.mxu0 0
    %1686 = vmatprep.subr.bf16.mxu0 0
    %1687 = vmatpush2.bf16.msra.mxu0 0
    %1688 = vmatprep.subr.bf16.mxu0 0
    %1689 = vmatpush2.bf16.msra.mxu0 0
    %1690 = vmatprep.subr.bf16.mxu0 0
    %1691 = vmatpush2.bf16.msra.mxu0 0
    %1692 = vmatprep.subr.bf16.mxu0 0
    %1693 = vmatpush2.bf16.msra.mxu0 0
    %1694 = vmatprep.mubr.bf16.mxu0 0
    %1695 = vmatmul.mubr.bf16.gmra.mxu0 %v1661
    %v1696 = vpop.f32.mrf.mxu0
    %v1697 = vadd.f32 0.0, %v1696
    %v1698 = vpop.f32.mrf.mxu0
    %v1699 = vadd.f32 0.0, %v1698
    %v1700 = vpop.f32.mrf.mxu0
    %v1701 = vpop.f32.mrf.mxu0
    %1702 = vdwg.mxu0
    %1703 = vmatprep.subr.bf16.mxu0 0
    %1704 = vmatpush1.bf16.msra.mxu0 %v654
    %1705 = vmatprep.subr.bf16.mxu0 0
    %1706 = vmatpush1.bf16.msra.mxu0 %v651
    %1707 = vmatprep.subr.bf16.mxu0 0
    %1708 = vmatpush1.bf16.msra.mxu0 %v648
    %1709 = vmatprep.subr.bf16.mxu0 0
    %1710 = vmatpush1.bf16.msra.mxu0 %v645
    %1711 = vmatprep.subr.bf16.mxu0 0
    %1712 = vmatpush1.bf16.msra.mxu0 %v642
    %1713 = vmatprep.subr.bf16.mxu0 0
    %1714 = vmatpush1.bf16.msra.mxu0 %v639
    %1715 = vmatprep.subr.bf16.mxu0 0
    %1716 = vmatpush1.bf16.msra.mxu0 %v636
    %1717 = vmatprep.subr.bf16.mxu0 0
    %1718 = vmatpush1.bf16.msra.mxu0 %v633
    %1719 = vmatprep.subr.bf16.mxu0 0
    %1720 = vmatpush2.bf16.msra.mxu0 0
    %1721 = vmatprep.subr.bf16.mxu0 0
    %1722 = vmatpush2.bf16.msra.mxu0 0
    %1723 = vmatprep.subr.bf16.mxu0 0
    %1724 = vmatpush2.bf16.msra.mxu0 0
    %1725 = vmatprep.subr.bf16.mxu0 0
    %1726 = vmatpush2.bf16.msra.mxu0 0
    %1727 = vmatprep.subr.bf16.mxu0 0
    %1728 = vmatpush2.bf16.msra.mxu0 0
    %1729 = vmatprep.subr.bf16.mxu0 0
    %1730 = vmatpush2.bf16.msra.mxu0 0
    %1731 = vmatprep.subr.bf16.mxu0 0
    %1732 = vmatpush2.bf16.msra.mxu0 0
    %1733 = vmatprep.subr.bf16.mxu0 0
    %1734 = vmatpush2.bf16.msra.mxu0 0
    %1735 = vmatprep.mubr.bf16.mxu0 0
    %1736 = vmatmul.mubr.bf16.gmra.mxu0 %v1661
    %v1737 = vpop.f32.mrf.mxu0
    %v1738 = vadd.f32 0.0, %v1737
    %v1739 = vpop.f32.mrf.mxu0
    %v1740 = vpop.f32.mrf.mxu0
    %v1741 = vpop.f32.mrf.mxu0
    %1742 = vdwg.mxu0
    %v1743 = vpack.c.bf16 %v1654, %v1654
    %1744 = vmatprep.subr.bf16.mxu0 %v862
    %1745 = vmatpush1.bf16.msra.mxu0 %v861
    %1746 = vmatprep.subr.bf16.mxu0 %v859
    %1747 = vmatpush1.bf16.msra.mxu0 %v858
    %1748 = vmatprep.subr.bf16.mxu0 %v856
    %1749 = vmatpush1.bf16.msra.mxu0 %v855
    %1750 = vmatprep.subr.bf16.mxu0 %v853
    %1751 = vmatpush1.bf16.msra.mxu0 %v852
    %1752 = vmatprep.subr.bf16.mxu0 %v850
    %1753 = vmatpush1.bf16.msra.mxu0 %v849
    %1754 = vmatprep.subr.bf16.mxu0 %v847
    %1755 = vmatpush1.bf16.msra.mxu0 %v846
    %1756 = vmatprep.subr.bf16.mxu0 %v844
    %1757 = vmatpush1.bf16.msra.mxu0 %v843
    %1758 = vmatprep.subr.bf16.mxu0 %v841
    %1759 = vmatpush1.bf16.msra.mxu0 %v840
    %1760 = vmatprep.subr.bf16.mxu0 0
    %1761 = vmatpush2.bf16.msra.mxu0 0
    %1762 = vmatprep.subr.bf16.mxu0 0
    %1763 = vmatpush2.bf16.msra.mxu0 0
    %1764 = vmatprep.subr.bf16.mxu0 0
    %1765 = vmatpush2.bf16.msra.mxu0 0
    %1766 = vmatprep.subr.bf16.mxu0 0
    %1767 = vmatpush2.bf16.msra.mxu0 0
    %1768 = vmatprep.subr.bf16.mxu0 0
    %1769 = vmatpush2.bf16.msra.mxu0 0
    %1770 = vmatprep.subr.bf16.mxu0 0
    %1771 = vmatpush2.bf16.msra.mxu0 0
    %1772 = vmatprep.subr.bf16.mxu0 0
    %1773 = vmatpush2.bf16.msra.mxu0 0
    %1774 = vmatprep.subr.bf16.mxu0 0
    %1775 = vmatpush2.bf16.msra.mxu0 0
    %1776 = vmatprep.mubr.bf16.mxu0 0
    %1777 = vmatmul.mubr.bf16.gmra.mxu0 %v1743
    %v1778 = vpop.f32.mrf.mxu0
    %v1779 = vadd.f32 0.0, %v1778
    %v1780 = vpop.f32.mrf.mxu0
    %v1781 = vadd.f32 0.0, %v1780
    %v1782 = vpop.f32.mrf.mxu0
    %v1783 = vpop.f32.mrf.mxu0
    %1784 = vdwg.mxu0
    %1785 = vmatprep.subr.bf16.mxu0 0
    %1786 = vmatpush1.bf16.msra.mxu0 %v863
    %1787 = vmatprep.subr.bf16.mxu0 0
    %1788 = vmatpush1.bf16.msra.mxu0 %v860
    %1789 = vmatprep.subr.bf16.mxu0 0
    %1790 = vmatpush1.bf16.msra.mxu0 %v857
    %1791 = vmatprep.subr.bf16.mxu0 0
    %1792 = vmatpush1.bf16.msra.mxu0 %v854
    %1793 = vmatprep.subr.bf16.mxu0 0
    %1794 = vmatpush1.bf16.msra.mxu0 %v851
    %1795 = vmatprep.subr.bf16.mxu0 0
    %1796 = vmatpush1.bf16.msra.mxu0 %v848
    %1797 = vmatprep.subr.bf16.mxu0 0
    %1798 = vmatpush1.bf16.msra.mxu0 %v845
    %1799 = vmatprep.subr.bf16.mxu0 0
    %1800 = vmatpush1.bf16.msra.mxu0 %v842
    %1801 = vmatprep.subr.bf16.mxu0 0
    %1802 = vmatpush2.bf16.msra.mxu0 0
    %1803 = vmatprep.subr.bf16.mxu0 0
    %1804 = vmatpush2.bf16.msra.mxu0 0
    %1805 = vmatprep.subr.bf16.mxu0 0
    %1806 = vmatpush2.bf16.msra.mxu0 0
    %1807 = vmatprep.subr.bf16.mxu0 0
    %1808 = vmatpush2.bf16.msra.mxu0 0
    %1809 = vmatprep.subr.bf16.mxu0 0
    %1810 = vmatpush2.bf16.msra.mxu0 0
    %1811 = vmatprep.subr.bf16.mxu0 0
    %1812 = vmatpush2.bf16.msra.mxu0 0
    %1813 = vmatprep.subr.bf16.mxu0 0
    %1814 = vmatpush2.bf16.msra.mxu0 0
    %1815 = vmatprep.subr.bf16.mxu0 0
    %1816 = vmatpush2.bf16.msra.mxu0 0
    %1817 = vmatprep.mubr.bf16.mxu0 0
    %1818 = vmatmul.mubr.bf16.gmra.mxu0 %v1743
    %v1819 = vpop.f32.mrf.mxu0
    %v1820 = vadd.f32 0.0, %v1819
    %v1821 = vpop.f32.mrf.mxu0
    %v1822 = vpop.f32.mrf.mxu0
    %v1823 = vpop.f32.mrf.mxu0
    %1824 = vdwg.mxu0
    %v1825 = vadd.f32 %v1655, %v1697
    %v1826 = vadd.f32 %v1656, %v1699
    %v1827 = vxor.u32 %v1825, 2147483648
    %v1828 = vxor.u32 %v1826, 2147483648
    %v1829 = vmul.f32 %v1827, 1.442695
    %v1830 = vpow.pop %v1829
    %v1831 = vmul.f32 %v1828, 1.442695
    %v1832 = vpow.pop %v1831
    %v1833 = vadd.f32 %v1830, 1.0
    %v1834 = vadd.f32 %v1832, 1.0
    %v1835 = vrcp.pop %v1833
    %v1836 = vmul.f32 1.0, %v1835
    %v1837 = vrcp.pop %v1834
    %v1838 = vmul.f32 1.0, %v1837
    %v1839 = vadd.f32 %v1738, %v536
    %v1840 = vmul.f32 %v1836, %v1839
    %v1841 = vadd.f32 %v1657, %v1840
    %v1842 = vtanh.pop %v1841
    %v1843 = vsub.f32 1.0, %v1838
    %v1844 = vmul.f32 %v1843, %v1842
    %v1845 = vmul.f32 %v1838, %v1632
    %v1846 = vadd.f32 %v1844, %v1845
    %v1847 = vadd.f32 %v1658, %v1779
    %v1848 = vadd.f32 %v1659, %v1781
    %v1849 = vxor.u32 %v1847, 2147483648
    %v1850 = vxor.u32 %v1848, 2147483648
    %v1851 = vmul.f32 %v1849, 1.442695
    %v1852 = vpow.pop %v1851
    %v1853 = vmul.f32 %v1850, 1.442695
    %v1854 = vpow.pop %v1853
    %v1855 = vadd.f32 %v1852, 1.0
    %v1856 = vadd.f32 %v1854, 1.0
    %v1857 = vrcp.pop %v1855
    %v1858 = vmul.f32 1.0, %v1857
    %v1859 = vrcp.pop %v1856
    %v1860 = vmul.f32 1.0, %v1859
    %v1861 = vadd.f32 %v1820, %v543
    %v1862 = vmul.f32 %v1858, %v1861
    %v1863 = vadd.f32 %v1660, %v1862
    %v1864 = vtanh.pop %v1863
    %v1865 = vsub.f32 1.0, %v1860
    %v1866 = vmul.f32 %v1865, %v1864
    %v1867 = vmul.f32 %v1860, %v1654
    %v1868 = vadd.f32 %v1866, %v1867
    %v1869 = vld [vmem:[#allocation2 + $0xf0] sm:$0xff]
    %v1870 = vld [vmem:[#allocation2 + $0xf8] sm:$0xff]
    %v1871 = vld [vmem:[#allocation2 + $0x100] sm:$0xff]
    %v1872 = vld [vmem:[#allocation2 + $0x78] sm:$0xff]
    %v1873 = vld [vmem:[#allocation2 + $0x80] sm:$0xff]
    %v1874 = vld [vmem:[#allocation2 + $0x88] sm:$0xff]
    %v1875 = vpack.c.bf16 %v1846, %v1846
    %1876 = vmatprep.subr.bf16.mxu0 %v653
    %1877 = vmatpush1.bf16.msra.mxu0 %v652
    %1878 = vmatprep.subr.bf16.mxu0 %v650
    %1879 = vmatpush1.bf16.msra.mxu0 %v649
    %1880 = vmatprep.subr.bf16.mxu0 %v647
    %1881 = vmatpush1.bf16.msra.mxu0 %v646
    %1882 = vmatprep.subr.bf16.mxu0 %v644
    %1883 = vmatpush1.bf16.msra.mxu0 %v643
    %1884 = vmatprep.subr.bf16.mxu0 %v641
    %1885 = vmatpush1.bf16.msra.mxu0 %v640
    %1886 = vmatprep.subr.bf16.mxu0 %v638
    %1887 = vmatpush1.bf16.msra.mxu0 %v637
    %1888 = vmatprep.subr.bf16.mxu0 %v635
    %1889 = vmatpush1.bf16.msra.mxu0 %v634
    %1890 = vmatprep.subr.bf16.mxu0 %v632
    %1891 = vmatpush1.bf16.msra.mxu0 %v631
    %1892 = vmatprep.subr.bf16.mxu0 0
    %1893 = vmatpush2.bf16.msra.mxu0 0
    %1894 = vmatprep.subr.bf16.mxu0 0
    %1895 = vmatpush2.bf16.msra.mxu0 0
    %1896 = vmatprep.subr.bf16.mxu0 0
    %1897 = vmatpush2.bf16.msra.mxu0 0
    %1898 = vmatprep.subr.bf16.mxu0 0
    %1899 = vmatpush2.bf16.msra.mxu0 0
    %1900 = vmatprep.subr.bf16.mxu0 0
    %1901 = vmatpush2.bf16.msra.mxu0 0
    %1902 = vmatprep.subr.bf16.mxu0 0
    %1903 = vmatpush2.bf16.msra.mxu0 0
    %1904 = vmatprep.subr.bf16.mxu0 0
    %1905 = vmatpush2.bf16.msra.mxu0 0
    %1906 = vmatprep.subr.bf16.mxu0 0
    %1907 = vmatpush2.bf16.msra.mxu0 0
    %1908 = vmatprep.mubr.bf16.mxu0 0
    %1909 = vmatmul.mubr.bf16.gmra.mxu0 %v1875
    %v1910 = vpop.f32.mrf.mxu0
    %v1911 = vadd.f32 0.0, %v1910
    %v1912 = vpop.f32.mrf.mxu0
    %v1913 = vadd.f32 0.0, %v1912
    %v1914 = vpop.f32.mrf.mxu0
    %v1915 = vpop.f32.mrf.mxu0
    %1916 = vdwg.mxu0
    %1917 = vmatprep.subr.bf16.mxu0 0
    %1918 = vmatpush1.bf16.msra.mxu0 %v654
    %1919 = vmatprep.subr.bf16.mxu0 0
    %1920 = vmatpush1.bf16.msra.mxu0 %v651
    %1921 = vmatprep.subr.bf16.mxu0 0
    %1922 = vmatpush1.bf16.msra.mxu0 %v648
    %1923 = vmatprep.subr.bf16.mxu0 0
    %1924 = vmatpush1.bf16.msra.mxu0 %v645
    %1925 = vmatprep.subr.bf16.mxu0 0
    %1926 = vmatpush1.bf16.msra.mxu0 %v642
    %1927 = vmatprep.subr.bf16.mxu0 0
    %1928 = vmatpush1.bf16.msra.mxu0 %v639
    %1929 = vmatprep.subr.bf16.mxu0 0
    %1930 = vmatpush1.bf16.msra.mxu0 %v636
    %1931 = vmatprep.subr.bf16.mxu0 0
    %1932 = vmatpush1.bf16.msra.mxu0 %v633
    %1933 = vmatprep.subr.bf16.mxu0 0
    %1934 = vmatpush2.bf16.msra.mxu0 0
    %1935 = vmatprep.subr.bf16.mxu0 0
    %1936 = vmatpush2.bf16.msra.mxu0 0
    %1937 = vmatprep.subr.bf16.mxu0 0
    %1938 = vmatpush2.bf16.msra.mxu0 0
    %1939 = vmatprep.subr.bf16.mxu0 0
    %1940 = vmatpush2.bf16.msra.mxu0 0
    %1941 = vmatprep.subr.bf16.mxu0 0
    %1942 = vmatpush2.bf16.msra.mxu0 0
    %1943 = vmatprep.subr.bf16.mxu0 0
    %1944 = vmatpush2.bf16.msra.mxu0 0
    %1945 = vmatprep.subr.bf16.mxu0 0
    %1946 = vmatpush2.bf16.msra.mxu0 0
    %1947 = vmatprep.subr.bf16.mxu0 0
    %1948 = vmatpush2.bf16.msra.mxu0 0
    %1949 = vmatprep.mubr.bf16.mxu0 0
    %1950 = vmatmul.mubr.bf16.gmra.mxu0 %v1875
    %v1951 = vpop.f32.mrf.mxu0
    %v1952 = vadd.f32 0.0, %v1951
    %v1953 = vpop.f32.mrf.mxu0
    %v1954 = vpop.f32.mrf.mxu0
    %v1955 = vpop.f32.mrf.mxu0
    %1956 = vdwg.mxu0
    %v1957 = vpack.c.bf16 %v1868, %v1868
    %1958 = vmatprep.subr.bf16.mxu0 %v862
    %1959 = vmatpush1.bf16.msra.mxu0 %v861
    %1960 = vmatprep.subr.bf16.mxu0 %v859
    %1961 = vmatpush1.bf16.msra.mxu0 %v858
    %1962 = vmatprep.subr.bf16.mxu0 %v856
    %1963 = vmatpush1.bf16.msra.mxu0 %v855
    %1964 = vmatprep.subr.bf16.mxu0 %v853
    %1965 = vmatpush1.bf16.msra.mxu0 %v852
    %1966 = vmatprep.subr.bf16.mxu0 %v850
    %1967 = vmatpush1.bf16.msra.mxu0 %v849
    %1968 = vmatprep.subr.bf16.mxu0 %v847
    %1969 = vmatpush1.bf16.msra.mxu0 %v846
    %1970 = vmatprep.subr.bf16.mxu0 %v844
    %1971 = vmatpush1.bf16.msra.mxu0 %v843
    %1972 = vmatprep.subr.bf16.mxu0 %v841
    %1973 = vmatpush1.bf16.msra.mxu0 %v840
    %1974 = vmatprep.subr.bf16.mxu0 0
    %1975 = vmatpush2.bf16.msra.mxu0 0
    %1976 = vmatprep.subr.bf16.mxu0 0
    %1977 = vmatpush2.bf16.msra.mxu0 0
    %1978 = vmatprep.subr.bf16.mxu0 0
    %1979 = vmatpush2.bf16.msra.mxu0 0
    %1980 = vmatprep.subr.bf16.mxu0 0
    %1981 = vmatpush2.bf16.msra.mxu0 0
    %1982 = vmatprep.subr.bf16.mxu0 0
    %1983 = vmatpush2.bf16.msra.mxu0 0
    %1984 = vmatprep.subr.bf16.mxu0 0
    %1985 = vmatpush2.bf16.msra.mxu0 0
    %1986 = vmatprep.subr.bf16.mxu0 0
    %1987 = vmatpush2.bf16.msra.mxu0 0
    %1988 = vmatprep.subr.bf16.mxu0 0
    %1989 = vmatpush2.bf16.msra.mxu0 0
    %1990 = vmatprep.mubr.bf16.mxu0 0
    %1991 = vmatmul.mubr.bf16.gmra.mxu0 %v1957
    %v1992 = vpop.f32.mrf.mxu0
    %v1993 = vadd.f32 0.0, %v1992
    %v1994 = vpop.f32.mrf.mxu0
    %v1995 = vadd.f32 0.0, %v1994
    %v1996 = vpop.f32.mrf.mxu0
    %v1997 = vpop.f32.mrf.mxu0
    %1998 = vdwg.mxu0
    %1999 = vmatprep.subr.bf16.mxu0 0
    %2000 = vmatpush1.bf16.msra.mxu0 %v863
    %2001 = vmatprep.subr.bf16.mxu0 0
    %2002 = vmatpush1.bf16.msra.mxu0 %v860
    %2003 = vmatprep.subr.bf16.mxu0 0
    %2004 = vmatpush1.bf16.msra.mxu0 %v857
    %2005 = vmatprep.subr.bf16.mxu0 0
    %2006 = vmatpush1.bf16.msra.mxu0 %v854
    %2007 = vmatprep.subr.bf16.mxu0 0
    %2008 = vmatpush1.bf16.msra.mxu0 %v851
    %2009 = vmatprep.subr.bf16.mxu0 0
    %2010 = vmatpush1.bf16.msra.mxu0 %v848
    %2011 = vmatprep.subr.bf16.mxu0 0
    %2012 = vmatpush1.bf16.msra.mxu0 %v845
    %2013 = vmatprep.subr.bf16.mxu0 0
    %2014 = vmatpush1.bf16.msra.mxu0 %v842
    %2015 = vmatprep.subr.bf16.mxu0 0
    %2016 = vmatpush2.bf16.msra.mxu0 0
    %2017 = vmatprep.subr.bf16.mxu0 0
    %2018 = vmatpush2.bf16.msra.mxu0 0
    %2019 = vmatprep.subr.bf16.mxu0 0
    %2020 = vmatpush2.bf16.msra.mxu0 0
    %2021 = vmatprep.subr.bf16.mxu0 0
    %2022 = vmatpush2.bf16.msra.mxu0 0
    %2023 = vmatprep.subr.bf16.mxu0 0
    %2024 = vmatpush2.bf16.msra.mxu0 0
    %2025 = vmatprep.subr.bf16.mxu0 0
    %2026 = vmatpush2.bf16.msra.mxu0 0
    %2027 = vmatprep.subr.bf16.mxu0 0
    %2028 = vmatpush2.bf16.msra.mxu0 0
    %2029 = vmatprep.subr.bf16.mxu0 0
    %2030 = vmatpush2.bf16.msra.mxu0 0
    %2031 = vmatprep.mubr.bf16.mxu0 0
    %2032 = vmatmul.mubr.bf16.gmra.mxu0 %v1957
    %v2033 = vpop.f32.mrf.mxu0
    %v2034 = vadd.f32 0.0, %v2033
    %v2035 = vpop.f32.mrf.mxu0
    %v2036 = vpop.f32.mrf.mxu0
    %v2037 = vpop.f32.mrf.mxu0
    %2038 = vdwg.mxu0
    %v2039 = vadd.f32 %v1869, %v1911
    %v2040 = vadd.f32 %v1870, %v1913
    %v2041 = vxor.u32 %v2039, 2147483648
    %v2042 = vxor.u32 %v2040, 2147483648
    %v2043 = vmul.f32 %v2041, 1.442695
    %v2044 = vpow.pop %v2043
    %v2045 = vmul.f32 %v2042, 1.442695
    %v2046 = vpow.pop %v2045
    %v2047 = vadd.f32 %v2044, 1.0
    %v2048 = vadd.f32 %v2046, 1.0
    %v2049 = vrcp.pop %v2047
    %v2050 = vmul.f32 1.0, %v2049
    %v2051 = vrcp.pop %v2048
    %v2052 = vmul.f32 1.0, %v2051
    %v2053 = vadd.f32 %v1952, %v536
    %v2054 = vmul.f32 %v2050, %v2053
    %v2055 = vadd.f32 %v1871, %v2054
    %v2056 = vtanh.pop %v2055
    %v2057 = vsub.f32 1.0, %v2052
    %v2058 = vmul.f32 %v2057, %v2056
    %v2059 = vmul.f32 %v2052, %v1846
    %v2060 = vadd.f32 %v2058, %v2059
    %v2061 = vadd.f32 %v1872, %v1993
    %v2062 = vadd.f32 %v1873, %v1995
    %v2063 = vxor.u32 %v2061, 2147483648
    %v2064 = vxor.u32 %v2062, 2147483648
    %v2065 = vmul.f32 %v2063, 1.442695
    %v2066 = vpow.pop %v2065
    %v2067 = vmul.f32 %v2064, 1.442695
    %v2068 = vpow.pop %v2067
    %v2069 = vadd.f32 %v2066, 1.0
    %v2070 = vadd.f32 %v2068, 1.0
    %v2071 = vrcp.pop %v2069
    %v2072 = vmul.f32 1.0, %v2071
    %v2073 = vrcp.pop %v2070
    %v2074 = vmul.f32 1.0, %v2073
    %v2075 = vadd.f32 %v2034, %v543
    %v2076 = vmul.f32 %v2072, %v2075
    %v2077 = vadd.f32 %v1874, %v2076
    %v2078 = vtanh.pop %v2077
    %v2079 = vsub.f32 1.0, %v2074
    %v2080 = vmul.f32 %v2079, %v2078
    %v2081 = vmul.f32 %v2074, %v1868
    %v2082 = vadd.f32 %v2080, %v2081
    %v2083 = vld [vmem:[#allocation2 + $0x120] sm:$0xff]
    %v2084 = vld [vmem:[#allocation2 + $0x128] sm:$0xff]
    %v2085 = vld [vmem:[#allocation2 + $0x130] sm:$0xff]
    %v2086 = vld [vmem:[#allocation2 + $0x48] sm:$0xff]
    %v2087 = vld [vmem:[#allocation2 + $0x50] sm:$0xff]
    %v2088 = vld [vmem:[#allocation2 + $0x58] sm:$0xff]
    %v2089 = vpack.c.bf16 %v2060, %v2060
    %2090 = vmatprep.subr.bf16.mxu0 %v653
    %2091 = vmatpush1.bf16.msra.mxu0 %v652
    %2092 = vmatprep.subr.bf16.mxu0 %v650
    %2093 = vmatpush1.bf16.msra.mxu0 %v649
    %2094 = vmatprep.subr.bf16.mxu0 %v647
    %2095 = vmatpush1.bf16.msra.mxu0 %v646
    %2096 = vmatprep.subr.bf16.mxu0 %v644
    %2097 = vmatpush1.bf16.msra.mxu0 %v643
    %2098 = vmatprep.subr.bf16.mxu0 %v641
    %2099 = vmatpush1.bf16.msra.mxu0 %v640
    %2100 = vmatprep.subr.bf16.mxu0 %v638
    %2101 = vmatpush1.bf16.msra.mxu0 %v637
    %2102 = vmatprep.subr.bf16.mxu0 %v635
    %2103 = vmatpush1.bf16.msra.mxu0 %v634
    %2104 = vmatprep.subr.bf16.mxu0 %v632
    %2105 = vmatpush1.bf16.msra.mxu0 %v631
    %2106 = vmatprep.subr.bf16.mxu0 0
    %2107 = vmatpush2.bf16.msra.mxu0 0
    %2108 = vmatprep.subr.bf16.mxu0 0
    %2109 = vmatpush2.bf16.msra.mxu0 0
    %2110 = vmatprep.subr.bf16.mxu0 0
    %2111 = vmatpush2.bf16.msra.mxu0 0
    %2112 = vmatprep.subr.bf16.mxu0 0
    %2113 = vmatpush2.bf16.msra.mxu0 0
    %2114 = vmatprep.subr.bf16.mxu0 0
    %2115 = vmatpush2.bf16.msra.mxu0 0
    %2116 = vmatprep.subr.bf16.mxu0 0
    %2117 = vmatpush2.bf16.msra.mxu0 0
    %2118 = vmatprep.subr.bf16.mxu0 0
    %2119 = vmatpush2.bf16.msra.mxu0 0
    %2120 = vmatprep.subr.bf16.mxu0 0
    %2121 = vmatpush2.bf16.msra.mxu0 0
    %2122 = vmatprep.mubr.bf16.mxu0 0
    %2123 = vmatmul.mubr.bf16.gmra.mxu0 %v2089
    %v2124 = vpop.f32.mrf.mxu0
    %v2125 = vadd.f32 0.0, %v2124
    %v2126 = vpop.f32.mrf.mxu0
    %v2127 = vadd.f32 0.0, %v2126
    %v2128 = vpop.f32.mrf.mxu0
    %v2129 = vpop.f32.mrf.mxu0
    %2130 = vdwg.mxu0
    %2131 = vmatprep.subr.bf16.mxu0 0
    %2132 = vmatpush1.bf16.msra.mxu0 %v654
    %2133 = vmatprep.subr.bf16.mxu0 0
    %2134 = vmatpush1.bf16.msra.mxu0 %v651
    %2135 = vmatprep.subr.bf16.mxu0 0
    %2136 = vmatpush1.bf16.msra.mxu0 %v648
    %2137 = vmatprep.subr.bf16.mxu0 0
    %2138 = vmatpush1.bf16.msra.mxu0 %v645
    %2139 = vmatprep.subr.bf16.mxu0 0
    %2140 = vmatpush1.bf16.msra.mxu0 %v642
    %2141 = vmatprep.subr.bf16.mxu0 0
    %2142 = vmatpush1.bf16.msra.mxu0 %v639
    %2143 = vmatprep.subr.bf16.mxu0 0
    %2144 = vmatpush1.bf16.msra.mxu0 %v636
    %2145 = vmatprep.subr.bf16.mxu0 0
    %2146 = vmatpush1.bf16.msra.mxu0 %v633
    %2147 = vmatprep.subr.bf16.mxu0 0
    %2148 = vmatpush2.bf16.msra.mxu0 0
    %2149 = vmatprep.subr.bf16.mxu0 0
    %2150 = vmatpush2.bf16.msra.mxu0 0
    %2151 = vmatprep.subr.bf16.mxu0 0
    %2152 = vmatpush2.bf16.msra.mxu0 0
    %2153 = vmatprep.subr.bf16.mxu0 0
    %2154 = vmatpush2.bf16.msra.mxu0 0
    %2155 = vmatprep.subr.bf16.mxu0 0
    %2156 = vmatpush2.bf16.msra.mxu0 0
    %2157 = vmatprep.subr.bf16.mxu0 0
    %2158 = vmatpush2.bf16.msra.mxu0 0
    %2159 = vmatprep.subr.bf16.mxu0 0
    %2160 = vmatpush2.bf16.msra.mxu0 0
    %2161 = vmatprep.subr.bf16.mxu0 0
    %2162 = vmatpush2.bf16.msra.mxu0 0
    %2163 = vmatprep.mubr.bf16.mxu0 0
    %2164 = vmatmul.mubr.bf16.gmra.mxu0 %v2089
    %v2165 = vpop.f32.mrf.mxu0
    %v2166 = vadd.f32 0.0, %v2165
    %v2167 = vpop.f32.mrf.mxu0
    %v2168 = vpop.f32.mrf.mxu0
    %v2169 = vpop.f32.mrf.mxu0
    %2170 = vdwg.mxu0
    %v2171 = vpack.c.bf16 %v2082, %v2082
    %2172 = vmatprep.subr.bf16.mxu0 %v862
    %2173 = vmatpush1.bf16.msra.mxu0 %v861
    %2174 = vmatprep.subr.bf16.mxu0 %v859
    %2175 = vmatpush1.bf16.msra.mxu0 %v858
    %2176 = vmatprep.subr.bf16.mxu0 %v856
    %2177 = vmatpush1.bf16.msra.mxu0 %v855
    %2178 = vmatprep.subr.bf16.mxu0 %v853
    %2179 = vmatpush1.bf16.msra.mxu0 %v852
    %2180 = vmatprep.subr.bf16.mxu0 %v850
    %2181 = vmatpush1.bf16.msra.mxu0 %v849
    %2182 = vmatprep.subr.bf16.mxu0 %v847
    %2183 = vmatpush1.bf16.msra.mxu0 %v846
    %2184 = vmatprep.subr.bf16.mxu0 %v844
    %2185 = vmatpush1.bf16.msra.mxu0 %v843
    %2186 = vmatprep.subr.bf16.mxu0 %v841
    %2187 = vmatpush1.bf16.msra.mxu0 %v840
    %2188 = vmatprep.subr.bf16.mxu0 0
    %2189 = vmatpush2.bf16.msra.mxu0 0
    %2190 = vmatprep.subr.bf16.mxu0 0
    %2191 = vmatpush2.bf16.msra.mxu0 0
    %2192 = vmatprep.subr.bf16.mxu0 0
    %2193 = vmatpush2.bf16.msra.mxu0 0
    %2194 = vmatprep.subr.bf16.mxu0 0
    %2195 = vmatpush2.bf16.msra.mxu0 0
    %2196 = vmatprep.subr.bf16.mxu0 0
    %2197 = vmatpush2.bf16.msra.mxu0 0
    %2198 = vmatprep.subr.bf16.mxu0 0
    %2199 = vmatpush2.bf16.msra.mxu0 0
    %2200 = vmatprep.subr.bf16.mxu0 0
    %2201 = vmatpush2.bf16.msra.mxu0 0
    %2202 = vmatprep.subr.bf16.mxu0 0
    %2203 = vmatpush2.bf16.msra.mxu0 0
    %2204 = vmatprep.mubr.bf16.mxu0 0
    %2205 = vmatmul.mubr.bf16.gmra.mxu0 %v2171
    %v2206 = vpop.f32.mrf.mxu0
    %v2207 = vadd.f32 0.0, %v2206
    %v2208 = vpop.f32.mrf.mxu0
    %v2209 = vadd.f32 0.0, %v2208
    %v2210 = vpop.f32.mrf.mxu0
    %v2211 = vpop.f32.mrf.mxu0
    %2212 = vdwg.mxu0
    %2213 = vmatprep.subr.bf16.mxu0 0
    %2214 = vmatpush1.bf16.msra.mxu0 %v863
    %2215 = vmatprep.subr.bf16.mxu0 0
    %2216 = vmatpush1.bf16.msra.mxu0 %v860
    %2217 = vmatprep.subr.bf16.mxu0 0
    %2218 = vmatpush1.bf16.msra.mxu0 %v857
    %2219 = vmatprep.subr.bf16.mxu0 0
    %2220 = vmatpush1.bf16.msra.mxu0 %v854
    %2221 = vmatprep.subr.bf16.mxu0 0
    %2222 = vmatpush1.bf16.msra.mxu0 %v851
    %2223 = vmatprep.subr.bf16.mxu0 0
    %2224 = vmatpush1.bf16.msra.mxu0 %v848
    %2225 = vmatprep.subr.bf16.mxu0 0
    %2226 = vmatpush1.bf16.msra.mxu0 %v845
    %2227 = vmatprep.subr.bf16.mxu0 0
    %2228 = vmatpush1.bf16.msra.mxu0 %v842
    %2229 = vmatprep.subr.bf16.mxu0 0
    %2230 = vmatpush2.bf16.msra.mxu0 0
    %2231 = vmatprep.subr.bf16.mxu0 0
    %2232 = vmatpush2.bf16.msra.mxu0 0
    %2233 = vmatprep.subr.bf16.mxu0 0
    %2234 = vmatpush2.bf16.msra.mxu0 0
    %2235 = vmatprep.subr.bf16.mxu0 0
    %2236 = vmatpush2.bf16.msra.mxu0 0
    %2237 = vmatprep.subr.bf16.mxu0 0
    %2238 = vmatpush2.bf16.msra.mxu0 0
    %2239 = vmatprep.subr.bf16.mxu0 0
    %2240 = vmatpush2.bf16.msra.mxu0 0
    %2241 = vmatprep.subr.bf16.mxu0 0
    %2242 = vmatpush2.bf16.msra.mxu0 0
    %2243 = vmatprep.subr.bf16.mxu0 0
    %2244 = vmatpush2.bf16.msra.mxu0 0
    %2245 = vmatprep.mubr.bf16.mxu0 0
    %2246 = vmatmul.mubr.bf16.gmra.mxu0 %v2171
    %v2247 = vpop.f32.mrf.mxu0
    %v2248 = vadd.f32 0.0, %v2247
    %v2249 = vpop.f32.mrf.mxu0
    %v2250 = vpop.f32.mrf.mxu0
    %v2251 = vpop.f32.mrf.mxu0
    %2252 = vdwg.mxu0
    %v2253 = vadd.f32 %v2083, %v2125
    %v2254 = vadd.f32 %v2084, %v2127
    %v2255 = vxor.u32 %v2253, 2147483648
    %v2256 = vxor.u32 %v2254, 2147483648
    %v2257 = vmul.f32 %v2255, 1.442695
    %v2258 = vpow.pop %v2257
    %v2259 = vmul.f32 %v2256, 1.442695
    %v2260 = vpow.pop %v2259
    %v2261 = vadd.f32 %v2258, 1.0
    %v2262 = vadd.f32 %v2260, 1.0
    %v2263 = vrcp.pop %v2261
    %v2264 = vmul.f32 1.0, %v2263
    %v2265 = vrcp.pop %v2262
    %v2266 = vmul.f32 1.0, %v2265
    %v2267 = vadd.f32 %v2166, %v536
    %v2268 = vmul.f32 %v2264, %v2267
    %v2269 = vadd.f32 %v2085, %v2268
    %v2270 = vtanh.pop %v2269
    %v2271 = vsub.f32 1.0, %v2266
    %v2272 = vmul.f32 %v2271, %v2270
    %v2273 = vmul.f32 %v2266, %v2060
    %v2274 = vadd.f32 %v2272, %v2273
    %v2275 = vadd.f32 %v2086, %v2207
    %v2276 = vadd.f32 %v2087, %v2209
    %v2277 = vxor.u32 %v2275, 2147483648
    %v2278 = vxor.u32 %v2276, 2147483648
    %v2279 = vmul.f32 %v2277, 1.442695
    %v2280 = vpow.pop %v2279
    %v2281 = vmul.f32 %v2278, 1.442695
    %v2282 = vpow.pop %v2281
    %v2283 = vadd.f32 %v2280, 1.0
    %v2284 = vadd.f32 %v2282, 1.0
    %v2285 = vrcp.pop %v2283
    %v2286 = vmul.f32 1.0, %v2285
    %v2287 = vrcp.pop %v2284
    %v2288 = vmul.f32 1.0, %v2287
    %v2289 = vadd.f32 %v2248, %v543
    %v2290 = vmul.f32 %v2286, %v2289
    %v2291 = vadd.f32 %v2088, %v2290
    %v2292 = vtanh.pop %v2291
    %v2293 = vsub.f32 1.0, %v2288
    %v2294 = vmul.f32 %v2293, %v2292
    %v2295 = vmul.f32 %v2288, %v2082
    %v2296 = vadd.f32 %v2294, %v2295
    %v2297 = vld [vmem:[#allocation2 + $0x150] sm:$0xff]
    %v2298 = vld [vmem:[#allocation2 + $0x158] sm:$0xff]
    %v2299 = vld [vmem:[#allocation2 + $0x160] sm:$0xff]
    %v2300 = vld [vmem:[#allocation2 + $0x18] sm:$0xff]
    %v2301 = vld [vmem:[#allocation2 + $0x20] sm:$0xff]
    %v2302 = vld [vmem:[#allocation2 + $0x28] sm:$0xff]
    %v2303 = vpack.c.bf16 %v2274, %v2274
    %2304 = vmatprep.subr.bf16.mxu0 %v653
    %2305 = vmatpush1.bf16.msra.mxu0 %v652
    %2306 = vmatprep.subr.bf16.mxu0 %v650
    %2307 = vmatpush1.bf16.msra.mxu0 %v649
    %2308 = vmatprep.subr.bf16.mxu0 %v647
    %2309 = vmatpush1.bf16.msra.mxu0 %v646
    %2310 = vmatprep.subr.bf16.mxu0 %v644
    %2311 = vmatpush1.bf16.msra.mxu0 %v643
    %2312 = vmatprep.subr.bf16.mxu0 %v641
    %2313 = vmatpush1.bf16.msra.mxu0 %v640
    %2314 = vmatprep.subr.bf16.mxu0 %v638
    %2315 = vmatpush1.bf16.msra.mxu0 %v637
    %2316 = vmatprep.subr.bf16.mxu0 %v635
    %2317 = vmatpush1.bf16.msra.mxu0 %v634
    %2318 = vmatprep.subr.bf16.mxu0 %v632
    %2319 = vmatpush1.bf16.msra.mxu0 %v631
    %2320 = vmatprep.subr.bf16.mxu0 0
    %2321 = vmatpush2.bf16.msra.mxu0 0
    %2322 = vmatprep.subr.bf16.mxu0 0
    %2323 = vmatpush2.bf16.msra.mxu0 0
    %2324 = vmatprep.subr.bf16.mxu0 0
    %2325 = vmatpush2.bf16.msra.mxu0 0
    %2326 = vmatprep.subr.bf16.mxu0 0
    %2327 = vmatpush2.bf16.msra.mxu0 0
    %2328 = vmatprep.subr.bf16.mxu0 0
    %2329 = vmatpush2.bf16.msra.mxu0 0
    %2330 = vmatprep.subr.bf16.mxu0 0
    %2331 = vmatpush2.bf16.msra.mxu0 0
    %2332 = vmatprep.subr.bf16.mxu0 0
    %2333 = vmatpush2.bf16.msra.mxu0 0
    %2334 = vmatprep.subr.bf16.mxu0 0
    %2335 = vmatpush2.bf16.msra.mxu0 0
    %2336 = vmatprep.mubr.bf16.mxu0 0
    %2337 = vmatmul.mubr.bf16.gmra.mxu0 %v2303
    %v2338 = vpop.f32.mrf.mxu0
    %v2339 = vadd.f32 0.0, %v2338
    %v2340 = vpop.f32.mrf.mxu0
    %v2341 = vadd.f32 0.0, %v2340
    %v2342 = vpop.f32.mrf.mxu0
    %v2343 = vpop.f32.mrf.mxu0
    %2344 = vdwg.mxu0
    %2345 = vmatprep.subr.bf16.mxu0 0
    %2346 = vmatpush1.bf16.msra.mxu0 %v654
    %2347 = vmatprep.subr.bf16.mxu0 0
    %2348 = vmatpush1.bf16.msra.mxu0 %v651
    %2349 = vmatprep.subr.bf16.mxu0 0
    %2350 = vmatpush1.bf16.msra.mxu0 %v648
    %2351 = vmatprep.subr.bf16.mxu0 0
    %2352 = vmatpush1.bf16.msra.mxu0 %v645
    %2353 = vmatprep.subr.bf16.mxu0 0
    %2354 = vmatpush1.bf16.msra.mxu0 %v642
    %2355 = vmatprep.subr.bf16.mxu0 0
    %2356 = vmatpush1.bf16.msra.mxu0 %v639
    %2357 = vmatprep.subr.bf16.mxu0 0
    %2358 = vmatpush1.bf16.msra.mxu0 %v636
    %2359 = vmatprep.subr.bf16.mxu0 0
    %2360 = vmatpush1.bf16.msra.mxu0 %v633
    %2361 = vmatprep.subr.bf16.mxu0 0
    %2362 = vmatpush2.bf16.msra.mxu0 0
    %2363 = vmatprep.subr.bf16.mxu0 0
    %2364 = vmatpush2.bf16.msra.mxu0 0
    %2365 = vmatprep.subr.bf16.mxu0 0
    %2366 = vmatpush2.bf16.msra.mxu0 0
    %2367 = vmatprep.subr.bf16.mxu0 0
    %2368 = vmatpush2.bf16.msra.mxu0 0
    %2369 = vmatprep.subr.bf16.mxu0 0
    %2370 = vmatpush2.bf16.msra.mxu0 0
    %2371 = vmatprep.subr.bf16.mxu0 0
    %2372 = vmatpush2.bf16.msra.mxu0 0
    %2373 = vmatprep.subr.bf16.mxu0 0
    %2374 = vmatpush2.bf16.msra.mxu0 0
    %2375 = vmatprep.subr.bf16.mxu0 0
    %2376 = vmatpush2.bf16.msra.mxu0 0
    %2377 = vmatprep.mubr.bf16.mxu0 0
    %2378 = vmatmul.mubr.bf16.gmra.mxu0 %v2303
    %v2379 = vpop.f32.mrf.mxu0
    %v2380 = vadd.f32 0.0, %v2379
    %v2381 = vpop.f32.mrf.mxu0
    %v2382 = vpop.f32.mrf.mxu0
    %v2383 = vpop.f32.mrf.mxu0
    %2384 = vdwg.mxu0
    %v2385 = vpack.c.bf16 %v2296, %v2296
    %2386 = vmatprep.subr.bf16.mxu0 %v862
    %2387 = vmatpush1.bf16.msra.mxu0 %v861
    %2388 = vmatprep.subr.bf16.mxu0 %v859
    %2389 = vmatpush1.bf16.msra.mxu0 %v858
    %2390 = vmatprep.subr.bf16.mxu0 %v856
    %2391 = vmatpush1.bf16.msra.mxu0 %v855
    %2392 = vmatprep.subr.bf16.mxu0 %v853
    %2393 = vmatpush1.bf16.msra.mxu0 %v852
    %2394 = vmatprep.subr.bf16.mxu0 %v850
    %2395 = vmatpush1.bf16.msra.mxu0 %v849
    %2396 = vmatprep.subr.bf16.mxu0 %v847
    %2397 = vmatpush1.bf16.msra.mxu0 %v846
    %2398 = vmatprep.subr.bf16.mxu0 %v844
    %2399 = vmatpush1.bf16.msra.mxu0 %v843
    %2400 = vmatprep.subr.bf16.mxu0 %v841
    %2401 = vmatpush1.bf16.msra.mxu0 %v840
    %2402 = vmatprep.subr.bf16.mxu0 0
    %2403 = vmatpush2.bf16.msra.mxu0 0
    %2404 = vmatprep.subr.bf16.mxu0 0
    %2405 = vmatpush2.bf16.msra.mxu0 0
    %2406 = vmatprep.subr.bf16.mxu0 0
    %2407 = vmatpush2.bf16.msra.mxu0 0
    %2408 = vmatprep.subr.bf16.mxu0 0
    %2409 = vmatpush2.bf16.msra.mxu0 0
    %2410 = vmatprep.subr.bf16.mxu0 0
    %2411 = vmatpush2.bf16.msra.mxu0 0
    %2412 = vmatprep.subr.bf16.mxu0 0
    %2413 = vmatpush2.bf16.msra.mxu0 0
    %2414 = vmatprep.subr.bf16.mxu0 0
    %2415 = vmatpush2.bf16.msra.mxu0 0
    %2416 = vmatprep.subr.bf16.mxu0 0
    %2417 = vmatpush2.bf16.msra.mxu0 0
    %2418 = vmatprep.mubr.bf16.mxu0 0
    %2419 = vmatmul.mubr.bf16.gmra.mxu0 %v2385
    %v2420 = vpop.f32.mrf.mxu0
    %v2421 = vadd.f32 0.0, %v2420
    %v2422 = vpop.f32.mrf.mxu0
    %v2423 = vadd.f32 0.0, %v2422
    %v2424 = vpop.f32.mrf.mxu0
    %v2425 = vpop.f32.mrf.mxu0
    %2426 = vdwg.mxu0
    %2427 = vmatprep.subr.bf16.mxu0 0
    %2428 = vmatpush1.bf16.msra.mxu0 %v863
    %2429 = vmatprep.subr.bf16.mxu0 0
    %2430 = vmatpush1.bf16.msra.mxu0 %v860
    %2431 = vmatprep.subr.bf16.mxu0 0
    %2432 = vmatpush1.bf16.msra.mxu0 %v857
    %2433 = vmatprep.subr.bf16.mxu0 0
    %2434 = vmatpush1.bf16.msra.mxu0 %v854
    %2435 = vmatprep.subr.bf16.mxu0 0
    %2436 = vmatpush1.bf16.msra.mxu0 %v851
    %2437 = vmatprep.subr.bf16.mxu0 0
    %2438 = vmatpush1.bf16.msra.mxu0 %v848
    %2439 = vmatprep.subr.bf16.mxu0 0
    %2440 = vmatpush1.bf16.msra.mxu0 %v845
    %2441 = vmatprep.subr.bf16.mxu0 0
    %2442 = vmatpush1.bf16.msra.mxu0 %v842
    %2443 = vmatprep.subr.bf16.mxu0 0
    %2444 = vmatpush2.bf16.msra.mxu0 0
    %2445 = vmatprep.subr.bf16.mxu0 0
    %2446 = vmatpush2.bf16.msra.mxu0 0
    %2447 = vmatprep.subr.bf16.mxu0 0
    %2448 = vmatpush2.bf16.msra.mxu0 0
    %2449 = vmatprep.subr.bf16.mxu0 0
    %2450 = vmatpush2.bf16.msra.mxu0 0
    %2451 = vmatprep.subr.bf16.mxu0 0
    %2452 = vmatpush2.bf16.msra.mxu0 0
    %2453 = vmatprep.subr.bf16.mxu0 0
    %2454 = vmatpush2.bf16.msra.mxu0 0
    %2455 = vmatprep.subr.bf16.mxu0 0
    %2456 = vmatpush2.bf16.msra.mxu0 0
    %2457 = vmatprep.subr.bf16.mxu0 0
    %2458 = vmatpush2.bf16.msra.mxu0 0
    %2459 = vmatprep.mubr.bf16.mxu0 0
    %2460 = vmatmul.mubr.bf16.gmra.mxu0 %v2385
    %v2461 = vpop.f32.mrf.mxu0
    %v2462 = vadd.f32 0.0, %v2461
    %v2463 = vpop.f32.mrf.mxu0
    %v2464 = vpop.f32.mrf.mxu0
    %v2465 = vpop.f32.mrf.mxu0
    %2466 = vdwg.mxu0
    %v2467 = vadd.f32 %v2297, %v2339
    %v2468 = vadd.f32 %v2298, %v2341
    %v2469 = vxor.u32 %v2467, 2147483648
    %v2470 = vxor.u32 %v2468, 2147483648
    %v2471 = vmul.f32 %v2469, 1.442695
    %v2472 = vpow.pop %v2471
    %v2473 = vmul.f32 %v2470, 1.442695
    %v2474 = vpow.pop %v2473
    %v2475 = vadd.f32 %v2472, 1.0
    %v2476 = vadd.f32 %v2474, 1.0
    %v2477 = vrcp.pop %v2475
    %v2478 = vmul.f32 1.0, %v2477
    %v2479 = vrcp.pop %v2476
    %v2480 = vmul.f32 1.0, %v2479
    %v2481 = vadd.f32 %v2380, %v536
    %v2482 = vmul.f32 %v2478, %v2481
    %v2483 = vadd.f32 %v2299, %v2482
    %v2484 = vtanh.pop %v2483
    %v2485 = vsub.f32 1.0, %v2480
    %v2486 = vmul.f32 %v2485, %v2484
    %v2487 = vmul.f32 %v2480, %v2274
    %v2488 = vadd.f32 %v2486, %v2487
    %v2489 = vadd.f32 %v2300, %v2421
    %v2490 = vadd.f32 %v2301, %v2423
    %v2491 = vxor.u32 %v2489, 2147483648
    %v2492 = vxor.u32 %v2490, 2147483648
    %v2493 = vmul.f32 %v2491, 1.442695
    %v2494 = vpow.pop %v2493
    %v2495 = vmul.f32 %v2492, 1.442695
    %v2496 = vpow.pop %v2495
    %v2497 = vadd.f32 %v2494, 1.0
    %v2498 = vadd.f32 %v2496, 1.0
    %v2499 = vrcp.pop %v2497
    %v2500 = vmul.f32 1.0, %v2499
    %v2501 = vrcp.pop %v2498
    %v2502 = vmul.f32 1.0, %v2501
    %v2503 = vadd.f32 %v2462, %v543
    %v2504 = vmul.f32 %v2500, %v2503
    %v2505 = vadd.f32 %v2302, %v2504
    %v2506 = vtanh.pop %v2505
    %v2507 = vsub.f32 1.0, %v2502
    %v2508 = vmul.f32 %v2507, %v2506
    %v2509 = vmul.f32 %v2502, %v2296
    %v2510 = vadd.f32 %v2508, %v2509
    %v2511 = vld [vmem:[%s6] sm:$0x1]
    %v2513 = vlaneseq
    %v2514 = vshrl.u32 %v2513, 7
    %v2515 = vsub.s32 0, %v2514
    %v2516 = vrot.slane %v2511, %v2515
    %v2518 = vmul.f32 %v2488, %v2516
    %2519 = vadd.xlane.f32.xlu0 %v2518
    %v2520 = vpop.xlane.xlu0 %2519
    %v2521 = vld [vmem:[%s6 + $0x1] sm:$0x1]
    %v2523 = vlaneseq
    %v2524 = vshrl.u32 %v2523, 7
    %v2525 = vsub.s32 0, %v2524
    %v2526 = vrot.slane %v2521, %v2525
    %v2528 = vmul.f32 %v2510, %v2526
    %2529 = vadd.xlane.f32.xlu0 %v2528
    %v2530 = vpop.xlane.xlu0 %2529
    %v2531 = vadd.f32 %v2520, %v2530
    %v2532 = vld [vmem:[#allocation3] sm:$0x1]
    %v2534 = vlaneseq
    %v2535 = vshrl.u32 %v2534, 7
    %v2536 = vsub.s32 0, %v2535
    %v2537 = vrot.slane %v2532, %v2536
    %v2539 = vadd.f32 %v2531, %v2537
    %2541 = vset.pattern.permute.xlu0 0
    %2542 = vperm.xlu0 %2541, %v2539
    %v2543 = vpop.permute.xlu0 %2542
    %v2545 = vmul.f32 %v2543, %v2488
    %v2546 = vpack.c.bf16 %v2545, %v2545
    %v2547 = vmul.f32 %v2543, %v2510
    %v2548 = vpack.c.bf16 %v2547, %v2547
    %v2549 = vld [vmem:[%s8] sm:$0xf]
    %v2550 = vld [vmem:[%s8 + $0x4] sm:$0xf]
    %v2551 = vld [vmem:[%s8 + $0x8] sm:$0xf]
    %v2552 = vld [vmem:[%s8 + $0xc] sm:$0xf]
    %v2553 = vld [vmem:[%s8 + $0x10] sm:$0xf]
    %v2554 = vld [vmem:[%s8 + $0x14] sm:$0xf]
    %v2555 = vld [vmem:[%s8 + $0x18] sm:$0xf]
    %v2556 = vld [vmem:[%s8 + $0x1c] sm:$0xf]
    %v2557 = vld [vmem:[%s8 + $0x20] sm:$0xf]
    %v2558 = vld [vmem:[%s8 + $0x24] sm:$0xf]
    %v2559 = vld [vmem:[%s8 + $0x28] sm:$0xf]
    %v2560 = vld [vmem:[%s8 + $0x2c] sm:$0xf]
    %v2561 = vld [vmem:[%s8 + $0x30] sm:$0xf]
    %v2562 = vld [vmem:[%s8 + $0x34] sm:$0xf]
    %v2563 = vld [vmem:[%s8 + $0x38] sm:$0xf]
    %v2564 = vld [vmem:[%s8 + $0x3c] sm:$0xf]
    %v2565 = vld [vmem:[#allocation4] sm:$0xf]
    %v2566 = vld [vmem:[#allocation4 + $0x4] sm:$0xf]
    %v2567 = vld [vmem:[#allocation4 + $0x8] sm:$0xf]
    %v2568 = vld [vmem:[#allocation4 + $0xc] sm:$0xf]
    %v2569 = vld [vmem:[#allocation4 + $0x10] sm:$0xf]
    %v2570 = vld [vmem:[#allocation4 + $0x14] sm:$0xf]
    %v2571 = vld [vmem:[#allocation4 + $0x18] sm:$0xf]
    %v2572 = vld [vmem:[#allocation4 + $0x1c] sm:$0xf]
    %v2573 = vld [vmem:[#allocation4 + $0x20] sm:$0xf]
    %v2574 = vld [vmem:[#allocation4 + $0x24] sm:$0xf]
    %v2575 = vld [vmem:[#allocation4 + $0x28] sm:$0xf]
    %v2576 = vld [vmem:[#allocation4 + $0x2c] sm:$0xf]
    %v2577 = vld [vmem:[#allocation4 + $0x30] sm:$0xf]
    %v2578 = vld [vmem:[#allocation4 + $0x34] sm:$0xf]
    %v2579 = vld [vmem:[#allocation4 + $0x38] sm:$0xf]
    %v2580 = vld [vmem:[#allocation4 + $0x3c] sm:$0xf]
    %v2597 = vunpack.c.l.b16 %v2565
    %v2598 = vunpack.c.l.b16 %v2566
    %v2599 = vunpack.c.l.b16 %v2567
    %v2600 = vunpack.c.l.b16 %v2568
    %v2601 = vunpack.c.l.b16 %v2569
    %v2602 = vunpack.c.l.b16 %v2570
    %v2603 = vunpack.c.l.b16 %v2571
    %v2604 = vunpack.c.l.b16 %v2572
    %v2605 = vunpack.c.l.b16 %v2573
    %v2606 = vunpack.c.l.b16 %v2574
    %v2607 = vunpack.c.l.b16 %v2575
    %v2608 = vunpack.c.l.b16 %v2576
    %v2609 = vunpack.c.l.b16 %v2577
    %v2610 = vunpack.c.l.b16 %v2578
    %v2611 = vunpack.c.l.b16 %v2579
    %v2612 = vunpack.c.l.b16 %v2580
    %v2613 = vpack.c.b16 %v2598, %v2597
    %v2614 = vpack.c.b16 %v2600, %v2599
    %v2615 = vpack.c.b16 %v2602, %v2601
    %v2616 = vpack.c.b16 %v2604, %v2603
    %v2617 = vpack.c.b16 %v2606, %v2605
    %v2618 = vpack.c.b16 %v2608, %v2607
    %v2619 = vpack.c.b16 %v2610, %v2609
    %v2620 = vpack.c.b16 %v2612, %v2611
    %2629 = vmatprep.subr.bf16.mxu0 0
    %2630 = vmatpush1.bf16.msra.mxu0 %v2620
    %2631 = vmatprep.subr.bf16.mxu0 0
    %2632 = vmatpush1.bf16.msra.mxu0 %v2619
    %2633 = vmatprep.subr.bf16.mxu0 0
    %2634 = vmatpush1.bf16.msra.mxu0 %v2618
    %2635 = vmatprep.subr.bf16.mxu0 0
    %2636 = vmatpush1.bf16.msra.mxu0 %v2617
    %2637 = vmatprep.subr.bf16.mxu0 0
    %2638 = vmatpush1.bf16.msra.mxu0 %v2616
    %2639 = vmatprep.subr.bf16.mxu0 0
    %2640 = vmatpush1.bf16.msra.mxu0 %v2615
    %2641 = vmatprep.subr.bf16.mxu0 0
    %2642 = vmatpush1.bf16.msra.mxu0 %v2614
    %2643 = vmatprep.subr.bf16.mxu0 0
    %2644 = vmatpush1.bf16.msra.mxu0 %v2613
    %2645 = vmatprep.subr.bf16.mxu0 0
    %2646 = vmatpush2.bf16.msra.mxu0 0
    %2647 = vmatprep.subr.bf16.mxu0 0
    %2648 = vmatpush2.bf16.msra.mxu0 0
    %2649 = vmatprep.subr.bf16.mxu0 0
    %2650 = vmatpush2.bf16.msra.mxu0 0
    %2651 = vmatprep.subr.bf16.mxu0 0
    %2652 = vmatpush2.bf16.msra.mxu0 0
    %2653 = vmatprep.subr.bf16.mxu0 0
    %2654 = vmatpush2.bf16.msra.mxu0 0
    %2655 = vmatprep.subr.bf16.mxu0 0
    %2656 = vmatpush2.bf16.msra.mxu0 0
    %2657 = vmatprep.subr.bf16.mxu0 0
    %2658 = vmatpush2.bf16.msra.mxu0 0
    %2659 = vmatprep.subr.bf16.mxu0 0
    %2660 = vmatpush2.bf16.msra.mxu0 0
    %2661 = vmatprep.mubr.bf16.mxu0 0
    %2662 = vmatmul.mubr.bf16.gmra.mxu0 %v2548
    %v2663 = vpop.f32.mrf.mxu0
    %v2664 = vadd.f32 0.0, %v2663
    %v2665 = vpop.f32.mrf.mxu0
    %v2666 = vpop.f32.mrf.mxu0
    %v2667 = vpop.f32.mrf.mxu0
    %2668 = vdwg.mxu0
    %v2685 = vunpack.c.l.b16 %v2549
    %v2686 = vunpack.c.l.b16 %v2550
    %v2687 = vunpack.c.l.b16 %v2551
    %v2688 = vunpack.c.l.b16 %v2552
    %v2689 = vunpack.c.l.b16 %v2553
    %v2690 = vunpack.c.l.b16 %v2554
    %v2691 = vunpack.c.l.b16 %v2555
    %v2692 = vunpack.c.l.b16 %v2556
    %v2693 = vunpack.c.l.b16 %v2557
    %v2694 = vunpack.c.l.b16 %v2558
    %v2695 = vunpack.c.l.b16 %v2559
    %v2696 = vunpack.c.l.b16 %v2560
    %v2697 = vunpack.c.l.b16 %v2561
    %v2698 = vunpack.c.l.b16 %v2562
    %v2699 = vunpack.c.l.b16 %v2563
    %v2700 = vunpack.c.l.b16 %v2564
    %v2701 = vpack.c.b16 %v2686, %v2685
    %v2702 = vpack.c.b16 %v2688, %v2687
    %v2703 = vpack.c.b16 %v2690, %v2689
    %v2704 = vpack.c.b16 %v2692, %v2691
    %v2705 = vpack.c.b16 %v2694, %v2693
    %v2706 = vpack.c.b16 %v2696, %v2695
    %v2707 = vpack.c.b16 %v2698, %v2697
    %v2708 = vpack.c.b16 %v2700, %v2699
    %2717 = vmatprep.subr.bf16.mxu0 0
    %2718 = vmatpush1.bf16.msra.mxu0 %v2708
    %2719 = vmatprep.subr.bf16.mxu0 0
    %2720 = vmatpush1.bf16.msra.mxu0 %v2707
    %2721 = vmatprep.subr.bf16.mxu0 0
    %2722 = vmatpush1.bf16.msra.mxu0 %v2706
    %2723 = vmatprep.subr.bf16.mxu0 0
    %2724 = vmatpush1.bf16.msra.mxu0 %v2705
    %2725 = vmatprep.subr.bf16.mxu0 0
    %2726 = vmatpush1.bf16.msra.mxu0 %v2704
    %2727 = vmatprep.subr.bf16.mxu0 0
    %2728 = vmatpush1.bf16.msra.mxu0 %v2703
    %2729 = vmatprep.subr.bf16.mxu0 0
    %2730 = vmatpush1.bf16.msra.mxu0 %v2702
    %2731 = vmatprep.subr.bf16.mxu0 0
    %2732 = vmatpush1.bf16.msra.mxu0 %v2701
    %2733 = vmatprep.subr.bf16.mxu0 0
    %2734 = vmatpush2.bf16.msra.mxu0 0
    %2735 = vmatprep.subr.bf16.mxu0 0
    %2736 = vmatpush2.bf16.msra.mxu0 0
    %2737 = vmatprep.subr.bf16.mxu0 0
    %2738 = vmatpush2.bf16.msra.mxu0 0
    %2739 = vmatprep.subr.bf16.mxu0 0
    %2740 = vmatpush2.bf16.msra.mxu0 0
    %2741 = vmatprep.subr.bf16.mxu0 0
    %2742 = vmatpush2.bf16.msra.mxu0 0
    %2743 = vmatprep.subr.bf16.mxu0 0
    %2744 = vmatpush2.bf16.msra.mxu0 0
    %2745 = vmatprep.subr.bf16.mxu0 0
    %2746 = vmatpush2.bf16.msra.mxu0 0
    %2747 = vmatprep.subr.bf16.mxu0 0
    %2748 = vmatpush2.bf16.msra.mxu0 0
    %2749 = vmatprep.mubr.bf16.mxu0 0
    %2750 = vmatmul.mubr.bf16.gmra.mxu0 %v2546
    %v2751 = vpop.f32.mrf.mxu0
    %v2752 = vadd.f32 %v2664, %v2751
    %v2753 = vpop.f32.mrf.mxu0
    %v2754 = vpop.f32.mrf.mxu0
    %v2755 = vpop.f32.mrf.mxu0
    %2756 = vdwg.mxu0
    %v2757 = vld [vmem:[%s10] sm:$0x1]
    %v2759 = vlaneseq
    %v2760 = vshrl.u32 %v2759, 7
    %v2761 = vsub.s32 0, %v2760
    %v2762 = vrot.slane %v2757, %v2761
    %v2764 = vadd.f32 %v2752, %v2762
    %2765 = vst [vmem:[%s11] sm:$0xff] %v2764
    // Predicated region
    $region50: #{abcnn3_forward.1} parent=1 // pred_check
      _
    $region51: #{abcnn3_forward.1} parent=1 // pred_check_branch
      %2767 = sbr.rel (0) target = $region53
    $region52: #{abcnn3_forward.1} parent=1 // pred_region
      _
    $region53: #{abcnn3_forward.1} parent=1 // pred_fallthru
      _
    // Predicated region
    $region54: #{abcnn3_forward.1} parent=1 // pred_check
      _
    $region55: #{abcnn3_forward.1} parent=1 // pred_check_branch
      %2769 = sbr.rel (0) target = $region57
    $region56: #{abcnn3_forward.1} parent=1 // pred_region
      _
    $region57: #{abcnn3_forward.1} parent=1 // pred_fallthru
      _
    %2770 = vsyncpa [#allocation5], 1

</llo_original>
